<compile_context>
chip_gen: v7x
topology: tpu7x:2x2x1
jax: 0.10.0
libtpu: 0.0.40
codegen_flags: <defaults>
</compile_context>

<pallas_src>
import functools

import jax
import jax.numpy as jnp
from jax.experimental import pallas as pl
from jax.experimental.pallas import tpu as pltpu


def esa_kernel(x_ref, wqkv_ref, wp_ref, bp_ref, o_ref, o_acc, *, num_heads: int):
    """One grid step: full attention for `block_b` images.

    VMEM blocks:
      x_ref    : (block_b, C, N) f32, lane-dense (N multiple of 128)
      wqkv_ref : (3C, C) bf16   rows [0:C]=Wq, [C:2C]=Wk, [2C:3C]=Wv
      wp_ref   : (C, C)  bf16
      bp_ref   : (C, 1)  f32
      o_ref    : (block_b, C, N) f32
      o_acc    : (C, N) f32 VMEM scratch (per-head outputs, head-major rows)
    """
    block_b, C, N = x_ref.shape
    hd = C // num_heads
    scale = float(hd) ** -0.5

    wqkv = wqkv_ref[...]                      # (3C, C) bf16 (loaded once per step)
    wp = wp_ref[...]                          # (C, C)  bf16
    bp = bp_ref[...]                          # (C, 1)  f32

    for b in range(block_b):                  # static unroll over images in block
        x_cn = x_ref[b].astype(jnp.bfloat16)  # (C, N)

        # Fused Q/K/V projection: one MXU matmul, lane-dense (3C, N) f32 output.
        qkv = jnp.dot(wqkv, x_cn, preferred_element_type=jnp.float32)
        q = qkv[0:C]
        k = qkv[C:2 * C]
        v = qkv[2 * C:3 * C]

        for h in range(num_heads):            # static unroll; hd = C // num_heads
            lo = h * hd
            qh = (q[lo:lo + hd] * scale).astype(jnp.bfloat16)   # (hd, N)
            kh = k[lo:lo + hd].astype(jnp.bfloat16)             # (hd, N)
            vh = v[lo:lo + hd].astype(jnp.bfloat16)             # (hd, N)

            # Scores with keys on sublanes, queries on lanes:
            #   s_t[m, n] = sum_d kh[d, m] * qh[d, n]
            s_t = jax.lax.dot_general(kh, qh, (((0,), (0,)), ((), ())),
                                      preferred_element_type=jnp.float32)  # (N, N)

            # Softmax over keys (sublane axis) -> lane-dense (1, N) statistics.
            m_row = jnp.max(s_t, axis=0, keepdims=True)          # (1, N)
            e = jnp.exp(s_t - m_row)                             # (N, N) f32
            l_row = jnp.sum(e, axis=0, keepdims=True)            # (1, N)
            # NOTE: attn_drop is identity at inference; not applied.

            # Unnormalized PV matmul, then deferred softmax normalization on the
            # small (hd, N) output instead of dividing the full (N, N) matrix.
            o_h = jnp.dot(vh, e.astype(jnp.bfloat16),
                          preferred_element_type=jnp.float32)    # (hd, N)
            o_acc[lo:lo + hd, :] = o_h * pl.reciprocal(l_row, approx=True)

        # Output projection + bias: lane-dense (C, N) store, no transpose.
        y = jnp.dot(wp, o_acc[...].astype(jnp.bfloat16),
                    preferred_element_type=jnp.float32) + bp
        # NOTE: proj_drop is identity at inference; not applied.
        o_ref[b] = y


def efficient_self_attention(x, wq, wkv, wp, bp, *, num_heads=8, block_b=None):
    """x: (B, C, H, W) f32; wq: (C, C); wkv: (2C, C); wp: (C, C); bp: (C,)."""
    B, C, H, W = x.shape
    N = H * W
    assert C % num_heads == 0
    assert C % 8 == 0 and N % 128 == 0, "sublane/lane alignment"
    # TODO(synk): sr_ratio > 1 path (strided Conv2d + LayerNorm reduction of K/V)
    # is not implemented; this kernel covers the module's default sr_ratio == 1.

    if block_b is None:  # amortize per-grid-step overhead when B is large
        block_b = next((bb for bb in (8, 4, 2) if B >= 2 * bb and B % bb == 0), 1)
    grid = (B // block_b,)

    x_cn = x.reshape(B, C, N)                          # lane-dense HBM layout
    # kv Linear rows [0:C] = K, [C:2C] = V  ->  fused [Wq; Wk; Wv] = (3C, C).
    wqkv = jnp.concatenate([wq, wkv], axis=0).astype(jnp.bfloat16)
    wp_bf = wp.astype(jnp.bfloat16)
    bp_c1 = bp.reshape(C, 1).astype(jnp.float32)

    flops = B * (2 * 3 * C * C * N + 2 * C * C * N + 4 * N * N * C)
    transcendentals = B * num_heads * N * N
    bytes_accessed = 2 * B * C * N * 4 + (4 * C * C) * 2 + C * 4

    out = pl.pallas_call(
        functools.partial(esa_kernel, num_heads=num_heads),
        out_shape=jax.ShapeDtypeStruct((B, C, N), jnp.float32),
        grid_spec=pltpu.PrefetchScalarGridSpec(
            num_scalar_prefetch=0,
            grid=grid,
            in_specs=[
                pl.BlockSpec((block_b, C, N), lambda i: (i, 0, 0)),  # x (lane-dense)
                pl.BlockSpec((3 * C, C), lambda i: (0, 0)),          # [Wq;Wk;Wv] bf16
                pl.BlockSpec((C, C), lambda i: (0, 0)),              # Wp bf16
                pl.BlockSpec((C, 1), lambda i: (0, 0)),              # proj bias (C,1)
            ],
            out_specs=pl.BlockSpec((block_b, C, N), lambda i: (i, 0, 0)),
            scratch_shapes=[pltpu.VMEM((C, N), jnp.float32)],        # o_acc
        ),
        compiler_params=pltpu.CompilerParams(
            dimension_semantics=("parallel",)),                      # megacore-friendly
        cost_estimate=pl.CostEstimate(
            flops=flops, transcendentals=transcendentals,
            bytes_accessed=bytes_accessed),
    )(x_cn, wqkv, wp_bf, bp_c1)
    return out.reshape(B, C, H, W)


# ------------------------- pure-JAX reference (for checking) -----------------
def esa_ref(x, wq, wkv, wp, bp, num_heads):
    B, C, H, W = x.shape
    N = H * W
    hd = C // num_heads
    scale = hd ** -0.5
    xf = x.reshape(B, C, N).transpose(0, 2, 1)                       # (B, N, C)
    q = (xf @ wq.T).reshape(B, N, num_heads, hd).transpose(0, 2, 1, 3)
    kv = (xf @ wkv.T).reshape(B, N, 2, num_heads, hd).transpose(2, 0, 3, 1, 4)
    k, v = kv[0], kv[1]
    attn = jax.nn.softmax((q @ jnp.swapaxes(k, -1, -2)) * scale, axis=-1)
    o = (attn @ v).transpose(0, 2, 1, 3).reshape(B, N, C)
    o = o @ wp.T + bp
    return o.transpose(0, 2, 1).reshape(B, C, H, W)


if __name__ == "__main__":
    B, C, H, W = 2, 32, 16, 16
    NUM_HEADS = 8
    key = jax.random.PRNGKey(0)
    kx, k1, k2, k3, k4 = jax.random.split(key, 5)

    x = jax.random.normal(kx, (B, C, H, W), dtype=jnp.float32)
    # deterministic synthetic weights (shapes from the module's __init__)
    wq = jax.random.normal(k1, (C, C), dtype=jnp.float32) * 0.1        # q: Linear(dim, dim, bias=False)
    wkv = jax.random.normal(k2, (2 * C, C), dtype=jnp.float32) * 0.1   # kv: Linear(dim, 2*dim, bias=False)
    wp = jax.random.normal(k3, (C, C), dtype=jnp.float32) * 0.1        # proj: Linear(dim, dim)
    bp = jax.random.normal(k4, (C,), dtype=jnp.float32) * 0.1          # proj bias

    out = jax.block_until_ready(
        efficient_self_attention(x, wq, wkv, wp, bp, num_heads=NUM_HEADS))
    ref = jax.block_until_ready(esa_ref(x, wq, wkv, wp, bp, NUM_HEADS))

    assert out.shape == (B, C, H, W)
    max_err = float(jnp.max(jnp.abs(out - ref)))
    # bf16 MXU operands (f32 accumulation, f32 softmax) -> slightly looser tol.
    assert jnp.allclose(out, ref, rtol=2e-2, atol=2e-2), max_err
    print("KERNEL_OK")
</pallas_src>

<mosaic_0001>
module attributes {stable_mosaic.version = 11 : i64} {
  func.func @esa_kernel(%arg0: i32, %arg1: memref<1x32x256xf32, #tpu.memory_space<vmem>>, %arg2: memref<96x32xbf16, #tpu.memory_space<vmem>>, %arg3: memref<32x32xbf16, #tpu.memory_space<vmem>>, %arg4: memref<32x1xf32, #tpu.memory_space<vmem>>, %arg5: memref<1x32x256xf32, #tpu.memory_space<vmem>>, %arg6: memref<32x256xf32, #tpu.memory_space<vmem>>) attributes {dimension_semantics = [#tpu.dimension_semantics<parallel>], iteration_bounds = array<i64: 2>, scalar_prefetch = 0 : i64, scratch_operands = 1 : i64, tpu.core_type = #tpu.core_type<tc>, window_params = [{transform_indices = @transform_0, window_bounds = array<i64: 1, 32, 256>}, {pipeline_mode = #tpu.pipeline_mode<synchronous>, transform_indices = @transform_1, window_bounds = array<i64: 96, 32>}, {pipeline_mode = #tpu.pipeline_mode<synchronous>, transform_indices = @transform_2, window_bounds = array<i64: 32, 32>}, {pipeline_mode = #tpu.pipeline_mode<synchronous>, transform_indices = @transform_3, window_bounds = array<i64: 32, 1>}, {transform_indices = @transform_4, window_bounds = array<i64: 1, 32, 256>}]} {
    %c0 = arith.constant 0 : index
    %c0_0 = arith.constant 0 : index
    %0 = vector.load %arg2[%c0, %c0_0] : memref<96x32xbf16, #tpu.memory_space<vmem>>, vector<96x32xbf16>
    %c0_1 = arith.constant 0 : index
    %c0_2 = arith.constant 0 : index
    %1 = vector.load %arg3[%c0_1, %c0_2] : memref<32x32xbf16, #tpu.memory_space<vmem>>, vector<32x32xbf16>
    %c0_3 = arith.constant 0 : index
    %c0_4 = arith.constant 0 : index
    %2 = vector.load %arg4[%c0_3, %c0_4] : memref<32x1xf32, #tpu.memory_space<vmem>>, vector<32x1xf32>
    %c0_5 = arith.constant 0 : index
    %c0_6 = arith.constant 0 : index
    %c0_7 = arith.constant 0 : index
    %3 = vector.load %arg1[%c0_5, %c0_6, %c0_7] : memref<1x32x256xf32, #tpu.memory_space<vmem>>, vector<1x32x256xf32>
    %4 = vector.shape_cast %3 : vector<1x32x256xf32> to vector<32x256xf32>
    %5 = arith.truncf %4 : vector<32x256xf32> to vector<32x256xbf16>
    %cst = arith.constant dense<0.000000e+00> : vector<96x256xf32>
    %6 = tpu.matmul %0, %5, %cst {dimension_numbers = #tpu.dot_dimension_numbers<[1], [0], [0], [1], [0, 0, 1, 1], [], []>} : vector<96x32xbf16>, vector<32x256xbf16>, vector<96x256xf32> -> vector<96x256xf32>
    %7 = vector.extract_strided_slice %6 {offsets = [0, 0], sizes = [32, 256], strides = [1, 1]} : vector<96x256xf32> to vector<32x256xf32>
    %8 = vector.extract_strided_slice %6 {offsets = [32, 0], sizes = [32, 256], strides = [1, 1]} : vector<96x256xf32> to vector<32x256xf32>
    %9 = vector.extract_strided_slice %6 {offsets = [64, 0], sizes = [32, 256], strides = [1, 1]} : vector<96x256xf32> to vector<32x256xf32>
    %10 = vector.extract_strided_slice %7 {offsets = [0, 0], sizes = [4, 256], strides = [1, 1]} : vector<32x256xf32> to vector<4x256xf32>
    %cst_8 = arith.constant 5.000000e-01 : f32
    %11 = vector.broadcast %cst_8 : f32 to vector<4x256xf32>
    %12 = arith.mulf %10, %11 : vector<4x256xf32>
    %13 = arith.truncf %12 : vector<4x256xf32> to vector<4x256xbf16>
    %14 = vector.extract_strided_slice %8 {offsets = [0, 0], sizes = [4, 256], strides = [1, 1]} : vector<32x256xf32> to vector<4x256xf32>
    %15 = arith.truncf %14 : vector<4x256xf32> to vector<4x256xbf16>
    %16 = vector.extract_strided_slice %9 {offsets = [0, 0], sizes = [4, 256], strides = [1, 1]} : vector<32x256xf32> to vector<4x256xf32>
    %17 = arith.truncf %16 : vector<4x256xf32> to vector<4x256xbf16>
    %cst_9 = arith.constant dense<0.000000e+00> : vector<256x256xf32>
    %18 = tpu.matmul %15, %13, %cst_9 {dimension_numbers = #tpu.dot_dimension_numbers<[0], [0], [1], [1], [0, 1, 1, 1], [], []>} : vector<4x256xbf16>, vector<4x256xbf16>, vector<256x256xf32> -> vector<256x256xf32>
    %cst_10 = arith.constant dense<0xFF800000> : vector<256xf32>
    %19 = vector.multi_reduction <maximumf>, %18, %cst_10 [0] : vector<256x256xf32> to vector<256xf32>
    %20 = vector.shape_cast %19 : vector<256xf32> to vector<1x256xf32>
    %21 = vector.broadcast %20 : vector<1x256xf32> to vector<256x256xf32>
    %22 = arith.subf %18, %21 : vector<256x256xf32>
    %23 = math.exp %22 : vector<256x256xf32>
    %cst_11 = arith.constant dense<0.000000e+00> : vector<256xf32>
    %24 = vector.multi_reduction <add>, %23, %cst_11 [0] : vector<256x256xf32> to vector<256xf32>
    %25 = vector.shape_cast %24 : vector<256xf32> to vector<1x256xf32>
    %26 = arith.truncf %23 : vector<256x256xf32> to vector<256x256xbf16>
    %cst_12 = arith.constant dense<0.000000e+00> : vector<4x256xf32>
    %27 = tpu.matmul %17, %26, %cst_12 {dimension_numbers = #tpu.dot_dimension_numbers<[1], [0], [0], [1], [0, 0, 1, 1], [], []>} : vector<4x256xbf16>, vector<256x256xbf16>, vector<4x256xf32> -> vector<4x256xf32>
    %28 = tpu.reciprocal %25 {approx = true} : vector<1x256xf32> -> vector<1x256xf32>
    %29 = vector.broadcast %28 : vector<1x256xf32> to vector<4x256xf32>
    %30 = arith.mulf %27, %29 : vector<4x256xf32>
    %c0_13 = arith.constant 0 : index
    %c0_14 = arith.constant 0 : index
    %31 = vector.load %arg6[%c0_13, %c0_14] : memref<32x256xf32, #tpu.memory_space<vmem>>, vector<4x256xf32>
    tpu.vector_store %arg6[%c0_13, %c0_14], %30 {strides = array<i32>} : memref<32x256xf32, #tpu.memory_space<vmem>>, vector<4x256xf32>,
    %32 = vector.extract_strided_slice %7 {offsets = [4, 0], sizes = [4, 256], strides = [1, 1]} : vector<32x256xf32> to vector<4x256xf32>
    %cst_15 = arith.constant 5.000000e-01 : f32
    %33 = vector.broadcast %cst_15 : f32 to vector<4x256xf32>
    %34 = arith.mulf %32, %33 : vector<4x256xf32>
    %35 = arith.truncf %34 : vector<4x256xf32> to vector<4x256xbf16>
    %36 = vector.extract_strided_slice %8 {offsets = [4, 0], sizes = [4, 256], strides = [1, 1]} : vector<32x256xf32> to vector<4x256xf32>
    %37 = arith.truncf %36 : vector<4x256xf32> to vector<4x256xbf16>
    %38 = vector.extract_strided_slice %9 {offsets = [4, 0], sizes = [4, 256], strides = [1, 1]} : vector<32x256xf32> to vector<4x256xf32>
    %39 = arith.truncf %38 : vector<4x256xf32> to vector<4x256xbf16>
    %cst_16 = arith.constant dense<0.000000e+00> : vector<256x256xf32>
    %40 = tpu.matmul %37, %35, %cst_16 {dimension_numbers = #tpu.dot_dimension_numbers<[0], [0], [1], [1], [0, 1, 1, 1], [], []>} : vector<4x256xbf16>, vector<4x256xbf16>, vector<256x256xf32> -> vector<256x256xf32>
    %cst_17 = arith.constant dense<0xFF800000> : vector<256xf32>
    %41 = vector.multi_reduction <maximumf>, %40, %cst_17 [0] : vector<256x256xf32> to vector<256xf32>
    %42 = vector.shape_cast %41 : vector<256xf32> to vector<1x256xf32>
    %43 = vector.broadcast %42 : vector<1x256xf32> to vector<256x256xf32>
    %44 = arith.subf %40, %43 : vector<256x256xf32>
    %45 = math.exp %44 : vector<256x256xf32>
    %cst_18 = arith.constant dense<0.000000e+00> : vector<256xf32>
    %46 = vector.multi_reduction <add>, %45, %cst_18 [0] : vector<256x256xf32> to vector<256xf32>
    %47 = vector.shape_cast %46 : vector<256xf32> to vector<1x256xf32>
    %48 = arith.truncf %45 : vector<256x256xf32> to vector<256x256xbf16>
    %cst_19 = arith.constant dense<0.000000e+00> : vector<4x256xf32>
    %49 = tpu.matmul %39, %48, %cst_19 {dimension_numbers = #tpu.dot_dimension_numbers<[1], [0], [0], [1], [0, 0, 1, 1], [], []>} : vector<4x256xbf16>, vector<256x256xbf16>, vector<4x256xf32> -> vector<4x256xf32>
    %50 = tpu.reciprocal %47 {approx = true} : vector<1x256xf32> -> vector<1x256xf32>
    %51 = vector.broadcast %50 : vector<1x256xf32> to vector<4x256xf32>
    %52 = arith.mulf %49, %51 : vector<4x256xf32>
    %c4 = arith.constant 4 : index
    %c0_20 = arith.constant 0 : index
    %53 = vector.load %arg6[%c4, %c0_20] : memref<32x256xf32, #tpu.memory_space<vmem>>, vector<4x256xf32>
    tpu.vector_store %arg6[%c4, %c0_20], %52 {strides = array<i32>} : memref<32x256xf32, #tpu.memory_space<vmem>>, vector<4x256xf32>,
    %54 = vector.extract_strided_slice %7 {offsets = [8, 0], sizes = [4, 256], strides = [1, 1]} : vector<32x256xf32> to vector<4x256xf32>
    %cst_21 = arith.constant 5.000000e-01 : f32
    %55 = vector.broadcast %cst_21 : f32 to vector<4x256xf32>
    %56 = arith.mulf %54, %55 : vector<4x256xf32>
    %57 = arith.truncf %56 : vector<4x256xf32> to vector<4x256xbf16>
    %58 = vector.extract_strided_slice %8 {offsets = [8, 0], sizes = [4, 256], strides = [1, 1]} : vector<32x256xf32> to vector<4x256xf32>
    %59 = arith.truncf %58 : vector<4x256xf32> to vector<4x256xbf16>
    %60 = vector.extract_strided_slice %9 {offsets = [8, 0], sizes = [4, 256], strides = [1, 1]} : vector<32x256xf32> to vector<4x256xf32>
    %61 = arith.truncf %60 : vector<4x256xf32> to vector<4x256xbf16>
    %cst_22 = arith.constant dense<0.000000e+00> : vector<256x256xf32>
    %62 = tpu.matmul %59, %57, %cst_22 {dimension_numbers = #tpu.dot_dimension_numbers<[0], [0], [1], [1], [0, 1, 1, 1], [], []>} : vector<4x256xbf16>, vector<4x256xbf16>, vector<256x256xf32> -> vector<256x256xf32>
    %cst_23 = arith.constant dense<0xFF800000> : vector<256xf32>
    %63 = vector.multi_reduction <maximumf>, %62, %cst_23 [0] : vector<256x256xf32> to vector<256xf32>
    %64 = vector.shape_cast %63 : vector<256xf32> to vector<1x256xf32>
    %65 = vector.broadcast %64 : vector<1x256xf32> to vector<256x256xf32>
    %66 = arith.subf %62, %65 : vector<256x256xf32>
    %67 = math.exp %66 : vector<256x256xf32>
    %cst_24 = arith.constant dense<0.000000e+00> : vector<256xf32>
    %68 = vector.multi_reduction <add>, %67, %cst_24 [0] : vector<256x256xf32> to vector<256xf32>
    %69 = vector.shape_cast %68 : vector<256xf32> to vector<1x256xf32>
    %70 = arith.truncf %67 : vector<256x256xf32> to vector<256x256xbf16>
    %cst_25 = arith.constant dense<0.000000e+00> : vector<4x256xf32>
    %71 = tpu.matmul %61, %70, %cst_25 {dimension_numbers = #tpu.dot_dimension_numbers<[1], [0], [0], [1], [0, 0, 1, 1], [], []>} : vector<4x256xbf16>, vector<256x256xbf16>, vector<4x256xf32> -> vector<4x256xf32>
    %72 = tpu.reciprocal %69 {approx = true} : vector<1x256xf32> -> vector<1x256xf32>
    %73 = vector.broadcast %72 : vector<1x256xf32> to vector<4x256xf32>
    %74 = arith.mulf %71, %73 : vector<4x256xf32>
    %c8 = arith.constant 8 : index
    %c0_26 = arith.constant 0 : index
    %75 = vector.load %arg6[%c8, %c0_26] : memref<32x256xf32, #tpu.memory_space<vmem>>, vector<4x256xf32>
    tpu.vector_store %arg6[%c8, %c0_26], %74 {strides = array<i32>} : memref<32x256xf32, #tpu.memory_space<vmem>>, vector<4x256xf32>,
    %76 = vector.extract_strided_slice %7 {offsets = [12, 0], sizes = [4, 256], strides = [1, 1]} : vector<32x256xf32> to vector<4x256xf32>
    %cst_27 = arith.constant 5.000000e-01 : f32
    %77 = vector.broadcast %cst_27 : f32 to vector<4x256xf32>
    %78 = arith.mulf %76, %77 : vector<4x256xf32>
    %79 = arith.truncf %78 : vector<4x256xf32> to vector<4x256xbf16>
    %80 = vector.extract_strided_slice %8 {offsets = [12, 0], sizes = [4, 256], strides = [1, 1]} : vector<32x256xf32> to vector<4x256xf32>
    %81 = arith.truncf %80 : vector<4x256xf32> to vector<4x256xbf16>
    %82 = vector.extract_strided_slice %9 {offsets = [12, 0], sizes = [4, 256], strides = [1, 1]} : vector<32x256xf32> to vector<4x256xf32>
    %83 = arith.truncf %82 : vector<4x256xf32> to vector<4x256xbf16>
    %cst_28 = arith.constant dense<0.000000e+00> : vector<256x256xf32>
    %84 = tpu.matmul %81, %79, %cst_28 {dimension_numbers = #tpu.dot_dimension_numbers<[0], [0], [1], [1], [0, 1, 1, 1], [], []>} : vector<4x256xbf16>, vector<4x256xbf16>, vector<256x256xf32> -> vector<256x256xf32>
    %cst_29 = arith.constant dense<0xFF800000> : vector<256xf32>
    %85 = vector.multi_reduction <maximumf>, %84, %cst_29 [0] : vector<256x256xf32> to vector<256xf32>
    %86 = vector.shape_cast %85 : vector<256xf32> to vector<1x256xf32>
    %87 = vector.broadcast %86 : vector<1x256xf32> to vector<256x256xf32>
    %88 = arith.subf %84, %87 : vector<256x256xf32>
    %89 = math.exp %88 : vector<256x256xf32>
    %cst_30 = arith.constant dense<0.000000e+00> : vector<256xf32>
    %90 = vector.multi_reduction <add>, %89, %cst_30 [0] : vector<256x256xf32> to vector<256xf32>
    %91 = vector.shape_cast %90 : vector<256xf32> to vector<1x256xf32>
    %92 = arith.truncf %89 : vector<256x256xf32> to vector<256x256xbf16>
    %cst_31 = arith.constant dense<0.000000e+00> : vector<4x256xf32>
    %93 = tpu.matmul %83, %92, %cst_31 {dimension_numbers = #tpu.dot_dimension_numbers<[1], [0], [0], [1], [0, 0, 1, 1], [], []>} : vector<4x256xbf16>, vector<256x256xbf16>, vector<4x256xf32> -> vector<4x256xf32>
    %94 = tpu.reciprocal %91 {approx = true} : vector<1x256xf32> -> vector<1x256xf32>
    %95 = vector.broadcast %94 : vector<1x256xf32> to vector<4x256xf32>
    %96 = arith.mulf %93, %95 : vector<4x256xf32>
    %c12 = arith.constant 12 : index
    %c0_32 = arith.constant 0 : index
    %97 = vector.load %arg6[%c12, %c0_32] : memref<32x256xf32, #tpu.memory_space<vmem>>, vector<4x256xf32>
    tpu.vector_store %arg6[%c12, %c0_32], %96 {strides = array<i32>} : memref<32x256xf32, #tpu.memory_space<vmem>>, vector<4x256xf32>,
    %98 = vector.extract_strided_slice %7 {offsets = [16, 0], sizes = [4, 256], strides = [1, 1]} : vector<32x256xf32> to vector<4x256xf32>
    %cst_33 = arith.constant 5.000000e-01 : f32
    %99 = vector.broadcast %cst_33 : f32 to vector<4x256xf32>
    %100 = arith.mulf %98, %99 : vector<4x256xf32>
    %101 = arith.truncf %100 : vector<4x256xf32> to vector<4x256xbf16>
    %102 = vector.extract_strided_slice %8 {offsets = [16, 0], sizes = [4, 256], strides = [1, 1]} : vector<32x256xf32> to vector<4x256xf32>
    %103 = arith.truncf %102 : vector<4x256xf32> to vector<4x256xbf16>
    %104 = vector.extract_strided_slice %9 {offsets = [16, 0], sizes = [4, 256], strides = [1, 1]} : vector<32x256xf32> to vector<4x256xf32>
    %105 = arith.truncf %104 : vector<4x256xf32> to vector<4x256xbf16>
    %cst_34 = arith.constant dense<0.000000e+00> : vector<256x256xf32>
    %106 = tpu.matmul %103, %101, %cst_34 {dimension_numbers = #tpu.dot_dimension_numbers<[0], [0], [1], [1], [0, 1, 1, 1], [], []>} : vector<4x256xbf16>, vector<4x256xbf16>, vector<256x256xf32> -> vector<256x256xf32>
    %cst_35 = arith.constant dense<0xFF800000> : vector<256xf32>
    %107 = vector.multi_reduction <maximumf>, %106, %cst_35 [0] : vector<256x256xf32> to vector<256xf32>
    %108 = vector.shape_cast %107 : vector<256xf32> to vector<1x256xf32>
    %109 = vector.broadcast %108 : vector<1x256xf32> to vector<256x256xf32>
    %110 = arith.subf %106, %109 : vector<256x256xf32>
    %111 = math.exp %110 : vector<256x256xf32>
    %cst_36 = arith.constant dense<0.000000e+00> : vector<256xf32>
    %112 = vector.multi_reduction <add>, %111, %cst_36 [0] : vector<256x256xf32> to vector<256xf32>
    %113 = vector.shape_cast %112 : vector<256xf32> to vector<1x256xf32>
    %114 = arith.truncf %111 : vector<256x256xf32> to vector<256x256xbf16>
    %cst_37 = arith.constant dense<0.000000e+00> : vector<4x256xf32>
    %115 = tpu.matmul %105, %114, %cst_37 {dimension_numbers = #tpu.dot_dimension_numbers<[1], [0], [0], [1], [0, 0, 1, 1], [], []>} : vector<4x256xbf16>, vector<256x256xbf16>, vector<4x256xf32> -> vector<4x256xf32>
    %116 = tpu.reciprocal %113 {approx = true} : vector<1x256xf32> -> vector<1x256xf32>
    %117 = vector.broadcast %116 : vector<1x256xf32> to vector<4x256xf32>
    %118 = arith.mulf %115, %117 : vector<4x256xf32>
    %c16 = arith.constant 16 : index
    %c0_38 = arith.constant 0 : index
    %119 = vector.load %arg6[%c16, %c0_38] : memref<32x256xf32, #tpu.memory_space<vmem>>, vector<4x256xf32>
    tpu.vector_store %arg6[%c16, %c0_38], %118 {strides = array<i32>} : memref<32x256xf32, #tpu.memory_space<vmem>>, vector<4x256xf32>,
    %120 = vector.extract_strided_slice %7 {offsets = [20, 0], sizes = [4, 256], strides = [1, 1]} : vector<32x256xf32> to vector<4x256xf32>
    %cst_39 = arith.constant 5.000000e-01 : f32
    %121 = vector.broadcast %cst_39 : f32 to vector<4x256xf32>
    %122 = arith.mulf %120, %121 : vector<4x256xf32>
    %123 = arith.truncf %122 : vector<4x256xf32> to vector<4x256xbf16>
    %124 = vector.extract_strided_slice %8 {offsets = [20, 0], sizes = [4, 256], strides = [1, 1]} : vector<32x256xf32> to vector<4x256xf32>
    %125 = arith.truncf %124 : vector<4x256xf32> to vector<4x256xbf16>
    %126 = vector.extract_strided_slice %9 {offsets = [20, 0], sizes = [4, 256], strides = [1, 1]} : vector<32x256xf32> to vector<4x256xf32>
    %127 = arith.truncf %126 : vector<4x256xf32> to vector<4x256xbf16>
    %cst_40 = arith.constant dense<0.000000e+00> : vector<256x256xf32>
    %128 = tpu.matmul %125, %123, %cst_40 {dimension_numbers = #tpu.dot_dimension_numbers<[0], [0], [1], [1], [0, 1, 1, 1], [], []>} : vector<4x256xbf16>, vector<4x256xbf16>, vector<256x256xf32> -> vector<256x256xf32>
    %cst_41 = arith.constant dense<0xFF800000> : vector<256xf32>
    %129 = vector.multi_reduction <maximumf>, %128, %cst_41 [0] : vector<256x256xf32> to vector<256xf32>
    %130 = vector.shape_cast %129 : vector<256xf32> to vector<1x256xf32>
    %131 = vector.broadcast %130 : vector<1x256xf32> to vector<256x256xf32>
    %132 = arith.subf %128, %131 : vector<256x256xf32>
    %133 = math.exp %132 : vector<256x256xf32>
    %cst_42 = arith.constant dense<0.000000e+00> : vector<256xf32>
    %134 = vector.multi_reduction <add>, %133, %cst_42 [0] : vector<256x256xf32> to vector<256xf32>
    %135 = vector.shape_cast %134 : vector<256xf32> to vector<1x256xf32>
    %136 = arith.truncf %133 : vector<256x256xf32> to vector<256x256xbf16>
    %cst_43 = arith.constant dense<0.000000e+00> : vector<4x256xf32>
    %137 = tpu.matmul %127, %136, %cst_43 {dimension_numbers = #tpu.dot_dimension_numbers<[1], [0], [0], [1], [0, 0, 1, 1], [], []>} : vector<4x256xbf16>, vector<256x256xbf16>, vector<4x256xf32> -> vector<4x256xf32>
    %138 = tpu.reciprocal %135 {approx = true} : vector<1x256xf32> -> vector<1x256xf32>
    %139 = vector.broadcast %138 : vector<1x256xf32> to vector<4x256xf32>
    %140 = arith.mulf %137, %139 : vector<4x256xf32>
    %c20 = arith.constant 20 : index
    %c0_44 = arith.constant 0 : index
    %141 = vector.load %arg6[%c20, %c0_44] : memref<32x256xf32, #tpu.memory_space<vmem>>, vector<4x256xf32>
    tpu.vector_store %arg6[%c20, %c0_44], %140 {strides = array<i32>} : memref<32x256xf32, #tpu.memory_space<vmem>>, vector<4x256xf32>,
    %142 = vector.extract_strided_slice %7 {offsets = [24, 0], sizes = [4, 256], strides = [1, 1]} : vector<32x256xf32> to vector<4x256xf32>
    %cst_45 = arith.constant 5.000000e-01 : f32
    %143 = vector.broadcast %cst_45 : f32 to vector<4x256xf32>
    %144 = arith.mulf %142, %143 : vector<4x256xf32>
    %145 = arith.truncf %144 : vector<4x256xf32> to vector<4x256xbf16>
    %146 = vector.extract_strided_slice %8 {offsets = [24, 0], sizes = [4, 256], strides = [1, 1]} : vector<32x256xf32> to vector<4x256xf32>
    %147 = arith.truncf %146 : vector<4x256xf32> to vector<4x256xbf16>
    %148 = vector.extract_strided_slice %9 {offsets = [24, 0], sizes = [4, 256], strides = [1, 1]} : vector<32x256xf32> to vector<4x256xf32>
    %149 = arith.truncf %148 : vector<4x256xf32> to vector<4x256xbf16>
    %cst_46 = arith.constant dense<0.000000e+00> : vector<256x256xf32>
    %150 = tpu.matmul %147, %145, %cst_46 {dimension_numbers = #tpu.dot_dimension_numbers<[0], [0], [1], [1], [0, 1, 1, 1], [], []>} : vector<4x256xbf16>, vector<4x256xbf16>, vector<256x256xf32> -> vector<256x256xf32>
    %cst_47 = arith.constant dense<0xFF800000> : vector<256xf32>
    %151 = vector.multi_reduction <maximumf>, %150, %cst_47 [0] : vector<256x256xf32> to vector<256xf32>
    %152 = vector.shape_cast %151 : vector<256xf32> to vector<1x256xf32>
    %153 = vector.broadcast %152 : vector<1x256xf32> to vector<256x256xf32>
    %154 = arith.subf %150, %153 : vector<256x256xf32>
    %155 = math.exp %154 : vector<256x256xf32>
    %cst_48 = arith.constant dense<0.000000e+00> : vector<256xf32>
    %156 = vector.multi_reduction <add>, %155, %cst_48 [0] : vector<256x256xf32> to vector<256xf32>
    %157 = vector.shape_cast %156 : vector<256xf32> to vector<1x256xf32>
    %158 = arith.truncf %155 : vector<256x256xf32> to vector<256x256xbf16>
    %cst_49 = arith.constant dense<0.000000e+00> : vector<4x256xf32>
    %159 = tpu.matmul %149, %158, %cst_49 {dimension_numbers = #tpu.dot_dimension_numbers<[1], [0], [0], [1], [0, 0, 1, 1], [], []>} : vector<4x256xbf16>, vector<256x256xbf16>, vector<4x256xf32> -> vector<4x256xf32>
    %160 = tpu.reciprocal %157 {approx = true} : vector<1x256xf32> -> vector<1x256xf32>
    %161 = vector.broadcast %160 : vector<1x256xf32> to vector<4x256xf32>
    %162 = arith.mulf %159, %161 : vector<4x256xf32>
    %c24 = arith.constant 24 : index
    %c0_50 = arith.constant 0 : index
    %163 = vector.load %arg6[%c24, %c0_50] : memref<32x256xf32, #tpu.memory_space<vmem>>, vector<4x256xf32>
    tpu.vector_store %arg6[%c24, %c0_50], %162 {strides = array<i32>} : memref<32x256xf32, #tpu.memory_space<vmem>>, vector<4x256xf32>,
    %164 = vector.extract_strided_slice %7 {offsets = [28, 0], sizes = [4, 256], strides = [1, 1]} : vector<32x256xf32> to vector<4x256xf32>
    %cst_51 = arith.constant 5.000000e-01 : f32
    %165 = vector.broadcast %cst_51 : f32 to vector<4x256xf32>
    %166 = arith.mulf %164, %165 : vector<4x256xf32>
    %167 = arith.truncf %166 : vector<4x256xf32> to vector<4x256xbf16>
    %168 = vector.extract_strided_slice %8 {offsets = [28, 0], sizes = [4, 256], strides = [1, 1]} : vector<32x256xf32> to vector<4x256xf32>
    %169 = arith.truncf %168 : vector<4x256xf32> to vector<4x256xbf16>
    %170 = vector.extract_strided_slice %9 {offsets = [28, 0], sizes = [4, 256], strides = [1, 1]} : vector<32x256xf32> to vector<4x256xf32>
    %171 = arith.truncf %170 : vector<4x256xf32> to vector<4x256xbf16>
    %cst_52 = arith.constant dense<0.000000e+00> : vector<256x256xf32>
    %172 = tpu.matmul %169, %167, %cst_52 {dimension_numbers = #tpu.dot_dimension_numbers<[0], [0], [1], [1], [0, 1, 1, 1], [], []>} : vector<4x256xbf16>, vector<4x256xbf16>, vector<256x256xf32> -> vector<256x256xf32>
    %cst_53 = arith.constant dense<0xFF800000> : vector<256xf32>
    %173 = vector.multi_reduction <maximumf>, %172, %cst_53 [0] : vector<256x256xf32> to vector<256xf32>
    %174 = vector.shape_cast %173 : vector<256xf32> to vector<1x256xf32>
    %175 = vector.broadcast %174 : vector<1x256xf32> to vector<256x256xf32>
    %176 = arith.subf %172, %175 : vector<256x256xf32>
    %177 = math.exp %176 : vector<256x256xf32>
    %cst_54 = arith.constant dense<0.000000e+00> : vector<256xf32>
    %178 = vector.multi_reduction <add>, %177, %cst_54 [0] : vector<256x256xf32> to vector<256xf32>
    %179 = vector.shape_cast %178 : vector<256xf32> to vector<1x256xf32>
    %180 = arith.truncf %177 : vector<256x256xf32> to vector<256x256xbf16>
    %cst_55 = arith.constant dense<0.000000e+00> : vector<4x256xf32>
    %181 = tpu.matmul %171, %180, %cst_55 {dimension_numbers = #tpu.dot_dimension_numbers<[1], [0], [0], [1], [0, 0, 1, 1], [], []>} : vector<4x256xbf16>, vector<256x256xbf16>, vector<4x256xf32> -> vector<4x256xf32>
    %182 = tpu.reciprocal %179 {approx = true} : vector<1x256xf32> -> vector<1x256xf32>
    %183 = vector.broadcast %182 : vector<1x256xf32> to vector<4x256xf32>
    %184 = arith.mulf %181, %183 : vector<4x256xf32>
    %c28 = arith.constant 28 : index
    %c0_56 = arith.constant 0 : index
    %185 = vector.load %arg6[%c28, %c0_56] : memref<32x256xf32, #tpu.memory_space<vmem>>, vector<4x256xf32>
    tpu.vector_store %arg6[%c28, %c0_56], %184 {strides = array<i32>} : memref<32x256xf32, #tpu.memory_space<vmem>>, vector<4x256xf32>,
    %c0_57 = arith.constant 0 : index
    %c0_58 = arith.constant 0 : index
    %186 = vector.load %arg6[%c0_57, %c0_58] : memref<32x256xf32, #tpu.memory_space<vmem>>, vector<32x256xf32>
    %187 = arith.truncf %186 : vector<32x256xf32> to vector<32x256xbf16>
    %cst_59 = arith.constant dense<0.000000e+00> : vector<32x256xf32>
    %188 = tpu.matmul %1, %187, %cst_59 {dimension_numbers = #tpu.dot_dimension_numbers<[1], [0], [0], [1], [0, 0, 1, 1], [], []>} : vector<32x32xbf16>, vector<32x256xbf16>, vector<32x256xf32> -> vector<32x256xf32>
    %189 = vector.broadcast %2 : vector<32x1xf32> to vector<32x256xf32>
    %190 = arith.addf %188, %189 : vector<32x256xf32>
    %c0_60 = arith.constant 0 : index
    %c0_61 = arith.constant 0 : index
    %c0_62 = arith.constant 0 : index
    %191 = vector.load %arg5[%c0_60, %c0_61, %c0_62] : memref<1x32x256xf32, #tpu.memory_space<vmem>>, vector<1x32x256xf32>
    %192 = vector.shape_cast %191 : vector<1x32x256xf32> to vector<32x256xf32>
    %193 = vector.shape_cast %190 : vector<32x256xf32> to vector<1x32x256xf32>
    tpu.vector_store %arg5[%c0_60, %c0_61, %c0_62], %193 {strides = array<i32>} : memref<1x32x256xf32, #tpu.memory_space<vmem>>, vector<1x32x256xf32>,
    return
  }
  func.func @transform_0(%arg0: i32) -> (i32, i32, i32) {
    %c0_i32 = arith.constant 0 : i32
    %c0_i32_0 = arith.constant 0 : i32
    %c0_i32_1 = arith.constant 0 : i32
    return %arg0, %c0_i32, %c0_i32_0 : i32, i32, i32
  }
  func.func @transform_1(%arg0: i32) -> (i32, i32) {
    %c0_i32 = arith.constant 0 : i32
    %c0_i32_0 = arith.constant 0 : i32
    %c0_i32_1 = arith.constant 0 : i32
    return %c0_i32, %c0_i32_0 : i32, i32
  }
  func.func @transform_2(%arg0: i32) -> (i32, i32) {
    %c0_i32 = arith.constant 0 : i32
    %c0_i32_0 = arith.constant 0 : i32
    %c0_i32_1 = arith.constant 0 : i32
    return %c0_i32, %c0_i32_0 : i32, i32
  }
  func.func @transform_3(%arg0: i32) -> (i32, i32) {
    %c0_i32 = arith.constant 0 : i32
    %c0_i32_0 = arith.constant 0 : i32
    %c0_i32_1 = arith.constant 0 : i32
    return %c0_i32, %c0_i32_0 : i32, i32
  }
  func.func @transform_4(%arg0: i32) -> (i32, i32, i32) {
    %c0_i32 = arith.constant 0 : i32
    %c0_i32_0 = arith.constant 0 : i32
    %c0_i32_1 = arith.constant 0 : i32
    return %arg0, %c0_i32, %c0_i32_0 : i32, i32, i32
  }
}

</mosaic_0001>

<llo_original>
// kernel: tpu_custom_call.1
$region0: #{tpu_custom_call.1}
  #allocation0 [shape = 'u32[]', space=smem, size = 0x4, offset = 0x4, fixed_abs, tag = 'smem constant byte address 0x4 - core index']
  #allocation1 [shape = 'u32[144,128]{1,0:T(1,128)}', space=vmem, size = 0x12000, scoped, tag = 'internal scratch']
  #allocation2 [shape = 'f32[32,256]{1,0:T(8,128)}', space=vmem, size = 0x8000, scoped, tag = 'scratch operand']
  %s0 = inlined_call_operand.hbm [shape: f32[2,32,256], index: 0, kind: input, shape index: {}]
  %s1 = inlined_call_operand.vmem [shape: bf16[96,32], index: 1, kind: input, shape index: {}]
  %s2 = inlined_call_operand.vmem [shape: bf16[32,32], index: 2, kind: input, shape index: {}]
  %s3 = inlined_call_operand.vmem [shape: f32[32,1], index: 3, kind: input, shape index: {}]
  %s4 = inlined_call_operand.hbm [shape: f32[2,32,256], index: 4, kind: output, shape index: {}]
  %s5 = sld [smem:[#allocation0]]
  $region53: #{tpu_custom_call.1} parent=0
    _
  %s7 = ssub.s32 1, %s5
  %s8 = scalar_select 0, %s7, %s5
  $region1: #{tpu_custom_call.1} parent=0
    #allocation3 [shape = 'u8[65536]{0}', space=vmem, size = 0x10000, scoped, tag = 'input window, operand 0']
    #allocation4 [shape = 's32[2]{0}', space=sflag, size = 0x8, scoped, tag = 'scoped memory for tpu_custom_call.1']
    #allocation5 [shape = 's32[2]{0}', space=sflag, size = 0x8, scoped, tag = 'scoped memory for tpu_custom_call.1']
    #allocation6 [shape = 'u8[65536]{0}', space=vmem, size = 0x10000, scoped, tag = 'output window, operand 0']
    %9 = vsyncpa [#allocation4], 0
    %s10 = scalar_lea.sflag [#allocation4], 1
    %11 = vsyncpa %s10, 0
    %12 = vsyncpa [#allocation5], 0
    %s13 = scalar_lea.sflag [#allocation5], 1
    %14 = vsyncpa %s13, 0
    loop: start=0, step=1, limit=4
    $region2: #{tpu_custom_call.1} parent=1 // loop_pre_header
      _
    $region3: #{tpu_custom_call.1} parent=1 // loop_header
      %s16 = sphi 0, %s20
      %p17 = scmp.ge.s32.totalorder %s16, 4
      %s26 = sphi 0, %s28
      %s29 = sphi 0, %s26
      %s30 = sphi 0, %s29
      %s46 = sphi 0, %s30
      %s50 = sphi 0, %s50
      %s52 = sphi 0, %s50
      %s53 = sphi 0, %s52
      %s67 = sphi 0, %s53
      %s71 = sphi 0, %s71
      %s73 = sphi 0, %s71
      %s74 = sphi 0, %s73
      %s88 = sphi 0, %s74
      %s92 = sphi 0, %s92
      %s94 = sphi 0, %s92
      %s95 = sphi 0, %s94
      %s109 = sphi 0, %s95
      %s115 = sphi 0, %s117
      %s118 = sphi 0, %s115
      %s119 = sphi 0, %s118
      %s135 = sphi 0, %s119
    $region4: #{tpu_custom_call.1} parent=1 // loop_header_branch
      %19 = sbr.rel (%p17) target = $region8
    $region5: #{tpu_custom_call.1} parent=1 // loop_body
      %s21 = ssub.s32 %s16, 1
      %s22 = ssub.s32 %s16, 2
      %s23 = sadd.s32 %s16, 1
      %s24 = ssub.s32 %s16, %s23
      %p25 = scmp.eq.s32.totalorder %s24, 0
      %s27 = sadd.s32 %s26, 1
      %s28 = scalar_select %p25, %s26, %s27
      %p31 = pneg %p25
      %p32 = scmp.eq.s32.totalorder %s16, 1
      %p33 = por %p31, %p32
      %p34 = scmp.ne.s32.totalorder %s26, %s29
      %p35 = scmp.eq.s32.totalorder %s16, 0
      %p36 = por %p34, %p35
      %p37 = scmp.ne.s32.totalorder %s26, %s29
      %p38 = scmp.eq.s32.totalorder %s21, 1
      %p39 = por %p37, %p38
      %p40 = scmp.ne.s32.totalorder %s29, %s30
      %p41 = scmp.eq.s32.totalorder %s21, 0
      %p42 = por %p40, %p41
      %p43 = scmp.ne.s32.totalorder %s29, %s30
      %p44 = scmp.eq.s32.totalorder %s22, 1
      %p45 = por %p43, %p44
      %p47 = scmp.ne.s32.totalorder %s30, %s46
      %p48 = scmp.eq.s32.totalorder %s22, 0
      %p49 = por %p47, %p48
      %s51 = sadd.s32 %s50, 1
      %p54 = scmp.eq.s32.totalorder %s16, 1
      %p55 = scmp.ne.s32.totalorder %s50, %s52
      %p56 = scmp.eq.s32.totalorder %s16, 0
      %p57 = por %p55, %p56
      %p58 = scmp.ne.s32.totalorder %s50, %s52
      %p59 = scmp.eq.s32.totalorder %s21, 1
      %p60 = por %p58, %p59
      %p61 = scmp.ne.s32.totalorder %s52, %s53
      %p62 = scmp.eq.s32.totalorder %s21, 0
      %p63 = por %p61, %p62
      %p64 = scmp.ne.s32.totalorder %s52, %s53
      %p65 = scmp.eq.s32.totalorder %s22, 1
      %p66 = por %p64, %p65
      %p68 = scmp.ne.s32.totalorder %s53, %s67
      %p69 = scmp.eq.s32.totalorder %s22, 0
      %p70 = por %p68, %p69
      %s72 = sadd.s32 %s71, 1
      %p75 = scmp.eq.s32.totalorder %s16, 1
      %p76 = scmp.ne.s32.totalorder %s71, %s73
      %p77 = scmp.eq.s32.totalorder %s16, 0
      %p78 = por %p76, %p77
      %p79 = scmp.ne.s32.totalorder %s71, %s73
      %p80 = scmp.eq.s32.totalorder %s21, 1
      %p81 = por %p79, %p80
      %p82 = scmp.ne.s32.totalorder %s73, %s74
      %p83 = scmp.eq.s32.totalorder %s21, 0
      %p84 = por %p82, %p83
      %p85 = scmp.ne.s32.totalorder %s73, %s74
      %p86 = scmp.eq.s32.totalorder %s22, 1
      %p87 = por %p85, %p86
      %p89 = scmp.ne.s32.totalorder %s74, %s88
      %p90 = scmp.eq.s32.totalorder %s22, 0
      %p91 = por %p89, %p90
      %s93 = sadd.s32 %s92, 1
      %p96 = scmp.eq.s32.totalorder %s16, 1
      %p97 = scmp.ne.s32.totalorder %s92, %s94
      %p98 = scmp.eq.s32.totalorder %s16, 0
      %p99 = por %p97, %p98
      %p100 = scmp.ne.s32.totalorder %s92, %s94
      %p101 = scmp.eq.s32.totalorder %s21, 1
      %p102 = por %p100, %p101
      %p103 = scmp.ne.s32.totalorder %s94, %s95
      %p104 = scmp.eq.s32.totalorder %s21, 0
      %p105 = por %p103, %p104
      %p106 = scmp.ne.s32.totalorder %s94, %s95
      %p107 = scmp.eq.s32.totalorder %s22, 1
      %p108 = por %p106, %p107
      %p110 = scmp.ne.s32.totalorder %s95, %s109
      %p111 = scmp.eq.s32.totalorder %s22, 0
      %p112 = por %p110, %p111
      %s113 = ssub.s32 %s16, %s23
      %p114 = scmp.eq.s32.totalorder %s113, 0
      %s116 = sadd.s32 %s115, 1
      %s117 = scalar_select %p114, %s115, %s116
      %p120 = pneg %p114
      %p121 = scmp.eq.s32.totalorder %s16, 1
      %p122 = por %p120, %p121
      %p123 = scmp.ne.s32.totalorder %s115, %s118
      %p124 = scmp.eq.s32.totalorder %s16, 0
      %p125 = por %p123, %p124
      %p126 = scmp.ne.s32.totalorder %s115, %s118
      %p127 = scmp.eq.s32.totalorder %s21, 1
      %p128 = por %p126, %p127
      %p129 = scmp.ne.s32.totalorder %s118, %s119
      %p130 = scmp.eq.s32.totalorder %s21, 0
      %p131 = por %p129, %p130
      %p132 = scmp.ne.s32.totalorder %s118, %s119
      %p133 = scmp.eq.s32.totalorder %s22, 1
      %p134 = por %p132, %p133
      %p136 = scmp.ne.s32.totalorder %s119, %s135
      %p137 = scmp.eq.s32.totalorder %s22, 0
      %p138 = por %p136, %p137
      %p139 = scmp.le.s32.totalorder 1, %s16
      %p140 = scmp.lt.s32.totalorder %s16, 3
      %p141 = pnand %p139, %p140
      %p142 = pneg %p141
      // Predicated region
      $region9: #{tpu_custom_call.1} parent=5 // pred_check
        _
      $region10: #{tpu_custom_call.1} parent=5 // pred_check_branch
        %144 = sbr.rel (%p141) target = $region12
      $region11: #{tpu_custom_call.1} parent=5 // pred_region
        %s145 = ssub.s32 %s16, 1
        // Predicated region
        $region13: #{tpu_custom_call.1} parent=11 // pred_check
          %p146 = pneg %p63
        $region14: #{tpu_custom_call.1} parent=11 // pred_check_branch
          %148 = sbr.rel (%p146) target = $region16
        $region15: #{tpu_custom_call.1} parent=11 // pred_region
          _
        $region16: #{tpu_custom_call.1} parent=11 // pred_fallthru
          _
        // Predicated region
        $region17: #{tpu_custom_call.1} parent=11 // pred_check
          %p149 = pneg %p84
        $region18: #{tpu_custom_call.1} parent=11 // pred_check_branch
          %151 = sbr.rel (%p149) target = $region20
        $region19: #{tpu_custom_call.1} parent=11 // pred_region
          _
        $region20: #{tpu_custom_call.1} parent=11 // pred_fallthru
          _
        // Predicated region
        $region21: #{tpu_custom_call.1} parent=11 // pred_check
          %p152 = pneg %p105
        $region22: #{tpu_custom_call.1} parent=11 // pred_check_branch
          %154 = sbr.rel (%p152) target = $region24
        $region23: #{tpu_custom_call.1} parent=11 // pred_region
          _
        $region24: #{tpu_custom_call.1} parent=11 // pred_fallthru
          _
      $region12: #{tpu_custom_call.1} parent=5 // pred_fallthru
        _
      %p155 = scmp.lt.s32.totalorder %s16, 2
      // Predicated region
      $region25: #{tpu_custom_call.1} parent=5 // pred_check
        %p156 = pneg %p155
      $region26: #{tpu_custom_call.1} parent=5 // pred_check_branch
        %158 = sbr.rel (%p156) target = $region28
      $region27: #{tpu_custom_call.1} parent=5 // pred_region
        // Predicated region
        $region29: #{tpu_custom_call.1} parent=27 // pred_check
          %p159 = pneg %p36
        $region30: #{tpu_custom_call.1} parent=27 // pred_check_branch
          %161 = sbr.rel (%p159) target = $region32
        $region31: #{tpu_custom_call.1} parent=27 // pred_region
          %s162 = sand.u32 %s26, 1
          %s163 = scalar_lea.sflag [#allocation4], %s162
          %s164 = sand.u32 %s26, 1
          %s165 = smul.addr %s164, 64
          %s166 = scalar_lea.vmem [#allocation3], %s165
          %s168 = ssub.s32 1024, 1024
          %169 = vsyncadd %s163, %s168
          %s170 = smul.addr %s16, 8
          %s171 = smul.addr %s170, 128
          %s172 = scalar_lea.hbm %s0, %s171
          %s173 = sshll.u32 %s166, 4
          %s174 = int_to_ptr.vmem [resolvable:$true] %s173
          %179 = dma.hbm_to_vmem [thread:$0]  %s172, 1024, %s174, %s163, 256, 256, 16
        $region32: #{tpu_custom_call.1} parent=27 // pred_fallthru
          _
      $region28: #{tpu_custom_call.1} parent=5 // pred_fallthru
        _
      %p180 = scmp.le.s32.totalorder 1, %s16
      %p181 = scmp.lt.s32.totalorder %s16, 3
      %p182 = pnand %p180, %p181
      %p183 = pneg %p182
      // Predicated region
      $region33: #{tpu_custom_call.1} parent=5 // pred_check
        _
      $region34: #{tpu_custom_call.1} parent=5 // pred_check_branch
        %185 = sbr.rel (%p182) target = $region36
      $region35: #{tpu_custom_call.1} parent=5 // pred_region
        %s186 = ssub.s32 %s16, 1
        %s187 = sand.u32 %s29, 1
        %s188 = scalar_lea.sflag [#allocation4], %s187
        %s189 = sand.u32 %s29, 1
        %s190 = smul.addr %s189, 64
        %s191 = scalar_lea.vmem [#allocation3], %s190
        // Predicated region
        $region37: #{tpu_custom_call.1} parent=35 // pred_check
          %p192 = pneg %p42
        $region38: #{tpu_custom_call.1} parent=35 // pred_check_branch
          %194 = sbr.rel (%p192) target = $region40
        $region39: #{tpu_custom_call.1} parent=35 // pred_region
          %195 = dma.done %s188, 1024
        $region40: #{tpu_custom_call.1} parent=35 // pred_fallthru
          _
        %s196 = sand.u32 %s29, 1
        %s197 = scalar_lea.sflag [#allocation4], %s196
        %s198 = sand.u32 %s29, 1
        %s199 = smul.addr %s198, 64
        %s200 = scalar_lea.vmem [#allocation3], %s199
        %p201 = pneg %p42
        %p202 = pneg %p39
        %p203 = pneg %p63
        %p204 = pneg %p60
        %p205 = pneg %p84
        %p206 = pneg %p81
        %p207 = pneg %p105
        %p208 = pneg %p102
        %p209 = pneg %p131
        %p210 = pneg %p128
        %s211 = sand.u32 %s118, 1
        %s212 = scalar_lea.sflag [#allocation5], %s211
        %s213 = sand.u32 %s118, 1
        %s214 = smul.addr %s213, 64
        %s215 = scalar_lea.vmem [#allocation6], %s214
        %v217 = vld [vmem:[%s1] sm:$0xf]
        %v218 = vld [vmem:[%s1 + $0x4] sm:$0xf]
        %v219 = vld [vmem:[%s1 + $0x8] sm:$0xf]
        %v220 = vld [vmem:[%s1 + $0xc] sm:$0xf]
        %v221 = vld [vmem:[%s1 + $0x10] sm:$0xf]
        %v222 = vld [vmem:[%s1 + $0x14] sm:$0xf]
        %v223 = vld [vmem:[%s1 + $0x18] sm:$0xf]
        %v224 = vld [vmem:[%s1 + $0x1c] sm:$0xf]
        %v225 = vld [vmem:[%s1 + $0x20] sm:$0xf]
        %v226 = vld [vmem:[%s1 + $0x24] sm:$0xf]
        %v227 = vld [vmem:[%s1 + $0x28] sm:$0xf]
        %v228 = vld [vmem:[%s1 + $0x2c] sm:$0xf]
        %v229 = vld [vmem:[%s2] sm:$0xf]
        %v230 = vld [vmem:[%s2 + $0x4] sm:$0xf]
        %v231 = vld [vmem:[%s2 + $0x8] sm:$0xf]
        %v232 = vld [vmem:[%s2 + $0xc] sm:$0xf]
        %v233 = vld [vmem:[%s3] sm:$0xff]
        %v234 = vld [vmem:[%s3 + $0x8] sm:$0xff]
        %v235 = vld [vmem:[%s3 + $0x10] sm:$0xff]
        %v236 = vld [vmem:[%s3 + $0x18] sm:$0xff]
        %v237 = vld [vmem:[%s191] sm:$0xff]
        %v238 = vld [vmem:[%s191 + $0x8] sm:$0xff]
        %v239 = vld [vmem:[%s191 + $0x10] sm:$0xff]
        %v240 = vld [vmem:[%s191 + $0x18] sm:$0xff]
        %v241 = vld [vmem:[%s191 + $0x20] sm:$0xff]
        %v242 = vld [vmem:[%s191 + $0x28] sm:$0xff]
        %v243 = vld [vmem:[%s191 + $0x30] sm:$0xff]
        %v244 = vld [vmem:[%s191 + $0x38] sm:$0xff]
        %v245 = vpack.c.bf16 %v239, %v237
        %v246 = vpack.c.bf16 %v240, %v238
        %v247 = vpack.c.bf16 %v243, %v241
        %v248 = vpack.c.bf16 %v244, %v242
        %v261 = vunpack.c.l.b16 %v217
        %v262 = vunpack.c.l.b16 %v218
        %v263 = vunpack.c.l.b16 %v219
        %v264 = vunpack.c.l.b16 %v220
        %v265 = vunpack.c.l.b16 %v221
        %v266 = vunpack.c.l.b16 %v222
        %v267 = vunpack.c.l.b16 %v223
        %v268 = vunpack.c.l.b16 %v224
        %v269 = vunpack.c.l.b16 %v225
        %v270 = vunpack.c.l.b16 %v226
        %v271 = vunpack.c.l.b16 %v227
        %v272 = vunpack.c.l.b16 %v228
        %v273 = vpack.c.b16 %v262, %v261
        %v274 = vpack.c.b16 %v264, %v263
        %v275 = vpack.c.b16 %v266, %v265
        %v276 = vpack.c.b16 %v268, %v267
        %v277 = vpack.c.b16 %v270, %v269
        %v278 = vpack.c.b16 %v272, %v271
        %vm279 = vcmask 261120
        %v281 = vsel %vm279, %v273, 0
        %v284 = vsel %vm279, %v274, 0
        %v287 = vsel %vm279, %v275, 0
        %v290 = vsel %vm279, %v276, 0
        %v293 = vsel %vm279, %v277, 0
        %v296 = vsel %vm279, %v278, 0
        %298 = vmatprep.subr.bf16.mxu0 %v246
        %299 = vmatpush1.bf16.msra.mxu0 %v245
        %300 = vmatprep.subr.bf16.mxu0 %v248
        %301 = vmatpush1.bf16.msra.mxu0 %v247
        %302 = vmatprep.subr.bf16.mxu0 0
        %303 = vmatpush1.bf16.msra.mxu0 0
        %304 = vmatprep.subr.bf16.mxu0 0
        %305 = vmatpush1.bf16.msra.mxu0 0
        %306 = vmatprep.subr.bf16.mxu0 0
        %307 = vmatpush1.bf16.msra.mxu0 0
        %308 = vmatprep.subr.bf16.mxu0 0
        %309 = vmatpush1.bf16.msra.mxu0 0
        %310 = vmatprep.subr.bf16.mxu0 0
        %311 = vmatpush1.bf16.msra.mxu0 0
        %312 = vmatprep.subr.bf16.mxu0 0
        %313 = vmatpush1.bf16.msra.mxu0 0
        %314 = vmatprep.subr.bf16.mxu0 0
        %315 = vmatpush1.bf16.msra.mxu0 0
        %316 = vmatprep.subr.bf16.mxu0 0
        %317 = vmatpush1.bf16.msra.mxu0 0
        %318 = vmatprep.subr.bf16.mxu0 0
        %319 = vmatpush1.bf16.msra.mxu0 0
        %320 = vmatprep.subr.bf16.mxu0 0
        %321 = vmatpush1.bf16.msra.mxu0 0
        %322 = vmatprep.subr.bf16.mxu0 0
        %323 = vmatpush1.bf16.msra.mxu0 0
        %324 = vmatprep.subr.bf16.mxu0 0
        %325 = vmatpush1.bf16.msra.mxu0 0
        %326 = vmatprep.subr.bf16.mxu0 0
        %327 = vmatpush1.bf16.msra.mxu0 0
        %328 = vmatprep.subr.bf16.mxu0 0
        %329 = vmatpush1.bf16.msra.mxu0 0
        %330 = vmatprep.mubr.bf16.mxu0 0
        %331 = vmatmul.mubr.bf16.gmra.mrb[0].mxu0 %v281
        %v332 = vpop.f32.mrb[0].mxu0
        %v333 = vadd.f32 0.0, %v332
        %v334 = vpop.f32.mrb[0].mxu0
        %v335 = vadd.f32 0.0, %v334
        %v336 = vpop.f32.mrb[0].mxu0
        %v337 = vadd.f32 0.0, %v336
        %v338 = vpop.f32.mrb[0].mxu0
        %v339 = vadd.f32 0.0, %v338
        %340 = vmatprep.mubr.bf16.mxu0 0
        %341 = vmatmul.mubr.bf16.gmra.mrb[0].mxu0 %v284
        %v342 = vpop.f32.mrb[0].mxu0
        %v343 = vadd.f32 0.0, %v342
        %v344 = vpop.f32.mrb[0].mxu0
        %v345 = vadd.f32 0.0, %v344
        %v346 = vpop.f32.mrb[0].mxu0
        %v347 = vadd.f32 0.0, %v346
        %v348 = vpop.f32.mrb[0].mxu0
        %v349 = vadd.f32 0.0, %v348
        %350 = vmatprep.mubr.bf16.mxu0 0
        %351 = vmatmul.mubr.bf16.gmra.mrb[0].mxu0 %v287
        %v352 = vpop.f32.mrb[0].mxu0
        %v353 = vadd.f32 0.0, %v352
        %v354 = vpop.f32.mrb[0].mxu0
        %v355 = vadd.f32 0.0, %v354
        %v356 = vpop.f32.mrb[0].mxu0
        %v357 = vadd.f32 0.0, %v356
        %v358 = vpop.f32.mrb[0].mxu0
        %v359 = vadd.f32 0.0, %v358
        %360 = vmatprep.mubr.bf16.mxu0 0
        %361 = vmatmul.mubr.bf16.gmra.mrb[0].mxu0 %v290
        %v362 = vpop.f32.mrb[0].mxu0
        %v363 = vadd.f32 0.0, %v362
        %v364 = vpop.f32.mrb[0].mxu0
        %v365 = vadd.f32 0.0, %v364
        %v366 = vpop.f32.mrb[0].mxu0
        %v367 = vadd.f32 0.0, %v366
        %v368 = vpop.f32.mrb[0].mxu0
        %v369 = vadd.f32 0.0, %v368
        %370 = vmatprep.mubr.bf16.mxu0 0
        %371 = vmatmul.mubr.bf16.gmra.mrb[0].mxu0 %v293
        %v372 = vpop.f32.mrb[0].mxu0
        %v373 = vadd.f32 0.0, %v372
        %v374 = vpop.f32.mrb[0].mxu0
        %v375 = vadd.f32 0.0, %v374
        %v376 = vpop.f32.mrb[0].mxu0
        %v377 = vadd.f32 0.0, %v376
        %v378 = vpop.f32.mrb[0].mxu0
        %v379 = vadd.f32 0.0, %v378
        %380 = vmatprep.mubr.bf16.mxu0 0
        %381 = vmatmul.mubr.bf16.gmra.mrb[0].mxu0 %v296
        %v382 = vpop.f32.mrb[0].mxu0
        %v383 = vadd.f32 0.0, %v382
        %v384 = vpop.f32.mrb[0].mxu0
        %v385 = vadd.f32 0.0, %v384
        %v386 = vpop.f32.mrb[0].mxu0
        %v387 = vadd.f32 0.0, %v386
        %v388 = vpop.f32.mrb[0].mxu0
        %v389 = vadd.f32 0.0, %v388
        %390 = vdwg.mxu0
        %v391 = vmul.f32 %v333, 0.5
        %v392 = vmul.f32 %v335, 0.5
        %v393 = vpack.c.bf16 %v391, %v391
        %v394 = vpack.c.bf16 %v392, %v392
        %v395 = vpack.c.bf16 %v353, %v353
        %v396 = vpack.c.bf16 %v355, %v355
        %v397 = vpack.c.bf16 %v373, %v373
        %v398 = vpack.c.bf16 %v375, %v375
        %399 = vxpose.xlu0.c.b16.start [1/8] %v395, 128
        %400 = vxpose.xlu0.c.b16.cont [2/8] 0, 128
        %401 = vxpose.xlu0.c.b16.cont [3/8] 0, 128
        %402 = vxpose.xlu0.c.b16.cont [4/8] 0, 128
        %403 = vxpose.xlu0.c.b16.cont [5/8] 0, 128
        %404 = vxpose.xlu0.c.b16.cont [6/8] 0, 128
        %405 = vxpose.xlu0.c.b16.cont [7/8] 0, 128
        %406 = vxpose.xlu0.c.b16.end [8/8] 0, 128
        %v407 = vpop.trf.xlu0
        %v408 = vpop.trf.xlu0
        %v409 = vpop.trf.xlu0
        %v410 = vpop.trf.xlu0
        %v411 = vpop.trf.xlu0
        %v412 = vpop.trf.xlu0
        %v413 = vpop.trf.xlu0
        %v414 = vpop.trf.xlu0
        %415 = vxpose.xlu0.c.b16.start [1/8] %v396, 128
        %416 = vxpose.xlu0.c.b16.cont [2/8] 0, 128
        %417 = vxpose.xlu0.c.b16.cont [3/8] 0, 128
        %418 = vxpose.xlu0.c.b16.cont [4/8] 0, 128
        %419 = vxpose.xlu0.c.b16.cont [5/8] 0, 128
        %420 = vxpose.xlu0.c.b16.cont [6/8] 0, 128
        %421 = vxpose.xlu0.c.b16.cont [7/8] 0, 128
        %422 = vxpose.xlu0.c.b16.end [8/8] 0, 128
        %v423 = vpop.trf.xlu0
        %v424 = vpop.trf.xlu0
        %v425 = vpop.trf.xlu0
        %v426 = vpop.trf.xlu0
        %v427 = vpop.trf.xlu0
        %v428 = vpop.trf.xlu0
        %v429 = vpop.trf.xlu0
        %v430 = vpop.trf.xlu0
        %vm431 = vcmask 31744
        %v433 = vsel %vm431, %v407, 0
        %v436 = vsel %vm431, %v408, 0
        %v439 = vsel %vm431, %v409, 0
        %v442 = vsel %vm431, %v410, 0
        %v445 = vsel %vm431, %v411, 0
        %v448 = vsel %vm431, %v412, 0
        %v451 = vsel %vm431, %v413, 0
        %v454 = vsel %vm431, %v414, 0
        %v457 = vsel %vm431, %v423, 0
        %v460 = vsel %vm431, %v424, 0
        %v463 = vsel %vm431, %v425, 0
        %v466 = vsel %vm431, %v426, 0
        %v469 = vsel %vm431, %v427, 0
        %v472 = vsel %vm431, %v428, 0
        %v475 = vsel %vm431, %v429, 0
        %v478 = vsel %vm431, %v430, 0
        %vm480 = vcmask 1041408
        %v482 = vsel %vm480, %v393, 0
        %v485 = vsel %vm480, %v394, 0
        %487 = vmatprep.subr.bf16.mxu0 %v485
        %488 = vmatpush1.bf16.msra.mxu0 %v482
        %489 = vmatprep.subr.bf16.mxu0 0
        %490 = vmatpush1.bf16.msra.mxu0 0
        %491 = vmatprep.subr.bf16.mxu0 0
        %492 = vmatpush1.bf16.msra.mxu0 0
        %493 = vmatprep.subr.bf16.mxu0 0
        %494 = vmatpush1.bf16.msra.mxu0 0
        %495 = vmatprep.subr.bf16.mxu0 0
        %496 = vmatpush1.bf16.msra.mxu0 0
        %497 = vmatprep.subr.bf16.mxu0 0
        %498 = vmatpush1.bf16.msra.mxu0 0
        %499 = vmatprep.subr.bf16.mxu0 0
        %500 = vmatpush1.bf16.msra.mxu0 0
        %501 = vmatprep.subr.bf16.mxu0 0
        %502 = vmatpush1.bf16.msra.mxu0 0
        %503 = vmatprep.subr.bf16.mxu0 0
        %504 = vmatpush1.bf16.msra.mxu0 0
        %505 = vmatprep.subr.bf16.mxu0 0
        %506 = vmatpush1.bf16.msra.mxu0 0
        %507 = vmatprep.subr.bf16.mxu0 0
        %508 = vmatpush1.bf16.msra.mxu0 0
        %509 = vmatprep.subr.bf16.mxu0 0
        %510 = vmatpush1.bf16.msra.mxu0 0
        %511 = vmatprep.subr.bf16.mxu0 0
        %512 = vmatpush1.bf16.msra.mxu0 0
        %513 = vmatprep.subr.bf16.mxu0 0
        %514 = vmatpush1.bf16.msra.mxu0 0
        %515 = vmatprep.subr.bf16.mxu0 0
        %516 = vmatpush1.bf16.msra.mxu0 0
        %517 = vmatprep.subr.bf16.mxu0 0
        %518 = vmatpush1.bf16.msra.mxu0 0
        %519 = vmatprep.mubr.bf16.mxu0 0
        %520 = vmatmul.mubr.bf16.gmra.mrb[0].mxu0 %v433
        %v521 = vpop.f32.mrb[0].mxu0
        %v522 = vadd.f32 0.0, %v521
        %v523 = vpop.f32.mrb[0].mxu0
        %v524 = vadd.f32 0.0, %v523
        %v525 = vpop.f32.mrb[0].mxu0
        %v526 = vadd.f32 0.0, %v525
        %v527 = vpop.f32.mrb[0].mxu0
        %v528 = vadd.f32 0.0, %v527
        %529 = vmatprep.mubr.bf16.mxu0 0
        %530 = vmatmul.mubr.bf16.gmra.mrb[0].mxu0 %v436
        %v531 = vpop.f32.mrb[0].mxu0
        %v532 = vadd.f32 0.0, %v531
        %v533 = vpop.f32.mrb[0].mxu0
        %v534 = vadd.f32 0.0, %v533
        %v535 = vpop.f32.mrb[0].mxu0
        %v536 = vadd.f32 0.0, %v535
        %v537 = vpop.f32.mrb[0].mxu0
        %v538 = vadd.f32 0.0, %v537
        %539 = vmatprep.mubr.bf16.mxu0 0
        %540 = vmatmul.mubr.bf16.gmra.mrb[0].mxu0 %v439
        %v541 = vpop.f32.mrb[0].mxu0
        %v542 = vadd.f32 0.0, %v541
        %v543 = vpop.f32.mrb[0].mxu0
        %v544 = vadd.f32 0.0, %v543
        %v545 = vpop.f32.mrb[0].mxu0
        %v546 = vadd.f32 0.0, %v545
        %v547 = vpop.f32.mrb[0].mxu0
        %v548 = vadd.f32 0.0, %v547
        %549 = vmatprep.mubr.bf16.mxu0 0
        %550 = vmatmul.mubr.bf16.gmra.mrb[0].mxu0 %v442
        %v551 = vpop.f32.mrb[0].mxu0
        %v552 = vadd.f32 0.0, %v551
        %v553 = vpop.f32.mrb[0].mxu0
        %v554 = vadd.f32 0.0, %v553
        %v555 = vpop.f32.mrb[0].mxu0
        %v556 = vadd.f32 0.0, %v555
        %v557 = vpop.f32.mrb[0].mxu0
        %v558 = vadd.f32 0.0, %v557
        %559 = vmatprep.mubr.bf16.mxu0 0
        %560 = vmatmul.mubr.bf16.gmra.mrb[0].mxu0 %v445
        %v561 = vpop.f32.mrb[0].mxu0
        %v562 = vadd.f32 0.0, %v561
        %v563 = vpop.f32.mrb[0].mxu0
        %v564 = vadd.f32 0.0, %v563
        %v565 = vpop.f32.mrb[0].mxu0
        %v566 = vadd.f32 0.0, %v565
        %v567 = vpop.f32.mrb[0].mxu0
        %v568 = vadd.f32 0.0, %v567
        %569 = vmatprep.mubr.bf16.mxu0 0
        %570 = vmatmul.mubr.bf16.gmra.mrb[0].mxu0 %v448
        %v571 = vpop.f32.mrb[0].mxu0
        %v572 = vadd.f32 0.0, %v571
        %v573 = vpop.f32.mrb[0].mxu0
        %v574 = vadd.f32 0.0, %v573
        %v575 = vpop.f32.mrb[0].mxu0
        %v576 = vadd.f32 0.0, %v575
        %v577 = vpop.f32.mrb[0].mxu0
        %v578 = vadd.f32 0.0, %v577
        %579 = vmatprep.mubr.bf16.mxu0 0
        %580 = vmatmul.mubr.bf16.gmra.mrb[0].mxu0 %v451
        %v581 = vpop.f32.mrb[0].mxu0
        %v582 = vadd.f32 0.0, %v581
        %v583 = vpop.f32.mrb[0].mxu0
        %v584 = vadd.f32 0.0, %v583
        %v585 = vpop.f32.mrb[0].mxu0
        %v586 = vadd.f32 0.0, %v585
        %v587 = vpop.f32.mrb[0].mxu0
        %v588 = vadd.f32 0.0, %v587
        %589 = vmatprep.mubr.bf16.mxu0 0
        %590 = vmatmul.mubr.bf16.gmra.mrb[0].mxu0 %v454
        %v591 = vpop.f32.mrb[0].mxu0
        %v592 = vadd.f32 0.0, %v591
        %v593 = vpop.f32.mrb[0].mxu0
        %v594 = vadd.f32 0.0, %v593
        %v595 = vpop.f32.mrb[0].mxu0
        %v596 = vadd.f32 0.0, %v595
        %v597 = vpop.f32.mrb[0].mxu0
        %v598 = vadd.f32 0.0, %v597
        %599 = vmatprep.mubr.bf16.mxu0 0
        %600 = vmatmul.mubr.bf16.gmra.mrb[0].mxu0 %v457
        %v601 = vpop.f32.mrb[0].mxu0
        %v602 = vadd.f32 0.0, %v601
        %v603 = vpop.f32.mrb[0].mxu0
        %v604 = vadd.f32 0.0, %v603
        %v605 = vpop.f32.mrb[0].mxu0
        %v606 = vadd.f32 0.0, %v605
        %v607 = vpop.f32.mrb[0].mxu0
        %v608 = vadd.f32 0.0, %v607
        %609 = vmatprep.mubr.bf16.mxu0 0
        %610 = vmatmul.mubr.bf16.gmra.mrb[0].mxu0 %v460
        %v611 = vpop.f32.mrb[0].mxu0
        %v612 = vadd.f32 0.0, %v611
        %v613 = vpop.f32.mrb[0].mxu0
        %v614 = vadd.f32 0.0, %v613
        %v615 = vpop.f32.mrb[0].mxu0
        %v616 = vadd.f32 0.0, %v615
        %v617 = vpop.f32.mrb[0].mxu0
        %v618 = vadd.f32 0.0, %v617
        %619 = vmatprep.mubr.bf16.mxu0 0
        %620 = vmatmul.mubr.bf16.gmra.mrb[0].mxu0 %v463
        %v621 = vpop.f32.mrb[0].mxu0
        %v622 = vadd.f32 0.0, %v621
        %v623 = vpop.f32.mrb[0].mxu0
        %v624 = vadd.f32 0.0, %v623
        %v625 = vpop.f32.mrb[0].mxu0
        %v626 = vadd.f32 0.0, %v625
        %v627 = vpop.f32.mrb[0].mxu0
        %v628 = vadd.f32 0.0, %v627
        %629 = vmatprep.mubr.bf16.mxu0 0
        %630 = vmatmul.mubr.bf16.gmra.mrb[0].mxu0 %v466
        %v631 = vpop.f32.mrb[0].mxu0
        %v632 = vadd.f32 0.0, %v631
        %v633 = vpop.f32.mrb[0].mxu0
        %v634 = vadd.f32 0.0, %v633
        %v635 = vpop.f32.mrb[0].mxu0
        %v636 = vadd.f32 0.0, %v635
        %v637 = vpop.f32.mrb[0].mxu0
        %v638 = vadd.f32 0.0, %v637
        %639 = vmatprep.mubr.bf16.mxu0 0
        %640 = vmatmul.mubr.bf16.gmra.mrb[0].mxu0 %v469
        %v641 = vpop.f32.mrb[0].mxu0
        %v642 = vadd.f32 0.0, %v641
        %v643 = vpop.f32.mrb[0].mxu0
        %v644 = vadd.f32 0.0, %v643
        %v645 = vpop.f32.mrb[0].mxu0
        %v646 = vadd.f32 0.0, %v645
        %v647 = vpop.f32.mrb[0].mxu0
        %v648 = vadd.f32 0.0, %v647
        %649 = vmatprep.mubr.bf16.mxu0 0
        %650 = vmatmul.mubr.bf16.gmra.mrb[0].mxu0 %v472
        %v651 = vpop.f32.mrb[0].mxu0
        %v652 = vadd.f32 0.0, %v651
        %v653 = vpop.f32.mrb[0].mxu0
        %v654 = vadd.f32 0.0, %v653
        %v655 = vpop.f32.mrb[0].mxu0
        %v656 = vadd.f32 0.0, %v655
        %v657 = vpop.f32.mrb[0].mxu0
        %v658 = vadd.f32 0.0, %v657
        %659 = vmatprep.mubr.bf16.mxu0 0
        %660 = vmatmul.mubr.bf16.gmra.mrb[0].mxu0 %v475
        %v661 = vpop.f32.mrb[0].mxu0
        %v662 = vadd.f32 0.0, %v661
        %v663 = vpop.f32.mrb[0].mxu0
        %v664 = vadd.f32 0.0, %v663
        %v665 = vpop.f32.mrb[0].mxu0
        %v666 = vadd.f32 0.0, %v665
        %v667 = vpop.f32.mrb[0].mxu0
        %v668 = vadd.f32 0.0, %v667
        %669 = vmatprep.mubr.bf16.mxu0 0
        %670 = vmatmul.mubr.bf16.gmra.mrb[0].mxu0 %v478
        %v671 = vpop.f32.mrb[0].mxu0
        %v672 = vadd.f32 0.0, %v671
        %v673 = vpop.f32.mrb[0].mxu0
        %v674 = vadd.f32 0.0, %v673
        %v675 = vpop.f32.mrb[0].mxu0
        %v676 = vadd.f32 0.0, %v675
        %v677 = vpop.f32.mrb[0].mxu0
        %v678 = vadd.f32 0.0, %v677
        %679 = vdwg.mxu0
        %v680 = vmax.f32 %v522, %v532
        %v681 = vmax.f32 %v526, %v536
        %v682 = vmax.f32 %v680, %v542
        %v683 = vmax.f32 %v681, %v546
        %v684 = vmax.f32 %v682, %v552
        %v685 = vmax.f32 %v683, %v556
        %v686 = vmax.f32 %v684, %v562
        %v687 = vmax.f32 %v685, %v566
        %v688 = vmax.f32 %v686, %v572
        %v689 = vmax.f32 %v687, %v576
        %v690 = vmax.f32 %v688, %v582
        %v691 = vmax.f32 %v689, %v586
        %v692 = vmax.f32 %v690, %v592
        %v693 = vmax.f32 %v691, %v596
        %v694 = vmax.f32 %v692, %v602
        %v695 = vmax.f32 %v693, %v606
        %v696 = vmax.f32 %v694, %v612
        %v697 = vmax.f32 %v695, %v616
        %v698 = vmax.f32 %v696, %v622
        %v699 = vmax.f32 %v697, %v626
        %v700 = vmax.f32 %v698, %v632
        %v701 = vmax.f32 %v699, %v636
        %v702 = vmax.f32 %v700, %v642
        %v703 = vmax.f32 %v701, %v646
        %v704 = vmax.f32 %v702, %v652
        %v705 = vmax.f32 %v703, %v656
        %v706 = vmax.f32 %v704, %v662
        %v707 = vmax.f32 %v705, %v666
        %v708 = vmax.f32 %v706, %v672
        %v709 = vmax.f32 %v707, %v676
        %v710 = vmax.f32 %v708, %v709
        %v711 = vrot.slane %v710, 4
        %v712 = vmax.f32 %v710, %v711
        %v713 = vrot.slane %v712, 2
        %v714 = vmax.f32 %v712, %v713
        %v715 = vrot.slane %v714, 1
        %v716 = vmax.f32 %v714, %v715
        %v717 = vmax.f32 %v524, %v534
        %v718 = vmax.f32 %v528, %v538
        %v719 = vmax.f32 %v717, %v544
        %v720 = vmax.f32 %v718, %v548
        %v721 = vmax.f32 %v719, %v554
        %v722 = vmax.f32 %v720, %v558
        %v723 = vmax.f32 %v721, %v564
        %v724 = vmax.f32 %v722, %v568
        %v725 = vmax.f32 %v723, %v574
        %v726 = vmax.f32 %v724, %v578
        %v727 = vmax.f32 %v725, %v584
        %v728 = vmax.f32 %v726, %v588
        %v729 = vmax.f32 %v727, %v594
        %v730 = vmax.f32 %v728, %v598
        %v731 = vmax.f32 %v729, %v604
        %v732 = vmax.f32 %v730, %v608
        %v733 = vmax.f32 %v731, %v614
        %v734 = vmax.f32 %v732, %v618
        %v735 = vmax.f32 %v733, %v624
        %v736 = vmax.f32 %v734, %v628
        %v737 = vmax.f32 %v735, %v634
        %v738 = vmax.f32 %v736, %v638
        %v739 = vmax.f32 %v737, %v644
        %v740 = vmax.f32 %v738, %v648
        %v741 = vmax.f32 %v739, %v654
        %v742 = vmax.f32 %v740, %v658
        %v743 = vmax.f32 %v741, %v664
        %v744 = vmax.f32 %v742, %v668
        %v745 = vmax.f32 %v743, %v674
        %v746 = vmax.f32 %v744, %v678
        %v747 = vmax.f32 %v745, %v746
        %v748 = vrot.slane %v747, 4
        %v749 = vmax.f32 %v747, %v748
        %v750 = vrot.slane %v749, 2
        %v751 = vmax.f32 %v749, %v750
        %v752 = vrot.slane %v751, 1
        %v753 = vmax.f32 %v751, %v752
        %v754 = vsub.f32 %v522, %v716
        %v755 = vsub.f32 %v524, %v753
        %v756 = vsub.f32 %v526, %v716
        %v757 = vsub.f32 %v528, %v753
        %v758 = vsub.f32 %v532, %v716
        %v759 = vsub.f32 %v534, %v753
        %v760 = vsub.f32 %v536, %v716
        %v761 = vsub.f32 %v538, %v753
        %v762 = vsub.f32 %v542, %v716
        %v763 = vsub.f32 %v544, %v753
        %v764 = vsub.f32 %v546, %v716
        %v765 = vsub.f32 %v548, %v753
        %v766 = vsub.f32 %v552, %v716
        %v767 = vsub.f32 %v554, %v753
        %v768 = vsub.f32 %v556, %v716
        %v769 = vsub.f32 %v558, %v753
        %v770 = vsub.f32 %v562, %v716
        %v771 = vsub.f32 %v564, %v753
        %v772 = vsub.f32 %v566, %v716
        %v773 = vsub.f32 %v568, %v753
        %v774 = vsub.f32 %v572, %v716
        %v775 = vsub.f32 %v574, %v753
        %v776 = vsub.f32 %v576, %v716
        %v777 = vsub.f32 %v578, %v753
        %v778 = vsub.f32 %v582, %v716
        %v779 = vsub.f32 %v584, %v753
        %v780 = vsub.f32 %v586, %v716
        %v781 = vsub.f32 %v588, %v753
        %v782 = vsub.f32 %v592, %v716
        %v783 = vsub.f32 %v594, %v753
        %v784 = vsub.f32 %v596, %v716
        %v785 = vsub.f32 %v598, %v753
        %v786 = vsub.f32 %v602, %v716
        %v787 = vsub.f32 %v604, %v753
        %v788 = vsub.f32 %v606, %v716
        %v789 = vsub.f32 %v608, %v753
        %v790 = vsub.f32 %v612, %v716
        %v791 = vsub.f32 %v614, %v753
        %v792 = vsub.f32 %v616, %v716
        %v793 = vsub.f32 %v618, %v753
        %v794 = vsub.f32 %v622, %v716
        %v795 = vsub.f32 %v624, %v753
        %v796 = vsub.f32 %v626, %v716
        %v797 = vsub.f32 %v628, %v753
        %v798 = vsub.f32 %v632, %v716
        %v799 = vsub.f32 %v634, %v753
        %v800 = vsub.f32 %v636, %v716
        %v801 = vsub.f32 %v638, %v753
        %v802 = vsub.f32 %v642, %v716
        %v803 = vsub.f32 %v644, %v753
        %v804 = vsub.f32 %v646, %v716
        %v805 = vsub.f32 %v648, %v753
        %v806 = vsub.f32 %v652, %v716
        %v807 = vsub.f32 %v654, %v753
        %v808 = vsub.f32 %v656, %v716
        %v809 = vsub.f32 %v658, %v753
        %v810 = vsub.f32 %v662, %v716
        %v811 = vsub.f32 %v664, %v753
        %v812 = vsub.f32 %v666, %v716
        %v813 = vsub.f32 %v668, %v753
        %v814 = vsub.f32 %v672, %v716
        %v815 = vsub.f32 %v674, %v753
        %v816 = vsub.f32 %v676, %v716
        %v817 = vsub.f32 %v678, %v753
        %v818 = vmul.f32 %v754, 1.442695
        %v819 = vpow.pop %v818
        %v820 = vmul.f32 %v755, 1.442695
        %v821 = vpow.pop %v820
        %v822 = vmul.f32 %v756, 1.442695
        %v823 = vpow.pop %v822
        %v824 = vmul.f32 %v757, 1.442695
        %v825 = vpow.pop %v824
        %v826 = vmul.f32 %v758, 1.442695
        %v827 = vpow.pop %v826
        %v828 = vmul.f32 %v759, 1.442695
        %v829 = vpow.pop %v828
        %v830 = vmul.f32 %v760, 1.442695
        %v831 = vpow.pop %v830
        %v832 = vmul.f32 %v761, 1.442695
        %v833 = vpow.pop %v832
        %v834 = vmul.f32 %v762, 1.442695
        %v835 = vpow.pop %v834
        %v836 = vmul.f32 %v763, 1.442695
        %v837 = vpow.pop %v836
        %v838 = vmul.f32 %v764, 1.442695
        %v839 = vpow.pop %v838
        %v840 = vmul.f32 %v765, 1.442695
        %v841 = vpow.pop %v840
        %v842 = vmul.f32 %v766, 1.442695
        %v843 = vpow.pop %v842
        %v844 = vmul.f32 %v767, 1.442695
        %v845 = vpow.pop %v844
        %v846 = vmul.f32 %v768, 1.442695
        %v847 = vpow.pop %v846
        %v848 = vmul.f32 %v769, 1.442695
        %v849 = vpow.pop %v848
        %v850 = vmul.f32 %v770, 1.442695
        %v851 = vpow.pop %v850
        %v852 = vmul.f32 %v771, 1.442695
        %v853 = vpow.pop %v852
        %v854 = vmul.f32 %v772, 1.442695
        %v855 = vpow.pop %v854
        %v856 = vmul.f32 %v773, 1.442695
        %v857 = vpow.pop %v856
        %v858 = vmul.f32 %v774, 1.442695
        %v859 = vpow.pop %v858
        %v860 = vmul.f32 %v775, 1.442695
        %v861 = vpow.pop %v860
        %v862 = vmul.f32 %v776, 1.442695
        %v863 = vpow.pop %v862
        %v864 = vmul.f32 %v777, 1.442695
        %v865 = vpow.pop %v864
        %v866 = vmul.f32 %v778, 1.442695
        %v867 = vpow.pop %v866
        %v868 = vmul.f32 %v779, 1.442695
        %v869 = vpow.pop %v868
        %v870 = vmul.f32 %v780, 1.442695
        %v871 = vpow.pop %v870
        %v872 = vmul.f32 %v781, 1.442695
        %v873 = vpow.pop %v872
        %v874 = vmul.f32 %v782, 1.442695
        %v875 = vpow.pop %v874
        %v876 = vmul.f32 %v783, 1.442695
        %v877 = vpow.pop %v876
        %v878 = vmul.f32 %v784, 1.442695
        %v879 = vpow.pop %v878
        %v880 = vmul.f32 %v785, 1.442695
        %v881 = vpow.pop %v880
        %v882 = vmul.f32 %v786, 1.442695
        %v883 = vpow.pop %v882
        %v884 = vmul.f32 %v787, 1.442695
        %v885 = vpow.pop %v884
        %v886 = vmul.f32 %v788, 1.442695
        %v887 = vpow.pop %v886
        %v888 = vmul.f32 %v789, 1.442695
        %v889 = vpow.pop %v888
        %v890 = vmul.f32 %v790, 1.442695
        %v891 = vpow.pop %v890
        %v892 = vmul.f32 %v791, 1.442695
        %v893 = vpow.pop %v892
        %v894 = vmul.f32 %v792, 1.442695
        %v895 = vpow.pop %v894
        %v896 = vmul.f32 %v793, 1.442695
        %v897 = vpow.pop %v896
        %v898 = vmul.f32 %v794, 1.442695
        %v899 = vpow.pop %v898
        %v900 = vmul.f32 %v795, 1.442695
        %v901 = vpow.pop %v900
        %v902 = vmul.f32 %v796, 1.442695
        %v903 = vpow.pop %v902
        %v904 = vmul.f32 %v797, 1.442695
        %v905 = vpow.pop %v904
        %v906 = vmul.f32 %v798, 1.442695
        %v907 = vpow.pop %v906
        %v908 = vmul.f32 %v799, 1.442695
        %v909 = vpow.pop %v908
        %v910 = vmul.f32 %v800, 1.442695
        %v911 = vpow.pop %v910
        %v912 = vmul.f32 %v801, 1.442695
        %v913 = vpow.pop %v912
        %v914 = vmul.f32 %v802, 1.442695
        %v915 = vpow.pop %v914
        %v916 = vmul.f32 %v803, 1.442695
        %v917 = vpow.pop %v916
        %v918 = vmul.f32 %v804, 1.442695
        %v919 = vpow.pop %v918
        %v920 = vmul.f32 %v805, 1.442695
        %v921 = vpow.pop %v920
        %v922 = vmul.f32 %v806, 1.442695
        %v923 = vpow.pop %v922
        %v924 = vmul.f32 %v807, 1.442695
        %v925 = vpow.pop %v924
        %v926 = vmul.f32 %v808, 1.442695
        %v927 = vpow.pop %v926
        %v928 = vmul.f32 %v809, 1.442695
        %v929 = vpow.pop %v928
        %v930 = vmul.f32 %v810, 1.442695
        %v931 = vpow.pop %v930
        %v932 = vmul.f32 %v811, 1.442695
        %v933 = vpow.pop %v932
        %v934 = vmul.f32 %v812, 1.442695
        %v935 = vpow.pop %v934
        %v936 = vmul.f32 %v813, 1.442695
        %v937 = vpow.pop %v936
        %v938 = vmul.f32 %v814, 1.442695
        %v939 = vpow.pop %v938
        %v940 = vmul.f32 %v815, 1.442695
        %v941 = vpow.pop %v940
        %v942 = vmul.f32 %v816, 1.442695
        %v943 = vpow.pop %v942
        %v944 = vmul.f32 %v817, 1.442695
        %v945 = vpow.pop %v944
        %v946 = vadd.f32 %v819, %v823
        %v947 = vadd.f32 %v946, %v827
        %v948 = vadd.f32 %v947, %v831
        %v949 = vadd.f32 %v948, %v835
        %v950 = vadd.f32 %v949, %v839
        %v951 = vadd.f32 %v950, %v843
        %v952 = vadd.f32 %v951, %v847
        %v953 = vadd.f32 %v952, %v851
        %v954 = vadd.f32 %v953, %v855
        %v955 = vadd.f32 %v954, %v859
        %v956 = vadd.f32 %v955, %v863
        %v957 = vadd.f32 %v956, %v867
        %v958 = vadd.f32 %v957, %v871
        %v959 = vadd.f32 %v958, %v875
        %v960 = vadd.f32 %v959, %v879
        %v961 = vadd.f32 %v960, %v883
        %v962 = vadd.f32 %v961, %v887
        %v963 = vadd.f32 %v962, %v891
        %v964 = vadd.f32 %v963, %v895
        %v965 = vadd.f32 %v964, %v899
        %v966 = vadd.f32 %v965, %v903
        %v967 = vadd.f32 %v966, %v907
        %v968 = vadd.f32 %v967, %v911
        %v969 = vadd.f32 %v968, %v915
        %v970 = vadd.f32 %v969, %v919
        %v971 = vadd.f32 %v970, %v923
        %v972 = vadd.f32 %v971, %v927
        %v973 = vadd.f32 %v972, %v931
        %v974 = vadd.f32 %v973, %v935
        %v975 = vadd.f32 %v974, %v939
        %v976 = vadd.f32 %v975, %v943
        %v977 = vrot.slane %v976, 4
        %v978 = vadd.f32 %v976, %v977
        %v979 = vrot.slane %v978, 2
        %v980 = vadd.f32 %v978, %v979
        %v981 = vrot.slane %v980, 1
        %v982 = vadd.f32 %v980, %v981
        %v983 = vadd.f32 %v821, %v825
        %v984 = vadd.f32 %v983, %v829
        %v985 = vadd.f32 %v984, %v833
        %v986 = vadd.f32 %v985, %v837
        %v987 = vadd.f32 %v986, %v841
        %v988 = vadd.f32 %v987, %v845
        %v989 = vadd.f32 %v988, %v849
        %v990 = vadd.f32 %v989, %v853
        %v991 = vadd.f32 %v990, %v857
        %v992 = vadd.f32 %v991, %v861
        %v993 = vadd.f32 %v992, %v865
        %v994 = vadd.f32 %v993, %v869
        %v995 = vadd.f32 %v994, %v873
        %v996 = vadd.f32 %v995, %v877
        %v997 = vadd.f32 %v996, %v881
        %v998 = vadd.f32 %v997, %v885
        %v999 = vadd.f32 %v998, %v889
        %v1000 = vadd.f32 %v999, %v893
        %v1001 = vadd.f32 %v1000, %v897
        %v1002 = vadd.f32 %v1001, %v901
        %v1003 = vadd.f32 %v1002, %v905
        %v1004 = vadd.f32 %v1003, %v909
        %v1005 = vadd.f32 %v1004, %v913
        %v1006 = vadd.f32 %v1005, %v917
        %v1007 = vadd.f32 %v1006, %v921
        %v1008 = vadd.f32 %v1007, %v925
        %v1009 = vadd.f32 %v1008, %v929
        %v1010 = vadd.f32 %v1009, %v933
        %v1011 = vadd.f32 %v1010, %v937
        %v1012 = vadd.f32 %v1011, %v941
        %v1013 = vadd.f32 %v1012, %v945
        %v1014 = vrot.slane %v1013, 4
        %v1015 = vadd.f32 %v1013, %v1014
        %v1016 = vrot.slane %v1015, 2
        %v1017 = vadd.f32 %v1015, %v1016
        %v1018 = vrot.slane %v1017, 1
        %v1019 = vadd.f32 %v1017, %v1018
        %v1020 = vpack.c.bf16 %v823, %v819
        %v1021 = vpack.c.bf16 %v825, %v821
        %v1022 = vpack.c.bf16 %v831, %v827
        %v1023 = vpack.c.bf16 %v833, %v829
        %v1024 = vpack.c.bf16 %v839, %v835
        %v1025 = vpack.c.bf16 %v841, %v837
        %v1026 = vpack.c.bf16 %v847, %v843
        %v1027 = vpack.c.bf16 %v849, %v845
        %v1028 = vpack.c.bf16 %v855, %v851
        %v1029 = vpack.c.bf16 %v857, %v853
        %v1030 = vpack.c.bf16 %v863, %v859
        %v1031 = vpack.c.bf16 %v865, %v861
        %v1032 = vpack.c.bf16 %v871, %v867
        %v1033 = vpack.c.bf16 %v873, %v869
        %v1034 = vpack.c.bf16 %v879, %v875
        %v1035 = vpack.c.bf16 %v881, %v877
        %v1036 = vpack.c.bf16 %v887, %v883
        %v1037 = vpack.c.bf16 %v889, %v885
        %v1038 = vpack.c.bf16 %v895, %v891
        %v1039 = vpack.c.bf16 %v897, %v893
        %v1040 = vpack.c.bf16 %v903, %v899
        %v1041 = vpack.c.bf16 %v905, %v901
        %v1042 = vpack.c.bf16 %v911, %v907
        %v1043 = vpack.c.bf16 %v913, %v909
        %v1044 = vpack.c.bf16 %v919, %v915
        %v1045 = vpack.c.bf16 %v921, %v917
        %v1046 = vpack.c.bf16 %v927, %v923
        %v1047 = vpack.c.bf16 %v929, %v925
        %v1048 = vpack.c.bf16 %v935, %v931
        %v1049 = vpack.c.bf16 %v937, %v933
        %v1050 = vpack.c.bf16 %v943, %v939
        %v1051 = vpack.c.bf16 %v945, %v941
        %1052 = vmatprep.subr.bf16.mxu0 %v1021
        %1053 = vmatpush1.bf16.msra.mxu0 %v1020
        %1054 = vmatprep.subr.bf16.mxu0 %v1023
        %1055 = vmatpush1.bf16.msra.mxu0 %v1022
        %1056 = vmatprep.subr.bf16.mxu0 %v1025
        %1057 = vmatpush1.bf16.msra.mxu0 %v1024
        %1058 = vmatprep.subr.bf16.mxu0 %v1027
        %1059 = vmatpush1.bf16.msra.mxu0 %v1026
        %1060 = vmatprep.subr.bf16.mxu0 %v1029
        %1061 = vmatpush1.bf16.msra.mxu0 %v1028
        %1062 = vmatprep.subr.bf16.mxu0 %v1031
        %1063 = vmatpush1.bf16.msra.mxu0 %v1030
        %1064 = vmatprep.subr.bf16.mxu0 %v1033
        %1065 = vmatpush1.bf16.msra.mxu0 %v1032
        %1066 = vmatprep.subr.bf16.mxu0 %v1035
        %1067 = vmatpush1.bf16.msra.mxu0 %v1034
        %1068 = vmatprep.subr.bf16.mxu0 %v1037
        %1069 = vmatpush1.bf16.msra.mxu0 %v1036
        %1070 = vmatprep.subr.bf16.mxu0 %v1039
        %1071 = vmatpush1.bf16.msra.mxu0 %v1038
        %1072 = vmatprep.subr.bf16.mxu0 %v1041
        %1073 = vmatpush1.bf16.msra.mxu0 %v1040
        %1074 = vmatprep.subr.bf16.mxu0 %v1043
        %1075 = vmatpush1.bf16.msra.mxu0 %v1042
        %1076 = vmatprep.subr.bf16.mxu0 %v1045
        %1077 = vmatpush1.bf16.msra.mxu0 %v1044
        %1078 = vmatprep.subr.bf16.mxu0 %v1047
        %1079 = vmatpush1.bf16.msra.mxu0 %v1046
        %1080 = vmatprep.subr.bf16.mxu0 %v1049
        %1081 = vmatpush1.bf16.msra.mxu0 %v1048
        %1082 = vmatprep.subr.bf16.mxu0 %v1051
        %1083 = vmatpush1.bf16.msra.mxu0 %v1050
        %1084 = vmatprep.mubr.bf16.mxu0 %v398
        %1085 = vmatmul.mubr.bf16.gmra.mrb[0].mxu0 %v397
        %v1086 = vpop.f32.mrb[0].mxu0
        %v1087 = vadd.f32 0.0, %v1086
        %v1088 = vpop.f32.mrb[0].mxu0
        %v1089 = vadd.f32 0.0, %v1088
        %v1090 = vpop.f32.mrb[0].mxu0
        %v1091 = vpop.f32.mrb[0].mxu0
        %1092 = vdwg.mxu0
        %v1093 = vrcp.pop %v982
        %v1094 = vrcp.pop %v1019
        %v1095 = vmul.f32 %v1087, %v1093
        %v1096 = vmul.f32 %v1089, %v1094
        %1097 = vst [vmem:[#allocation2] sm:$0xf] %v1095
        %1098 = vst [vmem:[#allocation2 + $0x8] sm:$0xf] %v1096
        %v1101 = vrot.slane %v395, 2
        %v1102 = vrot.slane %v396, 2
        %1105 = vxpose.xlu0.c.b16.start [1/8] %v1101, 128
        %1106 = vxpose.xlu0.c.b16.cont [2/8] 0, 128
        %1107 = vxpose.xlu0.c.b16.cont [3/8] 0, 128
        %1108 = vxpose.xlu0.c.b16.cont [4/8] 0, 128
        %1109 = vxpose.xlu0.c.b16.cont [5/8] 0, 128
        %1110 = vxpose.xlu0.c.b16.cont [6/8] 0, 128
        %1111 = vxpose.xlu0.c.b16.cont [7/8] 0, 128
        %1112 = vxpose.xlu0.c.b16.end [8/8] 0, 128
        %v1113 = vpop.trf.xlu0
        %v1114 = vpop.trf.xlu0
        %v1115 = vpop.trf.xlu0
        %v1116 = vpop.trf.xlu0
        %v1117 = vpop.trf.xlu0
        %v1118 = vpop.trf.xlu0
        %v1119 = vpop.trf.xlu0
        %v1120 = vpop.trf.xlu0
        %1121 = vxpose.xlu0.c.b16.start [1/8] %v1102, 128
        %1122 = vxpose.xlu0.c.b16.cont [2/8] 0, 128
        %1123 = vxpose.xlu0.c.b16.cont [3/8] 0, 128
        %1124 = vxpose.xlu0.c.b16.cont [4/8] 0, 128
        %1125 = vxpose.xlu0.c.b16.cont [5/8] 0, 128
        %1126 = vxpose.xlu0.c.b16.cont [6/8] 0, 128
        %1127 = vxpose.xlu0.c.b16.cont [7/8] 0, 128
        %1128 = vxpose.xlu0.c.b16.end [8/8] 0, 128
        %v1129 = vpop.trf.xlu0
        %v1130 = vpop.trf.xlu0
        %v1131 = vpop.trf.xlu0
        %v1132 = vpop.trf.xlu0
        %v1133 = vpop.trf.xlu0
        %v1134 = vpop.trf.xlu0
        %v1135 = vpop.trf.xlu0
        %v1136 = vpop.trf.xlu0
        %v1139 = vrot.slane %v393, 2
        %v1140 = vrot.slane %v394, 2
        %v1142 = vsel %vm431, %v1113, 0
        %v1145 = vsel %vm431, %v1114, 0
        %v1148 = vsel %vm431, %v1115, 0
        %v1151 = vsel %vm431, %v1116, 0
        %v1154 = vsel %vm431, %v1117, 0
        %v1157 = vsel %vm431, %v1118, 0
        %v1160 = vsel %vm431, %v1119, 0
        %v1163 = vsel %vm431, %v1120, 0
        %v1166 = vsel %vm431, %v1129, 0
        %v1169 = vsel %vm431, %v1130, 0
        %v1172 = vsel %vm431, %v1131, 0
        %v1175 = vsel %vm431, %v1132, 0
        %v1178 = vsel %vm431, %v1133, 0
        %v1181 = vsel %vm431, %v1134, 0
        %v1184 = vsel %vm431, %v1135, 0
        %v1187 = vsel %vm431, %v1136, 0
        %v1190 = vsel %vm480, %v1139, 0
        %v1193 = vsel %vm480, %v1140, 0
        %1195 = vmatprep.subr.bf16.mxu0 %v1193
        %1196 = vmatpush1.bf16.msra.mxu0 %v1190
        %1197 = vmatprep.subr.bf16.mxu0 0
        %1198 = vmatpush1.bf16.msra.mxu0 0
        %1199 = vmatprep.subr.bf16.mxu0 0
        %1200 = vmatpush1.bf16.msra.mxu0 0
        %1201 = vmatprep.subr.bf16.mxu0 0
        %1202 = vmatpush1.bf16.msra.mxu0 0
        %1203 = vmatprep.subr.bf16.mxu0 0
        %1204 = vmatpush1.bf16.msra.mxu0 0
        %1205 = vmatprep.subr.bf16.mxu0 0
        %1206 = vmatpush1.bf16.msra.mxu0 0
        %1207 = vmatprep.subr.bf16.mxu0 0
        %1208 = vmatpush1.bf16.msra.mxu0 0
        %1209 = vmatprep.subr.bf16.mxu0 0
        %1210 = vmatpush1.bf16.msra.mxu0 0
        %1211 = vmatprep.subr.bf16.mxu0 0
        %1212 = vmatpush1.bf16.msra.mxu0 0
        %1213 = vmatprep.subr.bf16.mxu0 0
        %1214 = vmatpush1.bf16.msra.mxu0 0
        %1215 = vmatprep.subr.bf16.mxu0 0
        %1216 = vmatpush1.bf16.msra.mxu0 0
        %1217 = vmatprep.subr.bf16.mxu0 0
        %1218 = vmatpush1.bf16.msra.mxu0 0
        %1219 = vmatprep.subr.bf16.mxu0 0
        %1220 = vmatpush1.bf16.msra.mxu0 0
        %1221 = vmatprep.subr.bf16.mxu0 0
        %1222 = vmatpush1.bf16.msra.mxu0 0
        %1223 = vmatprep.subr.bf16.mxu0 0
        %1224 = vmatpush1.bf16.msra.mxu0 0
        %1225 = vmatprep.subr.bf16.mxu0 0
        %1226 = vmatpush1.bf16.msra.mxu0 0
        %1227 = vmatprep.mubr.bf16.mxu0 0
        %1228 = vmatmul.mubr.bf16.gmra.mrb[0].mxu0 %v1142
        %v1229 = vpop.f32.mrb[0].mxu0
        %v1230 = vadd.f32 0.0, %v1229
        %v1231 = vpop.f32.mrb[0].mxu0
        %v1232 = vadd.f32 0.0, %v1231
        %v1233 = vpop.f32.mrb[0].mxu0
        %v1234 = vadd.f32 0.0, %v1233
        %v1235 = vpop.f32.mrb[0].mxu0
        %v1236 = vadd.f32 0.0, %v1235
        %1237 = vmatprep.mubr.bf16.mxu0 0
        %1238 = vmatmul.mubr.bf16.gmra.mrb[0].mxu0 %v1145
        %v1239 = vpop.f32.mrb[0].mxu0
        %v1240 = vadd.f32 0.0, %v1239
        %v1241 = vpop.f32.mrb[0].mxu0
        %v1242 = vadd.f32 0.0, %v1241
        %v1243 = vpop.f32.mrb[0].mxu0
        %v1244 = vadd.f32 0.0, %v1243
        %v1245 = vpop.f32.mrb[0].mxu0
        %v1246 = vadd.f32 0.0, %v1245
        %1247 = vmatprep.mubr.bf16.mxu0 0
        %1248 = vmatmul.mubr.bf16.gmra.mrb[0].mxu0 %v1148
        %v1249 = vpop.f32.mrb[0].mxu0
        %v1250 = vadd.f32 0.0, %v1249
        %v1251 = vpop.f32.mrb[0].mxu0
        %v1252 = vadd.f32 0.0, %v1251
        %v1253 = vpop.f32.mrb[0].mxu0
        %v1254 = vadd.f32 0.0, %v1253
        %v1255 = vpop.f32.mrb[0].mxu0
        %v1256 = vadd.f32 0.0, %v1255
        %1257 = vmatprep.mubr.bf16.mxu0 0
        %1258 = vmatmul.mubr.bf16.gmra.mrb[0].mxu0 %v1151
        %v1259 = vpop.f32.mrb[0].mxu0
        %v1260 = vadd.f32 0.0, %v1259
        %v1261 = vpop.f32.mrb[0].mxu0
        %v1262 = vadd.f32 0.0, %v1261
        %v1263 = vpop.f32.mrb[0].mxu0
        %v1264 = vadd.f32 0.0, %v1263
        %v1265 = vpop.f32.mrb[0].mxu0
        %v1266 = vadd.f32 0.0, %v1265
        %1267 = vmatprep.mubr.bf16.mxu0 0
        %1268 = vmatmul.mubr.bf16.gmra.mrb[0].mxu0 %v1154
        %v1269 = vpop.f32.mrb[0].mxu0
        %v1270 = vadd.f32 0.0, %v1269
        %v1271 = vpop.f32.mrb[0].mxu0
        %v1272 = vadd.f32 0.0, %v1271
        %v1273 = vpop.f32.mrb[0].mxu0
        %v1274 = vadd.f32 0.0, %v1273
        %v1275 = vpop.f32.mrb[0].mxu0
        %v1276 = vadd.f32 0.0, %v1275
        %1277 = vmatprep.mubr.bf16.mxu0 0
        %1278 = vmatmul.mubr.bf16.gmra.mrb[0].mxu0 %v1157
        %v1279 = vpop.f32.mrb[0].mxu0
        %v1280 = vadd.f32 0.0, %v1279
        %v1281 = vpop.f32.mrb[0].mxu0
        %v1282 = vadd.f32 0.0, %v1281
        %v1283 = vpop.f32.mrb[0].mxu0
        %v1284 = vadd.f32 0.0, %v1283
        %v1285 = vpop.f32.mrb[0].mxu0
        %v1286 = vadd.f32 0.0, %v1285
        %1287 = vmatprep.mubr.bf16.mxu0 0
        %1288 = vmatmul.mubr.bf16.gmra.mrb[0].mxu0 %v1160
        %v1289 = vpop.f32.mrb[0].mxu0
        %v1290 = vadd.f32 0.0, %v1289
        %v1291 = vpop.f32.mrb[0].mxu0
        %v1292 = vadd.f32 0.0, %v1291
        %v1293 = vpop.f32.mrb[0].mxu0
        %v1294 = vadd.f32 0.0, %v1293
        %v1295 = vpop.f32.mrb[0].mxu0
        %v1296 = vadd.f32 0.0, %v1295
        %1297 = vmatprep.mubr.bf16.mxu0 0
        %1298 = vmatmul.mubr.bf16.gmra.mrb[0].mxu0 %v1163
        %v1299 = vpop.f32.mrb[0].mxu0
        %v1300 = vadd.f32 0.0, %v1299
        %v1301 = vpop.f32.mrb[0].mxu0
        %v1302 = vadd.f32 0.0, %v1301
        %v1303 = vpop.f32.mrb[0].mxu0
        %v1304 = vadd.f32 0.0, %v1303
        %v1305 = vpop.f32.mrb[0].mxu0
        %v1306 = vadd.f32 0.0, %v1305
        %1307 = vmatprep.mubr.bf16.mxu0 0
        %1308 = vmatmul.mubr.bf16.gmra.mrb[0].mxu0 %v1166
        %v1309 = vpop.f32.mrb[0].mxu0
        %v1310 = vadd.f32 0.0, %v1309
        %v1311 = vpop.f32.mrb[0].mxu0
        %v1312 = vadd.f32 0.0, %v1311
        %v1313 = vpop.f32.mrb[0].mxu0
        %v1314 = vadd.f32 0.0, %v1313
        %v1315 = vpop.f32.mrb[0].mxu0
        %v1316 = vadd.f32 0.0, %v1315
        %1317 = vmatprep.mubr.bf16.mxu0 0
        %1318 = vmatmul.mubr.bf16.gmra.mrb[0].mxu0 %v1169
        %v1319 = vpop.f32.mrb[0].mxu0
        %v1320 = vadd.f32 0.0, %v1319
        %v1321 = vpop.f32.mrb[0].mxu0
        %v1322 = vadd.f32 0.0, %v1321
        %v1323 = vpop.f32.mrb[0].mxu0
        %v1324 = vadd.f32 0.0, %v1323
        %v1325 = vpop.f32.mrb[0].mxu0
        %v1326 = vadd.f32 0.0, %v1325
        %1327 = vmatprep.mubr.bf16.mxu0 0
        %1328 = vmatmul.mubr.bf16.gmra.mrb[0].mxu0 %v1172
        %v1329 = vpop.f32.mrb[0].mxu0
        %v1330 = vadd.f32 0.0, %v1329
        %v1331 = vpop.f32.mrb[0].mxu0
        %v1332 = vadd.f32 0.0, %v1331
        %v1333 = vpop.f32.mrb[0].mxu0
        %v1334 = vadd.f32 0.0, %v1333
        %v1335 = vpop.f32.mrb[0].mxu0
        %v1336 = vadd.f32 0.0, %v1335
        %1337 = vmatprep.mubr.bf16.mxu0 0
        %1338 = vmatmul.mubr.bf16.gmra.mrb[0].mxu0 %v1175
        %v1339 = vpop.f32.mrb[0].mxu0
        %v1340 = vadd.f32 0.0, %v1339
        %v1341 = vpop.f32.mrb[0].mxu0
        %v1342 = vadd.f32 0.0, %v1341
        %v1343 = vpop.f32.mrb[0].mxu0
        %v1344 = vadd.f32 0.0, %v1343
        %v1345 = vpop.f32.mrb[0].mxu0
        %v1346 = vadd.f32 0.0, %v1345
        %1347 = vmatprep.mubr.bf16.mxu0 0
        %1348 = vmatmul.mubr.bf16.gmra.mrb[0].mxu0 %v1178
        %v1349 = vpop.f32.mrb[0].mxu0
        %v1350 = vadd.f32 0.0, %v1349
        %v1351 = vpop.f32.mrb[0].mxu0
        %v1352 = vadd.f32 0.0, %v1351
        %v1353 = vpop.f32.mrb[0].mxu0
        %v1354 = vadd.f32 0.0, %v1353
        %v1355 = vpop.f32.mrb[0].mxu0
        %v1356 = vadd.f32 0.0, %v1355
        %1357 = vmatprep.mubr.bf16.mxu0 0
        %1358 = vmatmul.mubr.bf16.gmra.mrb[0].mxu0 %v1181
        %v1359 = vpop.f32.mrb[0].mxu0
        %v1360 = vadd.f32 0.0, %v1359
        %v1361 = vpop.f32.mrb[0].mxu0
        %v1362 = vadd.f32 0.0, %v1361
        %v1363 = vpop.f32.mrb[0].mxu0
        %v1364 = vadd.f32 0.0, %v1363
        %v1365 = vpop.f32.mrb[0].mxu0
        %v1366 = vadd.f32 0.0, %v1365
        %1367 = vmatprep.mubr.bf16.mxu0 0
        %1368 = vmatmul.mubr.bf16.gmra.mrb[0].mxu0 %v1184
        %v1369 = vpop.f32.mrb[0].mxu0
        %v1370 = vadd.f32 0.0, %v1369
        %v1371 = vpop.f32.mrb[0].mxu0
        %v1372 = vadd.f32 0.0, %v1371
        %v1373 = vpop.f32.mrb[0].mxu0
        %v1374 = vadd.f32 0.0, %v1373
        %v1375 = vpop.f32.mrb[0].mxu0
        %v1376 = vadd.f32 0.0, %v1375
        %1377 = vmatprep.mubr.bf16.mxu0 0
        %1378 = vmatmul.mubr.bf16.gmra.mrb[0].mxu0 %v1187
        %v1379 = vpop.f32.mrb[0].mxu0
        %v1380 = vadd.f32 0.0, %v1379
        %v1381 = vpop.f32.mrb[0].mxu0
        %v1382 = vadd.f32 0.0, %v1381
        %v1383 = vpop.f32.mrb[0].mxu0
        %v1384 = vadd.f32 0.0, %v1383
        %v1385 = vpop.f32.mrb[0].mxu0
        %v1386 = vadd.f32 0.0, %v1385
        %1387 = vdwg.mxu0
        %v1388 = vmax.f32 %v1230, %v1240
        %v1389 = vmax.f32 %v1234, %v1244
        %v1390 = vmax.f32 %v1388, %v1250
        %v1391 = vmax.f32 %v1389, %v1254
        %v1392 = vmax.f32 %v1390, %v1260
        %v1393 = vmax.f32 %v1391, %v1264
        %v1394 = vmax.f32 %v1392, %v1270
        %v1395 = vmax.f32 %v1393, %v1274
        %v1396 = vmax.f32 %v1394, %v1280
        %v1397 = vmax.f32 %v1395, %v1284
        %v1398 = vmax.f32 %v1396, %v1290
        %v1399 = vmax.f32 %v1397, %v1294
        %v1400 = vmax.f32 %v1398, %v1300
        %v1401 = vmax.f32 %v1399, %v1304
        %v1402 = vmax.f32 %v1400, %v1310
        %v1403 = vmax.f32 %v1401, %v1314
        %v1404 = vmax.f32 %v1402, %v1320
        %v1405 = vmax.f32 %v1403, %v1324
        %v1406 = vmax.f32 %v1404, %v1330
        %v1407 = vmax.f32 %v1405, %v1334
        %v1408 = vmax.f32 %v1406, %v1340
        %v1409 = vmax.f32 %v1407, %v1344
        %v1410 = vmax.f32 %v1408, %v1350
        %v1411 = vmax.f32 %v1409, %v1354
        %v1412 = vmax.f32 %v1410, %v1360
        %v1413 = vmax.f32 %v1411, %v1364
        %v1414 = vmax.f32 %v1412, %v1370
        %v1415 = vmax.f32 %v1413, %v1374
        %v1416 = vmax.f32 %v1414, %v1380
        %v1417 = vmax.f32 %v1415, %v1384
        %v1418 = vmax.f32 %v1416, %v1417
        %v1419 = vrot.slane %v1418, 4
        %v1420 = vmax.f32 %v1418, %v1419
        %v1421 = vrot.slane %v1420, 2
        %v1422 = vmax.f32 %v1420, %v1421
        %v1423 = vrot.slane %v1422, 1
        %v1424 = vmax.f32 %v1422, %v1423
        %v1425 = vmax.f32 %v1232, %v1242
        %v1426 = vmax.f32 %v1236, %v1246
        %v1427 = vmax.f32 %v1425, %v1252
        %v1428 = vmax.f32 %v1426, %v1256
        %v1429 = vmax.f32 %v1427, %v1262
        %v1430 = vmax.f32 %v1428, %v1266
        %v1431 = vmax.f32 %v1429, %v1272
        %v1432 = vmax.f32 %v1430, %v1276
        %v1433 = vmax.f32 %v1431, %v1282
        %v1434 = vmax.f32 %v1432, %v1286
        %v1435 = vmax.f32 %v1433, %v1292
        %v1436 = vmax.f32 %v1434, %v1296
        %v1437 = vmax.f32 %v1435, %v1302
        %v1438 = vmax.f32 %v1436, %v1306
        %v1439 = vmax.f32 %v1437, %v1312
        %v1440 = vmax.f32 %v1438, %v1316
        %v1441 = vmax.f32 %v1439, %v1322
        %v1442 = vmax.f32 %v1440, %v1326
        %v1443 = vmax.f32 %v1441, %v1332
        %v1444 = vmax.f32 %v1442, %v1336
        %v1445 = vmax.f32 %v1443, %v1342
        %v1446 = vmax.f32 %v1444, %v1346
        %v1447 = vmax.f32 %v1445, %v1352
        %v1448 = vmax.f32 %v1446, %v1356
        %v1449 = vmax.f32 %v1447, %v1362
        %v1450 = vmax.f32 %v1448, %v1366
        %v1451 = vmax.f32 %v1449, %v1372
        %v1452 = vmax.f32 %v1450, %v1376
        %v1453 = vmax.f32 %v1451, %v1382
        %v1454 = vmax.f32 %v1452, %v1386
        %v1455 = vmax.f32 %v1453, %v1454
        %v1456 = vrot.slane %v1455, 4
        %v1457 = vmax.f32 %v1455, %v1456
        %v1458 = vrot.slane %v1457, 2
        %v1459 = vmax.f32 %v1457, %v1458
        %v1460 = vrot.slane %v1459, 1
        %v1461 = vmax.f32 %v1459, %v1460
        %v1462 = vsub.f32 %v1230, %v1424
        %v1463 = vsub.f32 %v1232, %v1461
        %v1464 = vsub.f32 %v1234, %v1424
        %v1465 = vsub.f32 %v1236, %v1461
        %v1466 = vsub.f32 %v1240, %v1424
        %v1467 = vsub.f32 %v1242, %v1461
        %v1468 = vsub.f32 %v1244, %v1424
        %v1469 = vsub.f32 %v1246, %v1461
        %v1470 = vsub.f32 %v1250, %v1424
        %v1471 = vsub.f32 %v1252, %v1461
        %v1472 = vsub.f32 %v1254, %v1424
        %v1473 = vsub.f32 %v1256, %v1461
        %v1474 = vsub.f32 %v1260, %v1424
        %v1475 = vsub.f32 %v1262, %v1461
        %v1476 = vsub.f32 %v1264, %v1424
        %v1477 = vsub.f32 %v1266, %v1461
        %v1478 = vsub.f32 %v1270, %v1424
        %v1479 = vsub.f32 %v1272, %v1461
        %v1480 = vsub.f32 %v1274, %v1424
        %v1481 = vsub.f32 %v1276, %v1461
        %v1482 = vsub.f32 %v1280, %v1424
        %v1483 = vsub.f32 %v1282, %v1461
        %v1484 = vsub.f32 %v1284, %v1424
        %v1485 = vsub.f32 %v1286, %v1461
        %v1486 = vsub.f32 %v1290, %v1424
        %v1487 = vsub.f32 %v1292, %v1461
        %v1488 = vsub.f32 %v1294, %v1424
        %v1489 = vsub.f32 %v1296, %v1461
        %v1490 = vsub.f32 %v1300, %v1424
        %v1491 = vsub.f32 %v1302, %v1461
        %v1492 = vsub.f32 %v1304, %v1424
        %v1493 = vsub.f32 %v1306, %v1461
        %v1494 = vsub.f32 %v1310, %v1424
        %v1495 = vsub.f32 %v1312, %v1461
        %v1496 = vsub.f32 %v1314, %v1424
        %v1497 = vsub.f32 %v1316, %v1461
        %v1498 = vsub.f32 %v1320, %v1424
        %v1499 = vsub.f32 %v1322, %v1461
        %v1500 = vsub.f32 %v1324, %v1424
        %v1501 = vsub.f32 %v1326, %v1461
        %v1502 = vsub.f32 %v1330, %v1424
        %v1503 = vsub.f32 %v1332, %v1461
        %v1504 = vsub.f32 %v1334, %v1424
        %v1505 = vsub.f32 %v1336, %v1461
        %v1506 = vsub.f32 %v1340, %v1424
        %v1507 = vsub.f32 %v1342, %v1461
        %v1508 = vsub.f32 %v1344, %v1424
        %v1509 = vsub.f32 %v1346, %v1461
        %v1510 = vsub.f32 %v1350, %v1424
        %v1511 = vsub.f32 %v1352, %v1461
        %v1512 = vsub.f32 %v1354, %v1424
        %v1513 = vsub.f32 %v1356, %v1461
        %v1514 = vsub.f32 %v1360, %v1424
        %v1515 = vsub.f32 %v1362, %v1461
        %v1516 = vsub.f32 %v1364, %v1424
        %v1517 = vsub.f32 %v1366, %v1461
        %v1518 = vsub.f32 %v1370, %v1424
        %v1519 = vsub.f32 %v1372, %v1461
        %v1520 = vsub.f32 %v1374, %v1424
        %v1521 = vsub.f32 %v1376, %v1461
        %v1522 = vsub.f32 %v1380, %v1424
        %v1523 = vsub.f32 %v1382, %v1461
        %v1524 = vsub.f32 %v1384, %v1424
        %v1525 = vsub.f32 %v1386, %v1461
        %v1526 = vmul.f32 %v1462, 1.442695
        %v1527 = vpow.pop %v1526
        %v1528 = vmul.f32 %v1463, 1.442695
        %v1529 = vpow.pop %v1528
        %v1530 = vmul.f32 %v1464, 1.442695
        %v1531 = vpow.pop %v1530
        %v1532 = vmul.f32 %v1465, 1.442695
        %v1533 = vpow.pop %v1532
        %v1534 = vmul.f32 %v1466, 1.442695
        %v1535 = vpow.pop %v1534
        %v1536 = vmul.f32 %v1467, 1.442695
        %v1537 = vpow.pop %v1536
        %v1538 = vmul.f32 %v1468, 1.442695
        %v1539 = vpow.pop %v1538
        %v1540 = vmul.f32 %v1469, 1.442695
        %v1541 = vpow.pop %v1540
        %v1542 = vmul.f32 %v1470, 1.442695
        %v1543 = vpow.pop %v1542
        %v1544 = vmul.f32 %v1471, 1.442695
        %v1545 = vpow.pop %v1544
        %v1546 = vmul.f32 %v1472, 1.442695
        %v1547 = vpow.pop %v1546
        %v1548 = vmul.f32 %v1473, 1.442695
        %v1549 = vpow.pop %v1548
        %v1550 = vmul.f32 %v1474, 1.442695
        %v1551 = vpow.pop %v1550
        %v1552 = vmul.f32 %v1475, 1.442695
        %v1553 = vpow.pop %v1552
        %v1554 = vmul.f32 %v1476, 1.442695
        %v1555 = vpow.pop %v1554
        %v1556 = vmul.f32 %v1477, 1.442695
        %v1557 = vpow.pop %v1556
        %v1558 = vmul.f32 %v1478, 1.442695
        %v1559 = vpow.pop %v1558
        %v1560 = vmul.f32 %v1479, 1.442695
        %v1561 = vpow.pop %v1560
        %v1562 = vmul.f32 %v1480, 1.442695
        %v1563 = vpow.pop %v1562
        %v1564 = vmul.f32 %v1481, 1.442695
        %v1565 = vpow.pop %v1564
        %v1566 = vmul.f32 %v1482, 1.442695
        %v1567 = vpow.pop %v1566
        %v1568 = vmul.f32 %v1483, 1.442695
        %v1569 = vpow.pop %v1568
        %v1570 = vmul.f32 %v1484, 1.442695
        %v1571 = vpow.pop %v1570
        %v1572 = vmul.f32 %v1485, 1.442695
        %v1573 = vpow.pop %v1572
        %v1574 = vmul.f32 %v1486, 1.442695
        %v1575 = vpow.pop %v1574
        %v1576 = vmul.f32 %v1487, 1.442695
        %v1577 = vpow.pop %v1576
        %v1578 = vmul.f32 %v1488, 1.442695
        %v1579 = vpow.pop %v1578
        %v1580 = vmul.f32 %v1489, 1.442695
        %v1581 = vpow.pop %v1580
        %v1582 = vmul.f32 %v1490, 1.442695
        %v1583 = vpow.pop %v1582
        %v1584 = vmul.f32 %v1491, 1.442695
        %v1585 = vpow.pop %v1584
        %v1586 = vmul.f32 %v1492, 1.442695
        %v1587 = vpow.pop %v1586
        %v1588 = vmul.f32 %v1493, 1.442695
        %v1589 = vpow.pop %v1588
        %v1590 = vmul.f32 %v1494, 1.442695
        %v1591 = vpow.pop %v1590
        %v1592 = vmul.f32 %v1495, 1.442695
        %v1593 = vpow.pop %v1592
        %v1594 = vmul.f32 %v1496, 1.442695
        %v1595 = vpow.pop %v1594
        %v1596 = vmul.f32 %v1497, 1.442695
        %v1597 = vpow.pop %v1596
        %v1598 = vmul.f32 %v1498, 1.442695
        %v1599 = vpow.pop %v1598
        %v1600 = vmul.f32 %v1499, 1.442695
        %v1601 = vpow.pop %v1600
        %v1602 = vmul.f32 %v1500, 1.442695
        %v1603 = vpow.pop %v1602
        %v1604 = vmul.f32 %v1501, 1.442695
        %v1605 = vpow.pop %v1604
        %v1606 = vmul.f32 %v1502, 1.442695
        %v1607 = vpow.pop %v1606
        %v1608 = vmul.f32 %v1503, 1.442695
        %v1609 = vpow.pop %v1608
        %v1610 = vmul.f32 %v1504, 1.442695
        %v1611 = vpow.pop %v1610
        %v1612 = vmul.f32 %v1505, 1.442695
        %v1613 = vpow.pop %v1612
        %v1614 = vmul.f32 %v1506, 1.442695
        %v1615 = vpow.pop %v1614
        %v1616 = vmul.f32 %v1507, 1.442695
        %v1617 = vpow.pop %v1616
        %v1618 = vmul.f32 %v1508, 1.442695
        %v1619 = vpow.pop %v1618
        %v1620 = vmul.f32 %v1509, 1.442695
        %v1621 = vpow.pop %v1620
        %v1622 = vmul.f32 %v1510, 1.442695
        %v1623 = vpow.pop %v1622
        %v1624 = vmul.f32 %v1511, 1.442695
        %v1625 = vpow.pop %v1624
        %v1626 = vmul.f32 %v1512, 1.442695
        %v1627 = vpow.pop %v1626
        %v1628 = vmul.f32 %v1513, 1.442695
        %v1629 = vpow.pop %v1628
        %v1630 = vmul.f32 %v1514, 1.442695
        %v1631 = vpow.pop %v1630
        %v1632 = vmul.f32 %v1515, 1.442695
        %v1633 = vpow.pop %v1632
        %v1634 = vmul.f32 %v1516, 1.442695
        %v1635 = vpow.pop %v1634
        %v1636 = vmul.f32 %v1517, 1.442695
        %v1637 = vpow.pop %v1636
        %v1638 = vmul.f32 %v1518, 1.442695
        %v1639 = vpow.pop %v1638
        %v1640 = vmul.f32 %v1519, 1.442695
        %v1641 = vpow.pop %v1640
        %v1642 = vmul.f32 %v1520, 1.442695
        %v1643 = vpow.pop %v1642
        %v1644 = vmul.f32 %v1521, 1.442695
        %v1645 = vpow.pop %v1644
        %v1646 = vmul.f32 %v1522, 1.442695
        %v1647 = vpow.pop %v1646
        %v1648 = vmul.f32 %v1523, 1.442695
        %v1649 = vpow.pop %v1648
        %v1650 = vmul.f32 %v1524, 1.442695
        %v1651 = vpow.pop %v1650
        %v1652 = vmul.f32 %v1525, 1.442695
        %v1653 = vpow.pop %v1652
        %v1654 = vadd.f32 %v1527, %v1531
        %v1655 = vadd.f32 %v1654, %v1535
        %v1656 = vadd.f32 %v1655, %v1539
        %v1657 = vadd.f32 %v1656, %v1543
        %v1658 = vadd.f32 %v1657, %v1547
        %v1659 = vadd.f32 %v1658, %v1551
        %v1660 = vadd.f32 %v1659, %v1555
        %v1661 = vadd.f32 %v1660, %v1559
        %v1662 = vadd.f32 %v1661, %v1563
        %v1663 = vadd.f32 %v1662, %v1567
        %v1664 = vadd.f32 %v1663, %v1571
        %v1665 = vadd.f32 %v1664, %v1575
        %v1666 = vadd.f32 %v1665, %v1579
        %v1667 = vadd.f32 %v1666, %v1583
        %v1668 = vadd.f32 %v1667, %v1587
        %v1669 = vadd.f32 %v1668, %v1591
        %v1670 = vadd.f32 %v1669, %v1595
        %v1671 = vadd.f32 %v1670, %v1599
        %v1672 = vadd.f32 %v1671, %v1603
        %v1673 = vadd.f32 %v1672, %v1607
        %v1674 = vadd.f32 %v1673, %v1611
        %v1675 = vadd.f32 %v1674, %v1615
        %v1676 = vadd.f32 %v1675, %v1619
        %v1677 = vadd.f32 %v1676, %v1623
        %v1678 = vadd.f32 %v1677, %v1627
        %v1679 = vadd.f32 %v1678, %v1631
        %v1680 = vadd.f32 %v1679, %v1635
        %v1681 = vadd.f32 %v1680, %v1639
        %v1682 = vadd.f32 %v1681, %v1643
        %v1683 = vadd.f32 %v1682, %v1647
        %v1684 = vadd.f32 %v1683, %v1651
        %v1685 = vrot.slane %v1684, 4
        %v1686 = vadd.f32 %v1684, %v1685
        %v1687 = vrot.slane %v1686, 2
        %v1688 = vadd.f32 %v1686, %v1687
        %v1689 = vrot.slane %v1688, 1
        %v1690 = vadd.f32 %v1688, %v1689
        %v1691 = vadd.f32 %v1529, %v1533
        %v1692 = vadd.f32 %v1691, %v1537
        %v1693 = vadd.f32 %v1692, %v1541
        %v1694 = vadd.f32 %v1693, %v1545
        %v1695 = vadd.f32 %v1694, %v1549
        %v1696 = vadd.f32 %v1695, %v1553
        %v1697 = vadd.f32 %v1696, %v1557
        %v1698 = vadd.f32 %v1697, %v1561
        %v1699 = vadd.f32 %v1698, %v1565
        %v1700 = vadd.f32 %v1699, %v1569
        %v1701 = vadd.f32 %v1700, %v1573
        %v1702 = vadd.f32 %v1701, %v1577
        %v1703 = vadd.f32 %v1702, %v1581
        %v1704 = vadd.f32 %v1703, %v1585
        %v1705 = vadd.f32 %v1704, %v1589
        %v1706 = vadd.f32 %v1705, %v1593
        %v1707 = vadd.f32 %v1706, %v1597
        %v1708 = vadd.f32 %v1707, %v1601
        %v1709 = vadd.f32 %v1708, %v1605
        %v1710 = vadd.f32 %v1709, %v1609
        %v1711 = vadd.f32 %v1710, %v1613
        %v1712 = vadd.f32 %v1711, %v1617
        %v1713 = vadd.f32 %v1712, %v1621
        %v1714 = vadd.f32 %v1713, %v1625
        %v1715 = vadd.f32 %v1714, %v1629
        %v1716 = vadd.f32 %v1715, %v1633
        %v1717 = vadd.f32 %v1716, %v1637
        %v1718 = vadd.f32 %v1717, %v1641
        %v1719 = vadd.f32 %v1718, %v1645
        %v1720 = vadd.f32 %v1719, %v1649
        %v1721 = vadd.f32 %v1720, %v1653
        %v1722 = vrot.slane %v1721, 4
        %v1723 = vadd.f32 %v1721, %v1722
        %v1724 = vrot.slane %v1723, 2
        %v1725 = vadd.f32 %v1723, %v1724
        %v1726 = vrot.slane %v1725, 1
        %v1727 = vadd.f32 %v1725, %v1726
        %v1728 = vpack.c.bf16 %v1531, %v1527
        %v1729 = vpack.c.bf16 %v1533, %v1529
        %v1730 = vpack.c.bf16 %v1539, %v1535
        %v1731 = vpack.c.bf16 %v1541, %v1537
        %v1732 = vpack.c.bf16 %v1547, %v1543
        %v1733 = vpack.c.bf16 %v1549, %v1545
        %v1734 = vpack.c.bf16 %v1555, %v1551
        %v1735 = vpack.c.bf16 %v1557, %v1553
        %v1736 = vpack.c.bf16 %v1563, %v1559
        %v1737 = vpack.c.bf16 %v1565, %v1561
        %v1738 = vpack.c.bf16 %v1571, %v1567
        %v1739 = vpack.c.bf16 %v1573, %v1569
        %v1740 = vpack.c.bf16 %v1579, %v1575
        %v1741 = vpack.c.bf16 %v1581, %v1577
        %v1742 = vpack.c.bf16 %v1587, %v1583
        %v1743 = vpack.c.bf16 %v1589, %v1585
        %v1744 = vpack.c.bf16 %v1595, %v1591
        %v1745 = vpack.c.bf16 %v1597, %v1593
        %v1746 = vpack.c.bf16 %v1603, %v1599
        %v1747 = vpack.c.bf16 %v1605, %v1601
        %v1748 = vpack.c.bf16 %v1611, %v1607
        %v1749 = vpack.c.bf16 %v1613, %v1609
        %v1750 = vpack.c.bf16 %v1619, %v1615
        %v1751 = vpack.c.bf16 %v1621, %v1617
        %v1752 = vpack.c.bf16 %v1627, %v1623
        %v1753 = vpack.c.bf16 %v1629, %v1625
        %v1754 = vpack.c.bf16 %v1635, %v1631
        %v1755 = vpack.c.bf16 %v1637, %v1633
        %v1756 = vpack.c.bf16 %v1643, %v1639
        %v1757 = vpack.c.bf16 %v1645, %v1641
        %v1758 = vpack.c.bf16 %v1651, %v1647
        %v1759 = vpack.c.bf16 %v1653, %v1649
        %v1762 = vrot.slane %v397, 2
        %v1763 = vrot.slane %v398, 2
        %1766 = vmatprep.subr.bf16.mxu0 %v1729
        %1767 = vmatpush1.bf16.msra.mxu0 %v1728
        %1768 = vmatprep.subr.bf16.mxu0 %v1731
        %1769 = vmatpush1.bf16.msra.mxu0 %v1730
        %1770 = vmatprep.subr.bf16.mxu0 %v1733
        %1771 = vmatpush1.bf16.msra.mxu0 %v1732
        %1772 = vmatprep.subr.bf16.mxu0 %v1735
        %1773 = vmatpush1.bf16.msra.mxu0 %v1734
        %1774 = vmatprep.subr.bf16.mxu0 %v1737
        %1775 = vmatpush1.bf16.msra.mxu0 %v1736
        %1776 = vmatprep.subr.bf16.mxu0 %v1739
        %1777 = vmatpush1.bf16.msra.mxu0 %v1738
        %1778 = vmatprep.subr.bf16.mxu0 %v1741
        %1779 = vmatpush1.bf16.msra.mxu0 %v1740
        %1780 = vmatprep.subr.bf16.mxu0 %v1743
        %1781 = vmatpush1.bf16.msra.mxu0 %v1742
        %1782 = vmatprep.subr.bf16.mxu0 %v1745
        %1783 = vmatpush1.bf16.msra.mxu0 %v1744
        %1784 = vmatprep.subr.bf16.mxu0 %v1747
        %1785 = vmatpush1.bf16.msra.mxu0 %v1746
        %1786 = vmatprep.subr.bf16.mxu0 %v1749
        %1787 = vmatpush1.bf16.msra.mxu0 %v1748
        %1788 = vmatprep.subr.bf16.mxu0 %v1751
        %1789 = vmatpush1.bf16.msra.mxu0 %v1750
        %1790 = vmatprep.subr.bf16.mxu0 %v1753
        %1791 = vmatpush1.bf16.msra.mxu0 %v1752
        %1792 = vmatprep.subr.bf16.mxu0 %v1755
        %1793 = vmatpush1.bf16.msra.mxu0 %v1754
        %1794 = vmatprep.subr.bf16.mxu0 %v1757
        %1795 = vmatpush1.bf16.msra.mxu0 %v1756
        %1796 = vmatprep.subr.bf16.mxu0 %v1759
        %1797 = vmatpush1.bf16.msra.mxu0 %v1758
        %1798 = vmatprep.mubr.bf16.mxu0 %v1763
        %1799 = vmatmul.mubr.bf16.gmra.mrb[0].mxu0 %v1762
        %v1800 = vpop.f32.mrb[0].mxu0
        %v1801 = vadd.f32 0.0, %v1800
        %v1802 = vpop.f32.mrb[0].mxu0
        %v1803 = vadd.f32 0.0, %v1802
        %v1804 = vpop.f32.mrb[0].mxu0
        %v1805 = vpop.f32.mrb[0].mxu0
        %1806 = vdwg.mxu0
        %v1807 = vrcp.pop %v1690
        %v1808 = vrcp.pop %v1727
        %v1809 = vmul.f32 %v1801, %v1807
        %v1810 = vmul.f32 %v1803, %v1808
        %v1813 = vrot.slane %v1809, 4
        %v1814 = vrot.slane %v1810, 4
        %1817 = vst [vmem:[#allocation2] sm:$0xf0] %v1813
        %1818 = vst [vmem:[#allocation2 + $0x8] sm:$0xf0] %v1814
        %v1819 = vmul.f32 %v337, 0.5
        %v1820 = vmul.f32 %v339, 0.5
        %v1821 = vpack.c.bf16 %v1819, %v1819
        %v1822 = vpack.c.bf16 %v1820, %v1820
        %v1823 = vpack.c.bf16 %v357, %v357
        %v1824 = vpack.c.bf16 %v359, %v359
        %v1825 = vpack.c.bf16 %v377, %v377
        %v1826 = vpack.c.bf16 %v379, %v379
        %1827 = vxpose.xlu0.c.b16.start [1/8] %v1823, 128
        %1828 = vxpose.xlu0.c.b16.cont [2/8] 0, 128
        %1829 = vxpose.xlu0.c.b16.cont [3/8] 0, 128
        %1830 = vxpose.xlu0.c.b16.cont [4/8] 0, 128
        %1831 = vxpose.xlu0.c.b16.cont [5/8] 0, 128
        %1832 = vxpose.xlu0.c.b16.cont [6/8] 0, 128
        %1833 = vxpose.xlu0.c.b16.cont [7/8] 0, 128
        %1834 = vxpose.xlu0.c.b16.end [8/8] 0, 128
        %v1835 = vpop.trf.xlu0
        %v1836 = vpop.trf.xlu0
        %v1837 = vpop.trf.xlu0
        %v1838 = vpop.trf.xlu0
        %v1839 = vpop.trf.xlu0
        %v1840 = vpop.trf.xlu0
        %v1841 = vpop.trf.xlu0
        %v1842 = vpop.trf.xlu0
        %1843 = vxpose.xlu0.c.b16.start [1/8] %v1824, 128
        %1844 = vxpose.xlu0.c.b16.cont [2/8] 0, 128
        %1845 = vxpose.xlu0.c.b16.cont [3/8] 0, 128
        %1846 = vxpose.xlu0.c.b16.cont [4/8] 0, 128
        %1847 = vxpose.xlu0.c.b16.cont [5/8] 0, 128
        %1848 = vxpose.xlu0.c.b16.cont [6/8] 0, 128
        %1849 = vxpose.xlu0.c.b16.cont [7/8] 0, 128
        %1850 = vxpose.xlu0.c.b16.end [8/8] 0, 128
        %v1851 = vpop.trf.xlu0
        %v1852 = vpop.trf.xlu0
        %v1853 = vpop.trf.xlu0
        %v1854 = vpop.trf.xlu0
        %v1855 = vpop.trf.xlu0
        %v1856 = vpop.trf.xlu0
        %v1857 = vpop.trf.xlu0
        %v1858 = vpop.trf.xlu0
        %v1860 = vsel %vm431, %v1835, 0
        %v1863 = vsel %vm431, %v1836, 0
        %v1866 = vsel %vm431, %v1837, 0
        %v1869 = vsel %vm431, %v1838, 0
        %v1872 = vsel %vm431, %v1839, 0
        %v1875 = vsel %vm431, %v1840, 0
        %v1878 = vsel %vm431, %v1841, 0
        %v1881 = vsel %vm431, %v1842, 0
        %v1884 = vsel %vm431, %v1851, 0
        %v1887 = vsel %vm431, %v1852, 0
        %v1890 = vsel %vm431, %v1853, 0
        %v1893 = vsel %vm431, %v1854, 0
        %v1896 = vsel %vm431, %v1855, 0
        %v1899 = vsel %vm431, %v1856, 0
        %v1902 = vsel %vm431, %v1857, 0
        %v1905 = vsel %vm431, %v1858, 0
        %v1908 = vsel %vm480, %v1821, 0
        %v1911 = vsel %vm480, %v1822, 0
        %1913 = vmatprep.subr.bf16.mxu0 %v1911
        %1914 = vmatpush1.bf16.msra.mxu0 %v1908
        %1915 = vmatprep.subr.bf16.mxu0 0
        %1916 = vmatpush1.bf16.msra.mxu0 0
        %1917 = vmatprep.subr.bf16.mxu0 0
        %1918 = vmatpush1.bf16.msra.mxu0 0
        %1919 = vmatprep.subr.bf16.mxu0 0
        %1920 = vmatpush1.bf16.msra.mxu0 0
        %1921 = vmatprep.subr.bf16.mxu0 0
        %1922 = vmatpush1.bf16.msra.mxu0 0
        %1923 = vmatprep.subr.bf16.mxu0 0
        %1924 = vmatpush1.bf16.msra.mxu0 0
        %1925 = vmatprep.subr.bf16.mxu0 0
        %1926 = vmatpush1.bf16.msra.mxu0 0
        %1927 = vmatprep.subr.bf16.mxu0 0
        %1928 = vmatpush1.bf16.msra.mxu0 0
        %1929 = vmatprep.subr.bf16.mxu0 0
        %1930 = vmatpush1.bf16.msra.mxu0 0
        %1931 = vmatprep.subr.bf16.mxu0 0
        %1932 = vmatpush1.bf16.msra.mxu0 0
        %1933 = vmatprep.subr.bf16.mxu0 0
        %1934 = vmatpush1.bf16.msra.mxu0 0
        %1935 = vmatprep.subr.bf16.mxu0 0
        %1936 = vmatpush1.bf16.msra.mxu0 0
        %1937 = vmatprep.subr.bf16.mxu0 0
        %1938 = vmatpush1.bf16.msra.mxu0 0
        %1939 = vmatprep.subr.bf16.mxu0 0
        %1940 = vmatpush1.bf16.msra.mxu0 0
        %1941 = vmatprep.subr.bf16.mxu0 0
        %1942 = vmatpush1.bf16.msra.mxu0 0
        %1943 = vmatprep.subr.bf16.mxu0 0
        %1944 = vmatpush1.bf16.msra.mxu0 0
        %1945 = vmatprep.mubr.bf16.mxu0 0
        %1946 = vmatmul.mubr.bf16.gmra.mrb[0].mxu0 %v1860
        %v1947 = vpop.f32.mrb[0].mxu0
        %v1948 = vadd.f32 0.0, %v1947
        %v1949 = vpop.f32.mrb[0].mxu0
        %v1950 = vadd.f32 0.0, %v1949
        %v1951 = vpop.f32.mrb[0].mxu0
        %v1952 = vadd.f32 0.0, %v1951
        %v1953 = vpop.f32.mrb[0].mxu0
        %v1954 = vadd.f32 0.0, %v1953
        %1955 = vmatprep.mubr.bf16.mxu0 0
        %1956 = vmatmul.mubr.bf16.gmra.mrb[0].mxu0 %v1863
        %v1957 = vpop.f32.mrb[0].mxu0
        %v1958 = vadd.f32 0.0, %v1957
        %v1959 = vpop.f32.mrb[0].mxu0
        %v1960 = vadd.f32 0.0, %v1959
        %v1961 = vpop.f32.mrb[0].mxu0
        %v1962 = vadd.f32 0.0, %v1961
        %v1963 = vpop.f32.mrb[0].mxu0
        %v1964 = vadd.f32 0.0, %v1963
        %1965 = vmatprep.mubr.bf16.mxu0 0
        %1966 = vmatmul.mubr.bf16.gmra.mrb[0].mxu0 %v1866
        %v1967 = vpop.f32.mrb[0].mxu0
        %v1968 = vadd.f32 0.0, %v1967
        %v1969 = vpop.f32.mrb[0].mxu0
        %v1970 = vadd.f32 0.0, %v1969
        %v1971 = vpop.f32.mrb[0].mxu0
        %v1972 = vadd.f32 0.0, %v1971
        %v1973 = vpop.f32.mrb[0].mxu0
        %v1974 = vadd.f32 0.0, %v1973
        %1975 = vmatprep.mubr.bf16.mxu0 0
        %1976 = vmatmul.mubr.bf16.gmra.mrb[0].mxu0 %v1869
        %v1977 = vpop.f32.mrb[0].mxu0
        %v1978 = vadd.f32 0.0, %v1977
        %v1979 = vpop.f32.mrb[0].mxu0
        %v1980 = vadd.f32 0.0, %v1979
        %v1981 = vpop.f32.mrb[0].mxu0
        %v1982 = vadd.f32 0.0, %v1981
        %v1983 = vpop.f32.mrb[0].mxu0
        %v1984 = vadd.f32 0.0, %v1983
        %1985 = vmatprep.mubr.bf16.mxu0 0
        %1986 = vmatmul.mubr.bf16.gmra.mrb[0].mxu0 %v1872
        %v1987 = vpop.f32.mrb[0].mxu0
        %v1988 = vadd.f32 0.0, %v1987
        %v1989 = vpop.f32.mrb[0].mxu0
        %v1990 = vadd.f32 0.0, %v1989
        %v1991 = vpop.f32.mrb[0].mxu0
        %v1992 = vadd.f32 0.0, %v1991
        %v1993 = vpop.f32.mrb[0].mxu0
        %v1994 = vadd.f32 0.0, %v1993
        %1995 = vmatprep.mubr.bf16.mxu0 0
        %1996 = vmatmul.mubr.bf16.gmra.mrb[0].mxu0 %v1875
        %v1997 = vpop.f32.mrb[0].mxu0
        %v1998 = vadd.f32 0.0, %v1997
        %v1999 = vpop.f32.mrb[0].mxu0
        %v2000 = vadd.f32 0.0, %v1999
        %v2001 = vpop.f32.mrb[0].mxu0
        %v2002 = vadd.f32 0.0, %v2001
        %v2003 = vpop.f32.mrb[0].mxu0
        %v2004 = vadd.f32 0.0, %v2003
        %2005 = vmatprep.mubr.bf16.mxu0 0
        %2006 = vmatmul.mubr.bf16.gmra.mrb[0].mxu0 %v1878
        %v2007 = vpop.f32.mrb[0].mxu0
        %v2008 = vadd.f32 0.0, %v2007
        %v2009 = vpop.f32.mrb[0].mxu0
        %v2010 = vadd.f32 0.0, %v2009
        %v2011 = vpop.f32.mrb[0].mxu0
        %v2012 = vadd.f32 0.0, %v2011
        %v2013 = vpop.f32.mrb[0].mxu0
        %v2014 = vadd.f32 0.0, %v2013
        %2015 = vmatprep.mubr.bf16.mxu0 0
        %2016 = vmatmul.mubr.bf16.gmra.mrb[0].mxu0 %v1881
        %v2017 = vpop.f32.mrb[0].mxu0
        %v2018 = vadd.f32 0.0, %v2017
        %v2019 = vpop.f32.mrb[0].mxu0
        %v2020 = vadd.f32 0.0, %v2019
        %v2021 = vpop.f32.mrb[0].mxu0
        %v2022 = vadd.f32 0.0, %v2021
        %v2023 = vpop.f32.mrb[0].mxu0
        %v2024 = vadd.f32 0.0, %v2023
        %2025 = vmatprep.mubr.bf16.mxu0 0
        %2026 = vmatmul.mubr.bf16.gmra.mrb[0].mxu0 %v1884
        %v2027 = vpop.f32.mrb[0].mxu0
        %v2028 = vadd.f32 0.0, %v2027
        %v2029 = vpop.f32.mrb[0].mxu0
        %v2030 = vadd.f32 0.0, %v2029
        %v2031 = vpop.f32.mrb[0].mxu0
        %v2032 = vadd.f32 0.0, %v2031
        %v2033 = vpop.f32.mrb[0].mxu0
        %v2034 = vadd.f32 0.0, %v2033
        %2035 = vmatprep.mubr.bf16.mxu0 0
        %2036 = vmatmul.mubr.bf16.gmra.mrb[0].mxu0 %v1887
        %v2037 = vpop.f32.mrb[0].mxu0
        %v2038 = vadd.f32 0.0, %v2037
        %v2039 = vpop.f32.mrb[0].mxu0
        %v2040 = vadd.f32 0.0, %v2039
        %v2041 = vpop.f32.mrb[0].mxu0
        %v2042 = vadd.f32 0.0, %v2041
        %v2043 = vpop.f32.mrb[0].mxu0
        %v2044 = vadd.f32 0.0, %v2043
        %2045 = vmatprep.mubr.bf16.mxu0 0
        %2046 = vmatmul.mubr.bf16.gmra.mrb[0].mxu0 %v1890
        %v2047 = vpop.f32.mrb[0].mxu0
        %v2048 = vadd.f32 0.0, %v2047
        %v2049 = vpop.f32.mrb[0].mxu0
        %v2050 = vadd.f32 0.0, %v2049
        %v2051 = vpop.f32.mrb[0].mxu0
        %v2052 = vadd.f32 0.0, %v2051
        %v2053 = vpop.f32.mrb[0].mxu0
        %v2054 = vadd.f32 0.0, %v2053
        %2055 = vmatprep.mubr.bf16.mxu0 0
        %2056 = vmatmul.mubr.bf16.gmra.mrb[0].mxu0 %v1893
        %v2057 = vpop.f32.mrb[0].mxu0
        %v2058 = vadd.f32 0.0, %v2057
        %v2059 = vpop.f32.mrb[0].mxu0
        %v2060 = vadd.f32 0.0, %v2059
        %v2061 = vpop.f32.mrb[0].mxu0
        %v2062 = vadd.f32 0.0, %v2061
        %v2063 = vpop.f32.mrb[0].mxu0
        %v2064 = vadd.f32 0.0, %v2063
        %2065 = vmatprep.mubr.bf16.mxu0 0
        %2066 = vmatmul.mubr.bf16.gmra.mrb[0].mxu0 %v1896
        %v2067 = vpop.f32.mrb[0].mxu0
        %v2068 = vadd.f32 0.0, %v2067
        %v2069 = vpop.f32.mrb[0].mxu0
        %v2070 = vadd.f32 0.0, %v2069
        %v2071 = vpop.f32.mrb[0].mxu0
        %v2072 = vadd.f32 0.0, %v2071
        %v2073 = vpop.f32.mrb[0].mxu0
        %v2074 = vadd.f32 0.0, %v2073
        %2075 = vmatprep.mubr.bf16.mxu0 0
        %2076 = vmatmul.mubr.bf16.gmra.mrb[0].mxu0 %v1899
        %v2077 = vpop.f32.mrb[0].mxu0
        %v2078 = vadd.f32 0.0, %v2077
        %v2079 = vpop.f32.mrb[0].mxu0
        %v2080 = vadd.f32 0.0, %v2079
        %v2081 = vpop.f32.mrb[0].mxu0
        %v2082 = vadd.f32 0.0, %v2081
        %v2083 = vpop.f32.mrb[0].mxu0
        %v2084 = vadd.f32 0.0, %v2083
        %2085 = vmatprep.mubr.bf16.mxu0 0
        %2086 = vmatmul.mubr.bf16.gmra.mrb[0].mxu0 %v1902
        %v2087 = vpop.f32.mrb[0].mxu0
        %v2088 = vadd.f32 0.0, %v2087
        %v2089 = vpop.f32.mrb[0].mxu0
        %v2090 = vadd.f32 0.0, %v2089
        %v2091 = vpop.f32.mrb[0].mxu0
        %v2092 = vadd.f32 0.0, %v2091
        %v2093 = vpop.f32.mrb[0].mxu0
        %v2094 = vadd.f32 0.0, %v2093
        %2095 = vmatprep.mubr.bf16.mxu0 0
        %2096 = vmatmul.mubr.bf16.gmra.mrb[0].mxu0 %v1905
        %v2097 = vpop.f32.mrb[0].mxu0
        %v2098 = vadd.f32 0.0, %v2097
        %v2099 = vpop.f32.mrb[0].mxu0
        %v2100 = vadd.f32 0.0, %v2099
        %v2101 = vpop.f32.mrb[0].mxu0
        %v2102 = vadd.f32 0.0, %v2101
        %v2103 = vpop.f32.mrb[0].mxu0
        %v2104 = vadd.f32 0.0, %v2103
        %2105 = vdwg.mxu0
        %v2106 = vmax.f32 %v1948, %v1958
        %v2107 = vmax.f32 %v1952, %v1962
        %v2108 = vmax.f32 %v2106, %v1968
        %v2109 = vmax.f32 %v2107, %v1972
        %v2110 = vmax.f32 %v2108, %v1978
        %v2111 = vmax.f32 %v2109, %v1982
        %v2112 = vmax.f32 %v2110, %v1988
        %v2113 = vmax.f32 %v2111, %v1992
        %v2114 = vmax.f32 %v2112, %v1998
        %v2115 = vmax.f32 %v2113, %v2002
        %v2116 = vmax.f32 %v2114, %v2008
        %v2117 = vmax.f32 %v2115, %v2012
        %v2118 = vmax.f32 %v2116, %v2018
        %v2119 = vmax.f32 %v2117, %v2022
        %v2120 = vmax.f32 %v2118, %v2028
        %v2121 = vmax.f32 %v2119, %v2032
        %v2122 = vmax.f32 %v2120, %v2038
        %v2123 = vmax.f32 %v2121, %v2042
        %v2124 = vmax.f32 %v2122, %v2048
        %v2125 = vmax.f32 %v2123, %v2052
        %v2126 = vmax.f32 %v2124, %v2058
        %v2127 = vmax.f32 %v2125, %v2062
        %v2128 = vmax.f32 %v2126, %v2068
        %v2129 = vmax.f32 %v2127, %v2072
        %v2130 = vmax.f32 %v2128, %v2078
        %v2131 = vmax.f32 %v2129, %v2082
        %v2132 = vmax.f32 %v2130, %v2088
        %v2133 = vmax.f32 %v2131, %v2092
        %v2134 = vmax.f32 %v2132, %v2098
        %v2135 = vmax.f32 %v2133, %v2102
        %v2136 = vmax.f32 %v2134, %v2135
        %v2137 = vrot.slane %v2136, 4
        %v2138 = vmax.f32 %v2136, %v2137
        %v2139 = vrot.slane %v2138, 2
        %v2140 = vmax.f32 %v2138, %v2139
        %v2141 = vrot.slane %v2140, 1
        %v2142 = vmax.f32 %v2140, %v2141
        %v2143 = vmax.f32 %v1950, %v1960
        %v2144 = vmax.f32 %v1954, %v1964
        %v2145 = vmax.f32 %v2143, %v1970
        %v2146 = vmax.f32 %v2144, %v1974
        %v2147 = vmax.f32 %v2145, %v1980
        %v2148 = vmax.f32 %v2146, %v1984
        %v2149 = vmax.f32 %v2147, %v1990
        %v2150 = vmax.f32 %v2148, %v1994
        %v2151 = vmax.f32 %v2149, %v2000
        %v2152 = vmax.f32 %v2150, %v2004
        %v2153 = vmax.f32 %v2151, %v2010
        %v2154 = vmax.f32 %v2152, %v2014
        %v2155 = vmax.f32 %v2153, %v2020
        %v2156 = vmax.f32 %v2154, %v2024
        %v2157 = vmax.f32 %v2155, %v2030
        %v2158 = vmax.f32 %v2156, %v2034
        %v2159 = vmax.f32 %v2157, %v2040
        %v2160 = vmax.f32 %v2158, %v2044
        %v2161 = vmax.f32 %v2159, %v2050
        %v2162 = vmax.f32 %v2160, %v2054
        %v2163 = vmax.f32 %v2161, %v2060
        %v2164 = vmax.f32 %v2162, %v2064
        %v2165 = vmax.f32 %v2163, %v2070
        %v2166 = vmax.f32 %v2164, %v2074
        %v2167 = vmax.f32 %v2165, %v2080
        %v2168 = vmax.f32 %v2166, %v2084
        %v2169 = vmax.f32 %v2167, %v2090
        %v2170 = vmax.f32 %v2168, %v2094
        %v2171 = vmax.f32 %v2169, %v2100
        %v2172 = vmax.f32 %v2170, %v2104
        %v2173 = vmax.f32 %v2171, %v2172
        %v2174 = vrot.slane %v2173, 4
        %v2175 = vmax.f32 %v2173, %v2174
        %v2176 = vrot.slane %v2175, 2
        %v2177 = vmax.f32 %v2175, %v2176
        %v2178 = vrot.slane %v2177, 1
        %v2179 = vmax.f32 %v2177, %v2178
        %v2180 = vsub.f32 %v1948, %v2142
        %v2181 = vsub.f32 %v1950, %v2179
        %v2182 = vsub.f32 %v1952, %v2142
        %v2183 = vsub.f32 %v1954, %v2179
        %v2184 = vsub.f32 %v1958, %v2142
        %v2185 = vsub.f32 %v1960, %v2179
        %v2186 = vsub.f32 %v1962, %v2142
        %v2187 = vsub.f32 %v1964, %v2179
        %v2188 = vsub.f32 %v1968, %v2142
        %v2189 = vsub.f32 %v1970, %v2179
        %v2190 = vsub.f32 %v1972, %v2142
        %v2191 = vsub.f32 %v1974, %v2179
        %v2192 = vsub.f32 %v1978, %v2142
        %v2193 = vsub.f32 %v1980, %v2179
        %v2194 = vsub.f32 %v1982, %v2142
        %v2195 = vsub.f32 %v1984, %v2179
        %v2196 = vsub.f32 %v1988, %v2142
        %v2197 = vsub.f32 %v1990, %v2179
        %v2198 = vsub.f32 %v1992, %v2142
        %v2199 = vsub.f32 %v1994, %v2179
        %v2200 = vsub.f32 %v1998, %v2142
        %v2201 = vsub.f32 %v2000, %v2179
        %v2202 = vsub.f32 %v2002, %v2142
        %v2203 = vsub.f32 %v2004, %v2179
        %v2204 = vsub.f32 %v2008, %v2142
        %v2205 = vsub.f32 %v2010, %v2179
        %v2206 = vsub.f32 %v2012, %v2142
        %v2207 = vsub.f32 %v2014, %v2179
        %v2208 = vsub.f32 %v2018, %v2142
        %v2209 = vsub.f32 %v2020, %v2179
        %v2210 = vsub.f32 %v2022, %v2142
        %v2211 = vsub.f32 %v2024, %v2179
        %v2212 = vsub.f32 %v2028, %v2142
        %v2213 = vsub.f32 %v2030, %v2179
        %v2214 = vsub.f32 %v2032, %v2142
        %v2215 = vsub.f32 %v2034, %v2179
        %v2216 = vsub.f32 %v2038, %v2142
        %v2217 = vsub.f32 %v2040, %v2179
        %v2218 = vsub.f32 %v2042, %v2142
        %v2219 = vsub.f32 %v2044, %v2179
        %v2220 = vsub.f32 %v2048, %v2142
        %v2221 = vsub.f32 %v2050, %v2179
        %v2222 = vsub.f32 %v2052, %v2142
        %v2223 = vsub.f32 %v2054, %v2179
        %v2224 = vsub.f32 %v2058, %v2142
        %v2225 = vsub.f32 %v2060, %v2179
        %v2226 = vsub.f32 %v2062, %v2142
        %v2227 = vsub.f32 %v2064, %v2179
        %v2228 = vsub.f32 %v2068, %v2142
        %v2229 = vsub.f32 %v2070, %v2179
        %v2230 = vsub.f32 %v2072, %v2142
        %v2231 = vsub.f32 %v2074, %v2179
        %v2232 = vsub.f32 %v2078, %v2142
        %v2233 = vsub.f32 %v2080, %v2179
        %v2234 = vsub.f32 %v2082, %v2142
        %v2235 = vsub.f32 %v2084, %v2179
        %v2236 = vsub.f32 %v2088, %v2142
        %v2237 = vsub.f32 %v2090, %v2179
        %v2238 = vsub.f32 %v2092, %v2142
        %v2239 = vsub.f32 %v2094, %v2179
        %v2240 = vsub.f32 %v2098, %v2142
        %v2241 = vsub.f32 %v2100, %v2179
        %v2242 = vsub.f32 %v2102, %v2142
        %v2243 = vsub.f32 %v2104, %v2179
        %v2244 = vmul.f32 %v2180, 1.442695
        %v2245 = vpow.pop %v2244
        %v2246 = vmul.f32 %v2181, 1.442695
        %v2247 = vpow.pop %v2246
        %v2248 = vmul.f32 %v2182, 1.442695
        %v2249 = vpow.pop %v2248
        %v2250 = vmul.f32 %v2183, 1.442695
        %v2251 = vpow.pop %v2250
        %v2252 = vmul.f32 %v2184, 1.442695
        %v2253 = vpow.pop %v2252
        %v2254 = vmul.f32 %v2185, 1.442695
        %v2255 = vpow.pop %v2254
        %v2256 = vmul.f32 %v2186, 1.442695
        %v2257 = vpow.pop %v2256
        %v2258 = vmul.f32 %v2187, 1.442695
        %v2259 = vpow.pop %v2258
        %v2260 = vmul.f32 %v2188, 1.442695
        %v2261 = vpow.pop %v2260
        %v2262 = vmul.f32 %v2189, 1.442695
        %v2263 = vpow.pop %v2262
        %v2264 = vmul.f32 %v2190, 1.442695
        %v2265 = vpow.pop %v2264
        %v2266 = vmul.f32 %v2191, 1.442695
        %v2267 = vpow.pop %v2266
        %v2268 = vmul.f32 %v2192, 1.442695
        %v2269 = vpow.pop %v2268
        %v2270 = vmul.f32 %v2193, 1.442695
        %v2271 = vpow.pop %v2270
        %v2272 = vmul.f32 %v2194, 1.442695
        %v2273 = vpow.pop %v2272
        %v2274 = vmul.f32 %v2195, 1.442695
        %v2275 = vpow.pop %v2274
        %v2276 = vmul.f32 %v2196, 1.442695
        %v2277 = vpow.pop %v2276
        %v2278 = vmul.f32 %v2197, 1.442695
        %v2279 = vpow.pop %v2278
        %v2280 = vmul.f32 %v2198, 1.442695
        %v2281 = vpow.pop %v2280
        %v2282 = vmul.f32 %v2199, 1.442695
        %v2283 = vpow.pop %v2282
        %v2284 = vmul.f32 %v2200, 1.442695
        %v2285 = vpow.pop %v2284
        %v2286 = vmul.f32 %v2201, 1.442695
        %v2287 = vpow.pop %v2286
        %v2288 = vmul.f32 %v2202, 1.442695
        %v2289 = vpow.pop %v2288
        %v2290 = vmul.f32 %v2203, 1.442695
        %v2291 = vpow.pop %v2290
        %v2292 = vmul.f32 %v2204, 1.442695
        %v2293 = vpow.pop %v2292
        %v2294 = vmul.f32 %v2205, 1.442695
        %v2295 = vpow.pop %v2294
        %v2296 = vmul.f32 %v2206, 1.442695
        %v2297 = vpow.pop %v2296
        %v2298 = vmul.f32 %v2207, 1.442695
        %v2299 = vpow.pop %v2298
        %v2300 = vmul.f32 %v2208, 1.442695
        %v2301 = vpow.pop %v2300
        %v2302 = vmul.f32 %v2209, 1.442695
        %v2303 = vpow.pop %v2302
        %v2304 = vmul.f32 %v2210, 1.442695
        %v2305 = vpow.pop %v2304
        %v2306 = vmul.f32 %v2211, 1.442695
        %v2307 = vpow.pop %v2306
        %v2308 = vmul.f32 %v2212, 1.442695
        %v2309 = vpow.pop %v2308
        %v2310 = vmul.f32 %v2213, 1.442695
        %v2311 = vpow.pop %v2310
        %v2312 = vmul.f32 %v2214, 1.442695
        %v2313 = vpow.pop %v2312
        %v2314 = vmul.f32 %v2215, 1.442695
        %v2315 = vpow.pop %v2314
        %v2316 = vmul.f32 %v2216, 1.442695
        %v2317 = vpow.pop %v2316
        %v2318 = vmul.f32 %v2217, 1.442695
        %v2319 = vpow.pop %v2318
        %v2320 = vmul.f32 %v2218, 1.442695
        %v2321 = vpow.pop %v2320
        %v2322 = vmul.f32 %v2219, 1.442695
        %v2323 = vpow.pop %v2322
        %v2324 = vmul.f32 %v2220, 1.442695
        %v2325 = vpow.pop %v2324
        %v2326 = vmul.f32 %v2221, 1.442695
        %v2327 = vpow.pop %v2326
        %v2328 = vmul.f32 %v2222, 1.442695
        %v2329 = vpow.pop %v2328
        %v2330 = vmul.f32 %v2223, 1.442695
        %v2331 = vpow.pop %v2330
        %v2332 = vmul.f32 %v2224, 1.442695
        %v2333 = vpow.pop %v2332
        %v2334 = vmul.f32 %v2225, 1.442695
        %v2335 = vpow.pop %v2334
        %v2336 = vmul.f32 %v2226, 1.442695
        %v2337 = vpow.pop %v2336
        %v2338 = vmul.f32 %v2227, 1.442695
        %v2339 = vpow.pop %v2338
        %v2340 = vmul.f32 %v2228, 1.442695
        %v2341 = vpow.pop %v2340
        %v2342 = vmul.f32 %v2229, 1.442695
        %v2343 = vpow.pop %v2342
        %v2344 = vmul.f32 %v2230, 1.442695
        %v2345 = vpow.pop %v2344
        %v2346 = vmul.f32 %v2231, 1.442695
        %v2347 = vpow.pop %v2346
        %v2348 = vmul.f32 %v2232, 1.442695
        %v2349 = vpow.pop %v2348
        %v2350 = vmul.f32 %v2233, 1.442695
        %v2351 = vpow.pop %v2350
        %v2352 = vmul.f32 %v2234, 1.442695
        %v2353 = vpow.pop %v2352
        %v2354 = vmul.f32 %v2235, 1.442695
        %v2355 = vpow.pop %v2354
        %v2356 = vmul.f32 %v2236, 1.442695
        %v2357 = vpow.pop %v2356
        %v2358 = vmul.f32 %v2237, 1.442695
        %v2359 = vpow.pop %v2358
        %v2360 = vmul.f32 %v2238, 1.442695
        %v2361 = vpow.pop %v2360
        %v2362 = vmul.f32 %v2239, 1.442695
        %v2363 = vpow.pop %v2362
        %v2364 = vmul.f32 %v2240, 1.442695
        %v2365 = vpow.pop %v2364
        %v2366 = vmul.f32 %v2241, 1.442695
        %v2367 = vpow.pop %v2366
        %v2368 = vmul.f32 %v2242, 1.442695
        %v2369 = vpow.pop %v2368
        %v2370 = vmul.f32 %v2243, 1.442695
        %v2371 = vpow.pop %v2370
        %v2372 = vadd.f32 %v2245, %v2249
        %v2373 = vadd.f32 %v2372, %v2253
        %v2374 = vadd.f32 %v2373, %v2257
        %v2375 = vadd.f32 %v2374, %v2261
        %v2376 = vadd.f32 %v2375, %v2265
        %v2377 = vadd.f32 %v2376, %v2269
        %v2378 = vadd.f32 %v2377, %v2273
        %v2379 = vadd.f32 %v2378, %v2277
        %v2380 = vadd.f32 %v2379, %v2281
        %v2381 = vadd.f32 %v2380, %v2285
        %v2382 = vadd.f32 %v2381, %v2289
        %v2383 = vadd.f32 %v2382, %v2293
        %v2384 = vadd.f32 %v2383, %v2297
        %v2385 = vadd.f32 %v2384, %v2301
        %v2386 = vadd.f32 %v2385, %v2305
        %v2387 = vadd.f32 %v2386, %v2309
        %v2388 = vadd.f32 %v2387, %v2313
        %v2389 = vadd.f32 %v2388, %v2317
        %v2390 = vadd.f32 %v2389, %v2321
        %v2391 = vadd.f32 %v2390, %v2325
        %v2392 = vadd.f32 %v2391, %v2329
        %v2393 = vadd.f32 %v2392, %v2333
        %v2394 = vadd.f32 %v2393, %v2337
        %v2395 = vadd.f32 %v2394, %v2341
        %v2396 = vadd.f32 %v2395, %v2345
        %v2397 = vadd.f32 %v2396, %v2349
        %v2398 = vadd.f32 %v2397, %v2353
        %v2399 = vadd.f32 %v2398, %v2357
        %v2400 = vadd.f32 %v2399, %v2361
        %v2401 = vadd.f32 %v2400, %v2365
        %v2402 = vadd.f32 %v2401, %v2369
        %v2403 = vrot.slane %v2402, 4
        %v2404 = vadd.f32 %v2402, %v2403
        %v2405 = vrot.slane %v2404, 2
        %v2406 = vadd.f32 %v2404, %v2405
        %v2407 = vrot.slane %v2406, 1
        %v2408 = vadd.f32 %v2406, %v2407
        %v2409 = vadd.f32 %v2247, %v2251
        %v2410 = vadd.f32 %v2409, %v2255
        %v2411 = vadd.f32 %v2410, %v2259
        %v2412 = vadd.f32 %v2411, %v2263
        %v2413 = vadd.f32 %v2412, %v2267
        %v2414 = vadd.f32 %v2413, %v2271
        %v2415 = vadd.f32 %v2414, %v2275
        %v2416 = vadd.f32 %v2415, %v2279
        %v2417 = vadd.f32 %v2416, %v2283
        %v2418 = vadd.f32 %v2417, %v2287
        %v2419 = vadd.f32 %v2418, %v2291
        %v2420 = vadd.f32 %v2419, %v2295
        %v2421 = vadd.f32 %v2420, %v2299
        %v2422 = vadd.f32 %v2421, %v2303
        %v2423 = vadd.f32 %v2422, %v2307
        %v2424 = vadd.f32 %v2423, %v2311
        %v2425 = vadd.f32 %v2424, %v2315
        %v2426 = vadd.f32 %v2425, %v2319
        %v2427 = vadd.f32 %v2426, %v2323
        %v2428 = vadd.f32 %v2427, %v2327
        %v2429 = vadd.f32 %v2428, %v2331
        %v2430 = vadd.f32 %v2429, %v2335
        %v2431 = vadd.f32 %v2430, %v2339
        %v2432 = vadd.f32 %v2431, %v2343
        %v2433 = vadd.f32 %v2432, %v2347
        %v2434 = vadd.f32 %v2433, %v2351
        %v2435 = vadd.f32 %v2434, %v2355
        %v2436 = vadd.f32 %v2435, %v2359
        %v2437 = vadd.f32 %v2436, %v2363
        %v2438 = vadd.f32 %v2437, %v2367
        %v2439 = vadd.f32 %v2438, %v2371
        %v2440 = vrot.slane %v2439, 4
        %v2441 = vadd.f32 %v2439, %v2440
        %v2442 = vrot.slane %v2441, 2
        %v2443 = vadd.f32 %v2441, %v2442
        %v2444 = vrot.slane %v2443, 1
        %v2445 = vadd.f32 %v2443, %v2444
        %v2446 = vpack.c.bf16 %v2249, %v2245
        %v2447 = vpack.c.bf16 %v2251, %v2247
        %v2448 = vpack.c.bf16 %v2257, %v2253
        %v2449 = vpack.c.bf16 %v2259, %v2255
        %v2450 = vpack.c.bf16 %v2265, %v2261
        %v2451 = vpack.c.bf16 %v2267, %v2263
        %v2452 = vpack.c.bf16 %v2273, %v2269
        %v2453 = vpack.c.bf16 %v2275, %v2271
        %v2454 = vpack.c.bf16 %v2281, %v2277
        %v2455 = vpack.c.bf16 %v2283, %v2279
        %v2456 = vpack.c.bf16 %v2289, %v2285
        %v2457 = vpack.c.bf16 %v2291, %v2287
        %v2458 = vpack.c.bf16 %v2297, %v2293
        %v2459 = vpack.c.bf16 %v2299, %v2295
        %v2460 = vpack.c.bf16 %v2305, %v2301
        %v2461 = vpack.c.bf16 %v2307, %v2303
        %v2462 = vpack.c.bf16 %v2313, %v2309
        %v2463 = vpack.c.bf16 %v2315, %v2311
        %v2464 = vpack.c.bf16 %v2321, %v2317
        %v2465 = vpack.c.bf16 %v2323, %v2319
        %v2466 = vpack.c.bf16 %v2329, %v2325
        %v2467 = vpack.c.bf16 %v2331, %v2327
        %v2468 = vpack.c.bf16 %v2337, %v2333
        %v2469 = vpack.c.bf16 %v2339, %v2335
        %v2470 = vpack.c.bf16 %v2345, %v2341
        %v2471 = vpack.c.bf16 %v2347, %v2343
        %v2472 = vpack.c.bf16 %v2353, %v2349
        %v2473 = vpack.c.bf16 %v2355, %v2351
        %v2474 = vpack.c.bf16 %v2361, %v2357
        %v2475 = vpack.c.bf16 %v2363, %v2359
        %v2476 = vpack.c.bf16 %v2369, %v2365
        %v2477 = vpack.c.bf16 %v2371, %v2367
        %2478 = vmatprep.subr.bf16.mxu0 %v2447
        %2479 = vmatpush1.bf16.msra.mxu0 %v2446
        %2480 = vmatprep.subr.bf16.mxu0 %v2449
        %2481 = vmatpush1.bf16.msra.mxu0 %v2448
        %2482 = vmatprep.subr.bf16.mxu0 %v2451
        %2483 = vmatpush1.bf16.msra.mxu0 %v2450
        %2484 = vmatprep.subr.bf16.mxu0 %v2453
        %2485 = vmatpush1.bf16.msra.mxu0 %v2452
        %2486 = vmatprep.subr.bf16.mxu0 %v2455
        %2487 = vmatpush1.bf16.msra.mxu0 %v2454
        %2488 = vmatprep.subr.bf16.mxu0 %v2457
        %2489 = vmatpush1.bf16.msra.mxu0 %v2456
        %2490 = vmatprep.subr.bf16.mxu0 %v2459
        %2491 = vmatpush1.bf16.msra.mxu0 %v2458
        %2492 = vmatprep.subr.bf16.mxu0 %v2461
        %2493 = vmatpush1.bf16.msra.mxu0 %v2460
        %2494 = vmatprep.subr.bf16.mxu0 %v2463
        %2495 = vmatpush1.bf16.msra.mxu0 %v2462
        %2496 = vmatprep.subr.bf16.mxu0 %v2465
        %2497 = vmatpush1.bf16.msra.mxu0 %v2464
        %2498 = vmatprep.subr.bf16.mxu0 %v2467
        %2499 = vmatpush1.bf16.msra.mxu0 %v2466
        %2500 = vmatprep.subr.bf16.mxu0 %v2469
        %2501 = vmatpush1.bf16.msra.mxu0 %v2468
        %2502 = vmatprep.subr.bf16.mxu0 %v2471
        %2503 = vmatpush1.bf16.msra.mxu0 %v2470
        %2504 = vmatprep.subr.bf16.mxu0 %v2473
        %2505 = vmatpush1.bf16.msra.mxu0 %v2472
        %2506 = vmatprep.subr.bf16.mxu0 %v2475
        %2507 = vmatpush1.bf16.msra.mxu0 %v2474
        %2508 = vmatprep.subr.bf16.mxu0 %v2477
        %2509 = vmatpush1.bf16.msra.mxu0 %v2476
        %2510 = vmatprep.mubr.bf16.mxu0 %v1826
        %2511 = vmatmul.mubr.bf16.gmra.mrb[0].mxu0 %v1825
        %v2512 = vpop.f32.mrb[0].mxu0
        %v2513 = vadd.f32 0.0, %v2512
        %v2514 = vpop.f32.mrb[0].mxu0
        %v2515 = vadd.f32 0.0, %v2514
        %v2516 = vpop.f32.mrb[0].mxu0
        %v2517 = vpop.f32.mrb[0].mxu0
        %2518 = vdwg.mxu0
        %v2519 = vrcp.pop %v2408
        %v2520 = vrcp.pop %v2445
        %v2521 = vmul.f32 %v2513, %v2519
        %v2522 = vmul.f32 %v2515, %v2520
        %2523 = vst [vmem:[#allocation2 + $0x10] sm:$0xf] %v2521
        %2524 = vst [vmem:[#allocation2 + $0x18] sm:$0xf] %v2522
        %v2527 = vrot.slane %v1823, 2
        %v2528 = vrot.slane %v1824, 2
        %2531 = vxpose.xlu0.c.b16.start [1/8] %v2527, 128
        %2532 = vxpose.xlu0.c.b16.cont [2/8] 0, 128
        %2533 = vxpose.xlu0.c.b16.cont [3/8] 0, 128
        %2534 = vxpose.xlu0.c.b16.cont [4/8] 0, 128
        %2535 = vxpose.xlu0.c.b16.cont [5/8] 0, 128
        %2536 = vxpose.xlu0.c.b16.cont [6/8] 0, 128
        %2537 = vxpose.xlu0.c.b16.cont [7/8] 0, 128
        %2538 = vxpose.xlu0.c.b16.end [8/8] 0, 128
        %v2539 = vpop.trf.xlu0
        %v2540 = vpop.trf.xlu0
        %v2541 = vpop.trf.xlu0
        %v2542 = vpop.trf.xlu0
        %v2543 = vpop.trf.xlu0
        %v2544 = vpop.trf.xlu0
        %v2545 = vpop.trf.xlu0
        %v2546 = vpop.trf.xlu0
        %2547 = vxpose.xlu0.c.b16.start [1/8] %v2528, 128
        %2548 = vxpose.xlu0.c.b16.cont [2/8] 0, 128
        %2549 = vxpose.xlu0.c.b16.cont [3/8] 0, 128
        %2550 = vxpose.xlu0.c.b16.cont [4/8] 0, 128
        %2551 = vxpose.xlu0.c.b16.cont [5/8] 0, 128
        %2552 = vxpose.xlu0.c.b16.cont [6/8] 0, 128
        %2553 = vxpose.xlu0.c.b16.cont [7/8] 0, 128
        %2554 = vxpose.xlu0.c.b16.end [8/8] 0, 128
        %v2555 = vpop.trf.xlu0
        %v2556 = vpop.trf.xlu0
        %v2557 = vpop.trf.xlu0
        %v2558 = vpop.trf.xlu0
        %v2559 = vpop.trf.xlu0
        %v2560 = vpop.trf.xlu0
        %v2561 = vpop.trf.xlu0
        %v2562 = vpop.trf.xlu0
        %v2565 = vrot.slane %v1821, 2
        %v2566 = vrot.slane %v1822, 2
        %v2568 = vsel %vm431, %v2539, 0
        %v2571 = vsel %vm431, %v2540, 0
        %v2574 = vsel %vm431, %v2541, 0
        %v2577 = vsel %vm431, %v2542, 0
        %v2580 = vsel %vm431, %v2543, 0
        %v2583 = vsel %vm431, %v2544, 0
        %v2586 = vsel %vm431, %v2545, 0
        %v2589 = vsel %vm431, %v2546, 0
        %v2592 = vsel %vm431, %v2555, 0
        %v2595 = vsel %vm431, %v2556, 0
        %v2598 = vsel %vm431, %v2557, 0
        %v2601 = vsel %vm431, %v2558, 0
        %v2604 = vsel %vm431, %v2559, 0
        %v2607 = vsel %vm431, %v2560, 0
        %v2610 = vsel %vm431, %v2561, 0
        %v2613 = vsel %vm431, %v2562, 0
        %v2616 = vsel %vm480, %v2565, 0
        %v2619 = vsel %vm480, %v2566, 0
        %2621 = vmatprep.subr.bf16.mxu0 %v2619
        %2622 = vmatpush1.bf16.msra.mxu0 %v2616
        %2623 = vmatprep.subr.bf16.mxu0 0
        %2624 = vmatpush1.bf16.msra.mxu0 0
        %2625 = vmatprep.subr.bf16.mxu0 0
        %2626 = vmatpush1.bf16.msra.mxu0 0
        %2627 = vmatprep.subr.bf16.mxu0 0
        %2628 = vmatpush1.bf16.msra.mxu0 0
        %2629 = vmatprep.subr.bf16.mxu0 0
        %2630 = vmatpush1.bf16.msra.mxu0 0
        %2631 = vmatprep.subr.bf16.mxu0 0
        %2632 = vmatpush1.bf16.msra.mxu0 0
        %2633 = vmatprep.subr.bf16.mxu0 0
        %2634 = vmatpush1.bf16.msra.mxu0 0
        %2635 = vmatprep.subr.bf16.mxu0 0
        %2636 = vmatpush1.bf16.msra.mxu0 0
        %2637 = vmatprep.subr.bf16.mxu0 0
        %2638 = vmatpush1.bf16.msra.mxu0 0
        %2639 = vmatprep.subr.bf16.mxu0 0
        %2640 = vmatpush1.bf16.msra.mxu0 0
        %2641 = vmatprep.subr.bf16.mxu0 0
        %2642 = vmatpush1.bf16.msra.mxu0 0
        %2643 = vmatprep.subr.bf16.mxu0 0
        %2644 = vmatpush1.bf16.msra.mxu0 0
        %2645 = vmatprep.subr.bf16.mxu0 0
        %2646 = vmatpush1.bf16.msra.mxu0 0
        %2647 = vmatprep.subr.bf16.mxu0 0
        %2648 = vmatpush1.bf16.msra.mxu0 0
        %2649 = vmatprep.subr.bf16.mxu0 0
        %2650 = vmatpush1.bf16.msra.mxu0 0
        %2651 = vmatprep.subr.bf16.mxu0 0
        %2652 = vmatpush1.bf16.msra.mxu0 0
        %2653 = vmatprep.mubr.bf16.mxu0 0
        %2654 = vmatmul.mubr.bf16.gmra.mrb[0].mxu0 %v2568
        %v2655 = vpop.f32.mrb[0].mxu0
        %v2656 = vadd.f32 0.0, %v2655
        %v2657 = vpop.f32.mrb[0].mxu0
        %v2658 = vadd.f32 0.0, %v2657
        %v2659 = vpop.f32.mrb[0].mxu0
        %v2660 = vadd.f32 0.0, %v2659
        %v2661 = vpop.f32.mrb[0].mxu0
        %v2662 = vadd.f32 0.0, %v2661
        %2663 = vmatprep.mubr.bf16.mxu0 0
        %2664 = vmatmul.mubr.bf16.gmra.mrb[0].mxu0 %v2571
        %v2665 = vpop.f32.mrb[0].mxu0
        %v2666 = vadd.f32 0.0, %v2665
        %v2667 = vpop.f32.mrb[0].mxu0
        %v2668 = vadd.f32 0.0, %v2667
        %v2669 = vpop.f32.mrb[0].mxu0
        %v2670 = vadd.f32 0.0, %v2669
        %v2671 = vpop.f32.mrb[0].mxu0
        %v2672 = vadd.f32 0.0, %v2671
        %2673 = vmatprep.mubr.bf16.mxu0 0
        %2674 = vmatmul.mubr.bf16.gmra.mrb[0].mxu0 %v2574
        %v2675 = vpop.f32.mrb[0].mxu0
        %v2676 = vadd.f32 0.0, %v2675
        %v2677 = vpop.f32.mrb[0].mxu0
        %v2678 = vadd.f32 0.0, %v2677
        %v2679 = vpop.f32.mrb[0].mxu0
        %v2680 = vadd.f32 0.0, %v2679
        %v2681 = vpop.f32.mrb[0].mxu0
        %v2682 = vadd.f32 0.0, %v2681
        %2683 = vmatprep.mubr.bf16.mxu0 0
        %2684 = vmatmul.mubr.bf16.gmra.mrb[0].mxu0 %v2577
        %v2685 = vpop.f32.mrb[0].mxu0
        %v2686 = vadd.f32 0.0, %v2685
        %v2687 = vpop.f32.mrb[0].mxu0
        %v2688 = vadd.f32 0.0, %v2687
        %v2689 = vpop.f32.mrb[0].mxu0
        %v2690 = vadd.f32 0.0, %v2689
        %v2691 = vpop.f32.mrb[0].mxu0
        %v2692 = vadd.f32 0.0, %v2691
        %2693 = vmatprep.mubr.bf16.mxu0 0
        %2694 = vmatmul.mubr.bf16.gmra.mrb[0].mxu0 %v2580
        %v2695 = vpop.f32.mrb[0].mxu0
        %v2696 = vadd.f32 0.0, %v2695
        %v2697 = vpop.f32.mrb[0].mxu0
        %v2698 = vadd.f32 0.0, %v2697
        %v2699 = vpop.f32.mrb[0].mxu0
        %v2700 = vadd.f32 0.0, %v2699
        %v2701 = vpop.f32.mrb[0].mxu0
        %v2702 = vadd.f32 0.0, %v2701
        %2703 = vmatprep.mubr.bf16.mxu0 0
        %2704 = vmatmul.mubr.bf16.gmra.mrb[0].mxu0 %v2583
        %v2705 = vpop.f32.mrb[0].mxu0
        %v2706 = vadd.f32 0.0, %v2705
        %v2707 = vpop.f32.mrb[0].mxu0
        %v2708 = vadd.f32 0.0, %v2707
        %v2709 = vpop.f32.mrb[0].mxu0
        %v2710 = vadd.f32 0.0, %v2709
        %v2711 = vpop.f32.mrb[0].mxu0
        %v2712 = vadd.f32 0.0, %v2711
        %2713 = vmatprep.mubr.bf16.mxu0 0
        %2714 = vmatmul.mubr.bf16.gmra.mrb[0].mxu0 %v2586
        %v2715 = vpop.f32.mrb[0].mxu0
        %v2716 = vadd.f32 0.0, %v2715
        %v2717 = vpop.f32.mrb[0].mxu0
        %v2718 = vadd.f32 0.0, %v2717
        %v2719 = vpop.f32.mrb[0].mxu0
        %v2720 = vadd.f32 0.0, %v2719
        %v2721 = vpop.f32.mrb[0].mxu0
        %v2722 = vadd.f32 0.0, %v2721
        %2723 = vmatprep.mubr.bf16.mxu0 0
        %2724 = vmatmul.mubr.bf16.gmra.mrb[0].mxu0 %v2589
        %v2725 = vpop.f32.mrb[0].mxu0
        %v2726 = vadd.f32 0.0, %v2725
        %v2727 = vpop.f32.mrb[0].mxu0
        %v2728 = vadd.f32 0.0, %v2727
        %v2729 = vpop.f32.mrb[0].mxu0
        %v2730 = vadd.f32 0.0, %v2729
        %v2731 = vpop.f32.mrb[0].mxu0
        %v2732 = vadd.f32 0.0, %v2731
        %2733 = vmatprep.mubr.bf16.mxu0 0
        %2734 = vmatmul.mubr.bf16.gmra.mrb[0].mxu0 %v2592
        %v2735 = vpop.f32.mrb[0].mxu0
        %v2736 = vadd.f32 0.0, %v2735
        %v2737 = vpop.f32.mrb[0].mxu0
        %v2738 = vadd.f32 0.0, %v2737
        %v2739 = vpop.f32.mrb[0].mxu0
        %v2740 = vadd.f32 0.0, %v2739
        %v2741 = vpop.f32.mrb[0].mxu0
        %v2742 = vadd.f32 0.0, %v2741
        %2743 = vmatprep.mubr.bf16.mxu0 0
        %2744 = vmatmul.mubr.bf16.gmra.mrb[0].mxu0 %v2595
        %v2745 = vpop.f32.mrb[0].mxu0
        %v2746 = vadd.f32 0.0, %v2745
        %v2747 = vpop.f32.mrb[0].mxu0
        %v2748 = vadd.f32 0.0, %v2747
        %v2749 = vpop.f32.mrb[0].mxu0
        %v2750 = vadd.f32 0.0, %v2749
        %v2751 = vpop.f32.mrb[0].mxu0
        %v2752 = vadd.f32 0.0, %v2751
        %2753 = vmatprep.mubr.bf16.mxu0 0
        %2754 = vmatmul.mubr.bf16.gmra.mrb[0].mxu0 %v2598
        %v2755 = vpop.f32.mrb[0].mxu0
        %v2756 = vadd.f32 0.0, %v2755
        %v2757 = vpop.f32.mrb[0].mxu0
        %v2758 = vadd.f32 0.0, %v2757
        %v2759 = vpop.f32.mrb[0].mxu0
        %v2760 = vadd.f32 0.0, %v2759
        %v2761 = vpop.f32.mrb[0].mxu0
        %v2762 = vadd.f32 0.0, %v2761
        %2763 = vmatprep.mubr.bf16.mxu0 0
        %2764 = vmatmul.mubr.bf16.gmra.mrb[0].mxu0 %v2601
        %v2765 = vpop.f32.mrb[0].mxu0
        %v2766 = vadd.f32 0.0, %v2765
        %v2767 = vpop.f32.mrb[0].mxu0
        %v2768 = vadd.f32 0.0, %v2767
        %v2769 = vpop.f32.mrb[0].mxu0
        %v2770 = vadd.f32 0.0, %v2769
        %v2771 = vpop.f32.mrb[0].mxu0
        %v2772 = vadd.f32 0.0, %v2771
        %2773 = vmatprep.mubr.bf16.mxu0 0
        %2774 = vmatmul.mubr.bf16.gmra.mrb[0].mxu0 %v2604
        %v2775 = vpop.f32.mrb[0].mxu0
        %v2776 = vadd.f32 0.0, %v2775
        %v2777 = vpop.f32.mrb[0].mxu0
        %v2778 = vadd.f32 0.0, %v2777
        %v2779 = vpop.f32.mrb[0].mxu0
        %v2780 = vadd.f32 0.0, %v2779
        %v2781 = vpop.f32.mrb[0].mxu0
        %v2782 = vadd.f32 0.0, %v2781
        %2783 = vmatprep.mubr.bf16.mxu0 0
        %2784 = vmatmul.mubr.bf16.gmra.mrb[0].mxu0 %v2607
        %v2785 = vpop.f32.mrb[0].mxu0
        %v2786 = vadd.f32 0.0, %v2785
        %v2787 = vpop.f32.mrb[0].mxu0
        %v2788 = vadd.f32 0.0, %v2787
        %v2789 = vpop.f32.mrb[0].mxu0
        %v2790 = vadd.f32 0.0, %v2789
        %v2791 = vpop.f32.mrb[0].mxu0
        %v2792 = vadd.f32 0.0, %v2791
        %2793 = vmatprep.mubr.bf16.mxu0 0
        %2794 = vmatmul.mubr.bf16.gmra.mrb[0].mxu0 %v2610
        %v2795 = vpop.f32.mrb[0].mxu0
        %v2796 = vadd.f32 0.0, %v2795
        %v2797 = vpop.f32.mrb[0].mxu0
        %v2798 = vadd.f32 0.0, %v2797
        %v2799 = vpop.f32.mrb[0].mxu0
        %v2800 = vadd.f32 0.0, %v2799
        %v2801 = vpop.f32.mrb[0].mxu0
        %v2802 = vadd.f32 0.0, %v2801
        %2803 = vmatprep.mubr.bf16.mxu0 0
        %2804 = vmatmul.mubr.bf16.gmra.mrb[0].mxu0 %v2613
        %v2805 = vpop.f32.mrb[0].mxu0
        %v2806 = vadd.f32 0.0, %v2805
        %v2807 = vpop.f32.mrb[0].mxu0
        %v2808 = vadd.f32 0.0, %v2807
        %v2809 = vpop.f32.mrb[0].mxu0
        %v2810 = vadd.f32 0.0, %v2809
        %v2811 = vpop.f32.mrb[0].mxu0
        %v2812 = vadd.f32 0.0, %v2811
        %2813 = vdwg.mxu0
        %v2814 = vmax.f32 %v2656, %v2666
        %v2815 = vmax.f32 %v2660, %v2670
        %v2816 = vmax.f32 %v2814, %v2676
        %v2817 = vmax.f32 %v2815, %v2680
        %v2818 = vmax.f32 %v2816, %v2686
        %v2819 = vmax.f32 %v2817, %v2690
        %v2820 = vmax.f32 %v2818, %v2696
        %v2821 = vmax.f32 %v2819, %v2700
        %v2822 = vmax.f32 %v2820, %v2706
        %v2823 = vmax.f32 %v2821, %v2710
        %v2824 = vmax.f32 %v2822, %v2716
        %v2825 = vmax.f32 %v2823, %v2720
        %v2826 = vmax.f32 %v2824, %v2726
        %v2827 = vmax.f32 %v2825, %v2730
        %v2828 = vmax.f32 %v2826, %v2736
        %v2829 = vmax.f32 %v2827, %v2740
        %v2830 = vmax.f32 %v2828, %v2746
        %v2831 = vmax.f32 %v2829, %v2750
        %v2832 = vmax.f32 %v2830, %v2756
        %v2833 = vmax.f32 %v2831, %v2760
        %v2834 = vmax.f32 %v2832, %v2766
        %v2835 = vmax.f32 %v2833, %v2770
        %v2836 = vmax.f32 %v2834, %v2776
        %v2837 = vmax.f32 %v2835, %v2780
        %v2838 = vmax.f32 %v2836, %v2786
        %v2839 = vmax.f32 %v2837, %v2790
        %v2840 = vmax.f32 %v2838, %v2796
        %v2841 = vmax.f32 %v2839, %v2800
        %v2842 = vmax.f32 %v2840, %v2806
        %v2843 = vmax.f32 %v2841, %v2810
        %v2844 = vmax.f32 %v2842, %v2843
        %v2845 = vrot.slane %v2844, 4
        %v2846 = vmax.f32 %v2844, %v2845
        %v2847 = vrot.slane %v2846, 2
        %v2848 = vmax.f32 %v2846, %v2847
        %v2849 = vrot.slane %v2848, 1
        %v2850 = vmax.f32 %v2848, %v2849
        %v2851 = vmax.f32 %v2658, %v2668
        %v2852 = vmax.f32 %v2662, %v2672
        %v2853 = vmax.f32 %v2851, %v2678
        %v2854 = vmax.f32 %v2852, %v2682
        %v2855 = vmax.f32 %v2853, %v2688
        %v2856 = vmax.f32 %v2854, %v2692
        %v2857 = vmax.f32 %v2855, %v2698
        %v2858 = vmax.f32 %v2856, %v2702
        %v2859 = vmax.f32 %v2857, %v2708
        %v2860 = vmax.f32 %v2858, %v2712
        %v2861 = vmax.f32 %v2859, %v2718
        %v2862 = vmax.f32 %v2860, %v2722
        %v2863 = vmax.f32 %v2861, %v2728
        %v2864 = vmax.f32 %v2862, %v2732
        %v2865 = vmax.f32 %v2863, %v2738
        %v2866 = vmax.f32 %v2864, %v2742
        %v2867 = vmax.f32 %v2865, %v2748
        %v2868 = vmax.f32 %v2866, %v2752
        %v2869 = vmax.f32 %v2867, %v2758
        %v2870 = vmax.f32 %v2868, %v2762
        %v2871 = vmax.f32 %v2869, %v2768
        %v2872 = vmax.f32 %v2870, %v2772
        %v2873 = vmax.f32 %v2871, %v2778
        %v2874 = vmax.f32 %v2872, %v2782
        %v2875 = vmax.f32 %v2873, %v2788
        %v2876 = vmax.f32 %v2874, %v2792
        %v2877 = vmax.f32 %v2875, %v2798
        %v2878 = vmax.f32 %v2876, %v2802
        %v2879 = vmax.f32 %v2877, %v2808
        %v2880 = vmax.f32 %v2878, %v2812
        %v2881 = vmax.f32 %v2879, %v2880
        %v2882 = vrot.slane %v2881, 4
        %v2883 = vmax.f32 %v2881, %v2882
        %v2884 = vrot.slane %v2883, 2
        %v2885 = vmax.f32 %v2883, %v2884
        %v2886 = vrot.slane %v2885, 1
        %v2887 = vmax.f32 %v2885, %v2886
        %v2888 = vsub.f32 %v2656, %v2850
        %v2889 = vsub.f32 %v2658, %v2887
        %v2890 = vsub.f32 %v2660, %v2850
        %v2891 = vsub.f32 %v2662, %v2887
        %v2892 = vsub.f32 %v2666, %v2850
        %v2893 = vsub.f32 %v2668, %v2887
        %v2894 = vsub.f32 %v2670, %v2850
        %v2895 = vsub.f32 %v2672, %v2887
        %v2896 = vsub.f32 %v2676, %v2850
        %v2897 = vsub.f32 %v2678, %v2887
        %v2898 = vsub.f32 %v2680, %v2850
        %v2899 = vsub.f32 %v2682, %v2887
        %v2900 = vsub.f32 %v2686, %v2850
        %v2901 = vsub.f32 %v2688, %v2887
        %v2902 = vsub.f32 %v2690, %v2850
        %v2903 = vsub.f32 %v2692, %v2887
        %v2904 = vsub.f32 %v2696, %v2850
        %v2905 = vsub.f32 %v2698, %v2887
        %v2906 = vsub.f32 %v2700, %v2850
        %v2907 = vsub.f32 %v2702, %v2887
        %v2908 = vsub.f32 %v2706, %v2850
        %v2909 = vsub.f32 %v2708, %v2887
        %v2910 = vsub.f32 %v2710, %v2850
        %v2911 = vsub.f32 %v2712, %v2887
        %v2912 = vsub.f32 %v2716, %v2850
        %v2913 = vsub.f32 %v2718, %v2887
        %v2914 = vsub.f32 %v2720, %v2850
        %v2915 = vsub.f32 %v2722, %v2887
        %v2916 = vsub.f32 %v2726, %v2850
        %v2917 = vsub.f32 %v2728, %v2887
        %v2918 = vsub.f32 %v2730, %v2850
        %v2919 = vsub.f32 %v2732, %v2887
        %v2920 = vsub.f32 %v2736, %v2850
        %v2921 = vsub.f32 %v2738, %v2887
        %v2922 = vsub.f32 %v2740, %v2850
        %v2923 = vsub.f32 %v2742, %v2887
        %v2924 = vsub.f32 %v2746, %v2850
        %v2925 = vsub.f32 %v2748, %v2887
        %v2926 = vsub.f32 %v2750, %v2850
        %v2927 = vsub.f32 %v2752, %v2887
        %v2928 = vsub.f32 %v2756, %v2850
        %v2929 = vsub.f32 %v2758, %v2887
        %v2930 = vsub.f32 %v2760, %v2850
        %v2931 = vsub.f32 %v2762, %v2887
        %v2932 = vsub.f32 %v2766, %v2850
        %v2933 = vsub.f32 %v2768, %v2887
        %v2934 = vsub.f32 %v2770, %v2850
        %v2935 = vsub.f32 %v2772, %v2887
        %v2936 = vsub.f32 %v2776, %v2850
        %v2937 = vsub.f32 %v2778, %v2887
        %v2938 = vsub.f32 %v2780, %v2850
        %v2939 = vsub.f32 %v2782, %v2887
        %v2940 = vsub.f32 %v2786, %v2850
        %v2941 = vsub.f32 %v2788, %v2887
        %v2942 = vsub.f32 %v2790, %v2850
        %v2943 = vsub.f32 %v2792, %v2887
        %v2944 = vsub.f32 %v2796, %v2850
        %v2945 = vsub.f32 %v2798, %v2887
        %v2946 = vsub.f32 %v2800, %v2850
        %v2947 = vsub.f32 %v2802, %v2887
        %v2948 = vsub.f32 %v2806, %v2850
        %v2949 = vsub.f32 %v2808, %v2887
        %v2950 = vsub.f32 %v2810, %v2850
        %v2951 = vsub.f32 %v2812, %v2887
        %v2952 = vmul.f32 %v2888, 1.442695
        %v2953 = vpow.pop %v2952
        %v2954 = vmul.f32 %v2889, 1.442695
        %v2955 = vpow.pop %v2954
        %v2956 = vmul.f32 %v2890, 1.442695
        %v2957 = vpow.pop %v2956
        %v2958 = vmul.f32 %v2891, 1.442695
        %v2959 = vpow.pop %v2958
        %v2960 = vmul.f32 %v2892, 1.442695
        %v2961 = vpow.pop %v2960
        %v2962 = vmul.f32 %v2893, 1.442695
        %v2963 = vpow.pop %v2962
        %v2964 = vmul.f32 %v2894, 1.442695
        %v2965 = vpow.pop %v2964
        %v2966 = vmul.f32 %v2895, 1.442695
        %v2967 = vpow.pop %v2966
        %v2968 = vmul.f32 %v2896, 1.442695
        %v2969 = vpow.pop %v2968
        %v2970 = vmul.f32 %v2897, 1.442695
        %v2971 = vpow.pop %v2970
        %v2972 = vmul.f32 %v2898, 1.442695
        %v2973 = vpow.pop %v2972
        %v2974 = vmul.f32 %v2899, 1.442695
        %v2975 = vpow.pop %v2974
        %v2976 = vmul.f32 %v2900, 1.442695
        %v2977 = vpow.pop %v2976
        %v2978 = vmul.f32 %v2901, 1.442695
        %v2979 = vpow.pop %v2978
        %v2980 = vmul.f32 %v2902, 1.442695
        %v2981 = vpow.pop %v2980
        %v2982 = vmul.f32 %v2903, 1.442695
        %v2983 = vpow.pop %v2982
        %v2984 = vmul.f32 %v2904, 1.442695
        %v2985 = vpow.pop %v2984
        %v2986 = vmul.f32 %v2905, 1.442695
        %v2987 = vpow.pop %v2986
        %v2988 = vmul.f32 %v2906, 1.442695
        %v2989 = vpow.pop %v2988
        %v2990 = vmul.f32 %v2907, 1.442695
        %v2991 = vpow.pop %v2990
        %v2992 = vmul.f32 %v2908, 1.442695
        %v2993 = vpow.pop %v2992
        %v2994 = vmul.f32 %v2909, 1.442695
        %v2995 = vpow.pop %v2994
        %v2996 = vmul.f32 %v2910, 1.442695
        %v2997 = vpow.pop %v2996
        %v2998 = vmul.f32 %v2911, 1.442695
        %v2999 = vpow.pop %v2998
        %v3000 = vmul.f32 %v2912, 1.442695
        %v3001 = vpow.pop %v3000
        %v3002 = vmul.f32 %v2913, 1.442695
        %v3003 = vpow.pop %v3002
        %v3004 = vmul.f32 %v2914, 1.442695
        %v3005 = vpow.pop %v3004
        %v3006 = vmul.f32 %v2915, 1.442695
        %v3007 = vpow.pop %v3006
        %v3008 = vmul.f32 %v2916, 1.442695
        %v3009 = vpow.pop %v3008
        %v3010 = vmul.f32 %v2917, 1.442695
        %v3011 = vpow.pop %v3010
        %v3012 = vmul.f32 %v2918, 1.442695
        %v3013 = vpow.pop %v3012
        %v3014 = vmul.f32 %v2919, 1.442695
        %v3015 = vpow.pop %v3014
        %v3016 = vmul.f32 %v2920, 1.442695
        %v3017 = vpow.pop %v3016
        %v3018 = vmul.f32 %v2921, 1.442695
        %v3019 = vpow.pop %v3018
        %v3020 = vmul.f32 %v2922, 1.442695
        %v3021 = vpow.pop %v3020
        %v3022 = vmul.f32 %v2923, 1.442695
        %v3023 = vpow.pop %v3022
        %v3024 = vmul.f32 %v2924, 1.442695
        %v3025 = vpow.pop %v3024
        %v3026 = vmul.f32 %v2925, 1.442695
        %v3027 = vpow.pop %v3026
        %v3028 = vmul.f32 %v2926, 1.442695
        %v3029 = vpow.pop %v3028
        %v3030 = vmul.f32 %v2927, 1.442695
        %v3031 = vpow.pop %v3030
        %v3032 = vmul.f32 %v2928, 1.442695
        %v3033 = vpow.pop %v3032
        %v3034 = vmul.f32 %v2929, 1.442695
        %v3035 = vpow.pop %v3034
        %v3036 = vmul.f32 %v2930, 1.442695
        %v3037 = vpow.pop %v3036
        %v3038 = vmul.f32 %v2931, 1.442695
        %v3039 = vpow.pop %v3038
        %v3040 = vmul.f32 %v2932, 1.442695
        %v3041 = vpow.pop %v3040
        %v3042 = vmul.f32 %v2933, 1.442695
        %v3043 = vpow.pop %v3042
        %v3044 = vmul.f32 %v2934, 1.442695
        %v3045 = vpow.pop %v3044
        %v3046 = vmul.f32 %v2935, 1.442695
        %v3047 = vpow.pop %v3046
        %v3048 = vmul.f32 %v2936, 1.442695
        %v3049 = vpow.pop %v3048
        %v3050 = vmul.f32 %v2937, 1.442695
        %v3051 = vpow.pop %v3050
        %v3052 = vmul.f32 %v2938, 1.442695
        %v3053 = vpow.pop %v3052
        %v3054 = vmul.f32 %v2939, 1.442695
        %v3055 = vpow.pop %v3054
        %v3056 = vmul.f32 %v2940, 1.442695
        %v3057 = vpow.pop %v3056
        %v3058 = vmul.f32 %v2941, 1.442695
        %v3059 = vpow.pop %v3058
        %v3060 = vmul.f32 %v2942, 1.442695
        %v3061 = vpow.pop %v3060
        %v3062 = vmul.f32 %v2943, 1.442695
        %v3063 = vpow.pop %v3062
        %v3064 = vmul.f32 %v2944, 1.442695
        %v3065 = vpow.pop %v3064
        %v3066 = vmul.f32 %v2945, 1.442695
        %v3067 = vpow.pop %v3066
        %v3068 = vmul.f32 %v2946, 1.442695
        %v3069 = vpow.pop %v3068
        %v3070 = vmul.f32 %v2947, 1.442695
        %v3071 = vpow.pop %v3070
        %v3072 = vmul.f32 %v2948, 1.442695
        %v3073 = vpow.pop %v3072
        %v3074 = vmul.f32 %v2949, 1.442695
        %v3075 = vpow.pop %v3074
        %v3076 = vmul.f32 %v2950, 1.442695
        %v3077 = vpow.pop %v3076
        %v3078 = vmul.f32 %v2951, 1.442695
        %v3079 = vpow.pop %v3078
        %v3080 = vadd.f32 %v2953, %v2957
        %v3081 = vadd.f32 %v3080, %v2961
        %v3082 = vadd.f32 %v3081, %v2965
        %v3083 = vadd.f32 %v3082, %v2969
        %v3084 = vadd.f32 %v3083, %v2973
        %v3085 = vadd.f32 %v3084, %v2977
        %v3086 = vadd.f32 %v3085, %v2981
        %v3087 = vadd.f32 %v3086, %v2985
        %v3088 = vadd.f32 %v3087, %v2989
        %v3089 = vadd.f32 %v3088, %v2993
        %v3090 = vadd.f32 %v3089, %v2997
        %v3091 = vadd.f32 %v3090, %v3001
        %v3092 = vadd.f32 %v3091, %v3005
        %v3093 = vadd.f32 %v3092, %v3009
        %v3094 = vadd.f32 %v3093, %v3013
        %v3095 = vadd.f32 %v3094, %v3017
        %v3096 = vadd.f32 %v3095, %v3021
        %v3097 = vadd.f32 %v3096, %v3025
        %v3098 = vadd.f32 %v3097, %v3029
        %v3099 = vadd.f32 %v3098, %v3033
        %v3100 = vadd.f32 %v3099, %v3037
        %v3101 = vadd.f32 %v3100, %v3041
        %v3102 = vadd.f32 %v3101, %v3045
        %v3103 = vadd.f32 %v3102, %v3049
        %v3104 = vadd.f32 %v3103, %v3053
        %v3105 = vadd.f32 %v3104, %v3057
        %v3106 = vadd.f32 %v3105, %v3061
        %v3107 = vadd.f32 %v3106, %v3065
        %v3108 = vadd.f32 %v3107, %v3069
        %v3109 = vadd.f32 %v3108, %v3073
        %v3110 = vadd.f32 %v3109, %v3077
        %v3111 = vrot.slane %v3110, 4
        %v3112 = vadd.f32 %v3110, %v3111
        %v3113 = vrot.slane %v3112, 2
        %v3114 = vadd.f32 %v3112, %v3113
        %v3115 = vrot.slane %v3114, 1
        %v3116 = vadd.f32 %v3114, %v3115
        %v3117 = vadd.f32 %v2955, %v2959
        %v3118 = vadd.f32 %v3117, %v2963
        %v3119 = vadd.f32 %v3118, %v2967
        %v3120 = vadd.f32 %v3119, %v2971
        %v3121 = vadd.f32 %v3120, %v2975
        %v3122 = vadd.f32 %v3121, %v2979
        %v3123 = vadd.f32 %v3122, %v2983
        %v3124 = vadd.f32 %v3123, %v2987
        %v3125 = vadd.f32 %v3124, %v2991
        %v3126 = vadd.f32 %v3125, %v2995
        %v3127 = vadd.f32 %v3126, %v2999
        %v3128 = vadd.f32 %v3127, %v3003
        %v3129 = vadd.f32 %v3128, %v3007
        %v3130 = vadd.f32 %v3129, %v3011
        %v3131 = vadd.f32 %v3130, %v3015
        %v3132 = vadd.f32 %v3131, %v3019
        %v3133 = vadd.f32 %v3132, %v3023
        %v3134 = vadd.f32 %v3133, %v3027
        %v3135 = vadd.f32 %v3134, %v3031
        %v3136 = vadd.f32 %v3135, %v3035
        %v3137 = vadd.f32 %v3136, %v3039
        %v3138 = vadd.f32 %v3137, %v3043
        %v3139 = vadd.f32 %v3138, %v3047
        %v3140 = vadd.f32 %v3139, %v3051
        %v3141 = vadd.f32 %v3140, %v3055
        %v3142 = vadd.f32 %v3141, %v3059
        %v3143 = vadd.f32 %v3142, %v3063
        %v3144 = vadd.f32 %v3143, %v3067
        %v3145 = vadd.f32 %v3144, %v3071
        %v3146 = vadd.f32 %v3145, %v3075
        %v3147 = vadd.f32 %v3146, %v3079
        %v3148 = vrot.slane %v3147, 4
        %v3149 = vadd.f32 %v3147, %v3148
        %v3150 = vrot.slane %v3149, 2
        %v3151 = vadd.f32 %v3149, %v3150
        %v3152 = vrot.slane %v3151, 1
        %v3153 = vadd.f32 %v3151, %v3152
        %v3154 = vpack.c.bf16 %v2957, %v2953
        %v3155 = vpack.c.bf16 %v2959, %v2955
        %v3156 = vpack.c.bf16 %v2965, %v2961
        %v3157 = vpack.c.bf16 %v2967, %v2963
        %v3158 = vpack.c.bf16 %v2973, %v2969
        %v3159 = vpack.c.bf16 %v2975, %v2971
        %v3160 = vpack.c.bf16 %v2981, %v2977
        %v3161 = vpack.c.bf16 %v2983, %v2979
        %v3162 = vpack.c.bf16 %v2989, %v2985
        %v3163 = vpack.c.bf16 %v2991, %v2987
        %v3164 = vpack.c.bf16 %v2997, %v2993
        %v3165 = vpack.c.bf16 %v2999, %v2995
        %v3166 = vpack.c.bf16 %v3005, %v3001
        %v3167 = vpack.c.bf16 %v3007, %v3003
        %v3168 = vpack.c.bf16 %v3013, %v3009
        %v3169 = vpack.c.bf16 %v3015, %v3011
        %v3170 = vpack.c.bf16 %v3021, %v3017
        %v3171 = vpack.c.bf16 %v3023, %v3019
        %v3172 = vpack.c.bf16 %v3029, %v3025
        %v3173 = vpack.c.bf16 %v3031, %v3027
        %v3174 = vpack.c.bf16 %v3037, %v3033
        %v3175 = vpack.c.bf16 %v3039, %v3035
        %v3176 = vpack.c.bf16 %v3045, %v3041
        %v3177 = vpack.c.bf16 %v3047, %v3043
        %v3178 = vpack.c.bf16 %v3053, %v3049
        %v3179 = vpack.c.bf16 %v3055, %v3051
        %v3180 = vpack.c.bf16 %v3061, %v3057
        %v3181 = vpack.c.bf16 %v3063, %v3059
        %v3182 = vpack.c.bf16 %v3069, %v3065
        %v3183 = vpack.c.bf16 %v3071, %v3067
        %v3184 = vpack.c.bf16 %v3077, %v3073
        %v3185 = vpack.c.bf16 %v3079, %v3075
        %v3188 = vrot.slane %v1825, 2
        %v3189 = vrot.slane %v1826, 2
        %3192 = vmatprep.subr.bf16.mxu0 %v3155
        %3193 = vmatpush1.bf16.msra.mxu0 %v3154
        %3194 = vmatprep.subr.bf16.mxu0 %v3157
        %3195 = vmatpush1.bf16.msra.mxu0 %v3156
        %3196 = vmatprep.subr.bf16.mxu0 %v3159
        %3197 = vmatpush1.bf16.msra.mxu0 %v3158
        %3198 = vmatprep.subr.bf16.mxu0 %v3161
        %3199 = vmatpush1.bf16.msra.mxu0 %v3160
        %3200 = vmatprep.subr.bf16.mxu0 %v3163
        %3201 = vmatpush1.bf16.msra.mxu0 %v3162
        %3202 = vmatprep.subr.bf16.mxu0 %v3165
        %3203 = vmatpush1.bf16.msra.mxu0 %v3164
        %3204 = vmatprep.subr.bf16.mxu0 %v3167
        %3205 = vmatpush1.bf16.msra.mxu0 %v3166
        %3206 = vmatprep.subr.bf16.mxu0 %v3169
        %3207 = vmatpush1.bf16.msra.mxu0 %v3168
        %3208 = vmatprep.subr.bf16.mxu0 %v3171
        %3209 = vmatpush1.bf16.msra.mxu0 %v3170
        %3210 = vmatprep.subr.bf16.mxu0 %v3173
        %3211 = vmatpush1.bf16.msra.mxu0 %v3172
        %3212 = vmatprep.subr.bf16.mxu0 %v3175
        %3213 = vmatpush1.bf16.msra.mxu0 %v3174
        %3214 = vmatprep.subr.bf16.mxu0 %v3177
        %3215 = vmatpush1.bf16.msra.mxu0 %v3176
        %3216 = vmatprep.subr.bf16.mxu0 %v3179
        %3217 = vmatpush1.bf16.msra.mxu0 %v3178
        %3218 = vmatprep.subr.bf16.mxu0 %v3181
        %3219 = vmatpush1.bf16.msra.mxu0 %v3180
        %3220 = vmatprep.subr.bf16.mxu0 %v3183
        %3221 = vmatpush1.bf16.msra.mxu0 %v3182
        %3222 = vmatprep.subr.bf16.mxu0 %v3185
        %3223 = vmatpush1.bf16.msra.mxu0 %v3184
        %3224 = vmatprep.mubr.bf16.mxu0 %v3189
        %3225 = vmatmul.mubr.bf16.gmra.mrb[0].mxu0 %v3188
        %v3226 = vpop.f32.mrb[0].mxu0
        %v3227 = vadd.f32 0.0, %v3226
        %v3228 = vpop.f32.mrb[0].mxu0
        %v3229 = vadd.f32 0.0, %v3228
        %v3230 = vpop.f32.mrb[0].mxu0
        %v3231 = vpop.f32.mrb[0].mxu0
        %3232 = vdwg.mxu0
        %v3233 = vrcp.pop %v3116
        %v3234 = vrcp.pop %v3153
        %v3235 = vmul.f32 %v3227, %v3233
        %v3236 = vmul.f32 %v3229, %v3234
        %v3239 = vrot.slane %v3235, 4
        %v3240 = vrot.slane %v3236, 4
        %3243 = vst [vmem:[#allocation2 + $0x10] sm:$0xf0] %v3239
        %3244 = vst [vmem:[#allocation2 + $0x18] sm:$0xf0] %v3240
        %v3245 = vmul.f32 %v343, 0.5
        %v3246 = vmul.f32 %v345, 0.5
        %v3247 = vpack.c.bf16 %v3245, %v3245
        %v3248 = vpack.c.bf16 %v3246, %v3246
        %v3249 = vpack.c.bf16 %v363, %v363
        %v3250 = vpack.c.bf16 %v365, %v365
        %v3251 = vpack.c.bf16 %v383, %v383
        %v3252 = vpack.c.bf16 %v385, %v385
        %3253 = vxpose.xlu0.c.b16.start [1/8] %v3249, 128
        %3254 = vxpose.xlu0.c.b16.cont [2/8] 0, 128
        %3255 = vxpose.xlu0.c.b16.cont [3/8] 0, 128
        %3256 = vxpose.xlu0.c.b16.cont [4/8] 0, 128
        %3257 = vxpose.xlu0.c.b16.cont [5/8] 0, 128
        %3258 = vxpose.xlu0.c.b16.cont [6/8] 0, 128
        %3259 = vxpose.xlu0.c.b16.cont [7/8] 0, 128
        %3260 = vxpose.xlu0.c.b16.end [8/8] 0, 128
        %v3261 = vpop.trf.xlu0
        %v3262 = vpop.trf.xlu0
        %v3263 = vpop.trf.xlu0
        %v3264 = vpop.trf.xlu0
        %v3265 = vpop.trf.xlu0
        %v3266 = vpop.trf.xlu0
        %v3267 = vpop.trf.xlu0
        %v3268 = vpop.trf.xlu0
        %3269 = vxpose.xlu0.c.b16.start [1/8] %v3250, 128
        %3270 = vxpose.xlu0.c.b16.cont [2/8] 0, 128
        %3271 = vxpose.xlu0.c.b16.cont [3/8] 0, 128
        %3272 = vxpose.xlu0.c.b16.cont [4/8] 0, 128
        %3273 = vxpose.xlu0.c.b16.cont [5/8] 0, 128
        %3274 = vxpose.xlu0.c.b16.cont [6/8] 0, 128
        %3275 = vxpose.xlu0.c.b16.cont [7/8] 0, 128
        %3276 = vxpose.xlu0.c.b16.end [8/8] 0, 128
        %v3277 = vpop.trf.xlu0
        %v3278 = vpop.trf.xlu0
        %v3279 = vpop.trf.xlu0
        %v3280 = vpop.trf.xlu0
        %v3281 = vpop.trf.xlu0
        %v3282 = vpop.trf.xlu0
        %v3283 = vpop.trf.xlu0
        %v3284 = vpop.trf.xlu0
        %v3286 = vsel %vm431, %v3261, 0
        %v3289 = vsel %vm431, %v3262, 0
        %v3292 = vsel %vm431, %v3263, 0
        %v3295 = vsel %vm431, %v3264, 0
        %v3298 = vsel %vm431, %v3265, 0
        %v3301 = vsel %vm431, %v3266, 0
        %v3304 = vsel %vm431, %v3267, 0
        %v3307 = vsel %vm431, %v3268, 0
        %v3310 = vsel %vm431, %v3277, 0
        %v3313 = vsel %vm431, %v3278, 0
        %v3316 = vsel %vm431, %v3279, 0
        %v3319 = vsel %vm431, %v3280, 0
        %v3322 = vsel %vm431, %v3281, 0
        %v3325 = vsel %vm431, %v3282, 0
        %v3328 = vsel %vm431, %v3283, 0
        %v3331 = vsel %vm431, %v3284, 0
        %v3334 = vsel %vm480, %v3247, 0
        %v3337 = vsel %vm480, %v3248, 0
        %3339 = vmatprep.subr.bf16.mxu0 %v3337
        %3340 = vmatpush1.bf16.msra.mxu0 %v3334
        %3341 = vmatprep.subr.bf16.mxu0 0
        %3342 = vmatpush1.bf16.msra.mxu0 0
        %3343 = vmatprep.subr.bf16.mxu0 0
        %3344 = vmatpush1.bf16.msra.mxu0 0
        %3345 = vmatprep.subr.bf16.mxu0 0
        %3346 = vmatpush1.bf16.msra.mxu0 0
        %3347 = vmatprep.subr.bf16.mxu0 0
        %3348 = vmatpush1.bf16.msra.mxu0 0
        %3349 = vmatprep.subr.bf16.mxu0 0
        %3350 = vmatpush1.bf16.msra.mxu0 0
        %3351 = vmatprep.subr.bf16.mxu0 0
        %3352 = vmatpush1.bf16.msra.mxu0 0
        %3353 = vmatprep.subr.bf16.mxu0 0
        %3354 = vmatpush1.bf16.msra.mxu0 0
        %3355 = vmatprep.subr.bf16.mxu0 0
        %3356 = vmatpush1.bf16.msra.mxu0 0
        %3357 = vmatprep.subr.bf16.mxu0 0
        %3358 = vmatpush1.bf16.msra.mxu0 0
        %3359 = vmatprep.subr.bf16.mxu0 0
        %3360 = vmatpush1.bf16.msra.mxu0 0
        %3361 = vmatprep.subr.bf16.mxu0 0
        %3362 = vmatpush1.bf16.msra.mxu0 0
        %3363 = vmatprep.subr.bf16.mxu0 0
        %3364 = vmatpush1.bf16.msra.mxu0 0
        %3365 = vmatprep.subr.bf16.mxu0 0
        %3366 = vmatpush1.bf16.msra.mxu0 0
        %3367 = vmatprep.subr.bf16.mxu0 0
        %3368 = vmatpush1.bf16.msra.mxu0 0
        %3369 = vmatprep.subr.bf16.mxu0 0
        %3370 = vmatpush1.bf16.msra.mxu0 0
        %3371 = vmatprep.mubr.bf16.mxu0 0
        %3372 = vmatmul.mubr.bf16.gmra.mrb[0].mxu0 %v3286
        %v3373 = vpop.f32.mrb[0].mxu0
        %v3374 = vadd.f32 0.0, %v3373
        %v3375 = vpop.f32.mrb[0].mxu0
        %v3376 = vadd.f32 0.0, %v3375
        %v3377 = vpop.f32.mrb[0].mxu0
        %v3378 = vadd.f32 0.0, %v3377
        %v3379 = vpop.f32.mrb[0].mxu0
        %v3380 = vadd.f32 0.0, %v3379
        %3381 = vmatprep.mubr.bf16.mxu0 0
        %3382 = vmatmul.mubr.bf16.gmra.mrb[0].mxu0 %v3289
        %v3383 = vpop.f32.mrb[0].mxu0
        %v3384 = vadd.f32 0.0, %v3383
        %v3385 = vpop.f32.mrb[0].mxu0
        %v3386 = vadd.f32 0.0, %v3385
        %v3387 = vpop.f32.mrb[0].mxu0
        %v3388 = vadd.f32 0.0, %v3387
        %v3389 = vpop.f32.mrb[0].mxu0
        %v3390 = vadd.f32 0.0, %v3389
        %3391 = vmatprep.mubr.bf16.mxu0 0
        %3392 = vmatmul.mubr.bf16.gmra.mrb[0].mxu0 %v3292
        %v3393 = vpop.f32.mrb[0].mxu0
        %v3394 = vadd.f32 0.0, %v3393
        %v3395 = vpop.f32.mrb[0].mxu0
        %v3396 = vadd.f32 0.0, %v3395
        %v3397 = vpop.f32.mrb[0].mxu0
        %v3398 = vadd.f32 0.0, %v3397
        %v3399 = vpop.f32.mrb[0].mxu0
        %v3400 = vadd.f32 0.0, %v3399
        %3401 = vmatprep.mubr.bf16.mxu0 0
        %3402 = vmatmul.mubr.bf16.gmra.mrb[0].mxu0 %v3295
        %v3403 = vpop.f32.mrb[0].mxu0
        %v3404 = vadd.f32 0.0, %v3403
        %v3405 = vpop.f32.mrb[0].mxu0
        %v3406 = vadd.f32 0.0, %v3405
        %v3407 = vpop.f32.mrb[0].mxu0
        %v3408 = vadd.f32 0.0, %v3407
        %v3409 = vpop.f32.mrb[0].mxu0
        %v3410 = vadd.f32 0.0, %v3409
        %3411 = vmatprep.mubr.bf16.mxu0 0
        %3412 = vmatmul.mubr.bf16.gmra.mrb[0].mxu0 %v3298
        %v3413 = vpop.f32.mrb[0].mxu0
        %v3414 = vadd.f32 0.0, %v3413
        %v3415 = vpop.f32.mrb[0].mxu0
        %v3416 = vadd.f32 0.0, %v3415
        %v3417 = vpop.f32.mrb[0].mxu0
        %v3418 = vadd.f32 0.0, %v3417
        %v3419 = vpop.f32.mrb[0].mxu0
        %v3420 = vadd.f32 0.0, %v3419
        %3421 = vmatprep.mubr.bf16.mxu0 0
        %3422 = vmatmul.mubr.bf16.gmra.mrb[0].mxu0 %v3301
        %v3423 = vpop.f32.mrb[0].mxu0
        %v3424 = vadd.f32 0.0, %v3423
        %v3425 = vpop.f32.mrb[0].mxu0
        %v3426 = vadd.f32 0.0, %v3425
        %v3427 = vpop.f32.mrb[0].mxu0
        %v3428 = vadd.f32 0.0, %v3427
        %v3429 = vpop.f32.mrb[0].mxu0
        %v3430 = vadd.f32 0.0, %v3429
        %3431 = vmatprep.mubr.bf16.mxu0 0
        %3432 = vmatmul.mubr.bf16.gmra.mrb[0].mxu0 %v3304
        %v3433 = vpop.f32.mrb[0].mxu0
        %v3434 = vadd.f32 0.0, %v3433
        %v3435 = vpop.f32.mrb[0].mxu0
        %v3436 = vadd.f32 0.0, %v3435
        %v3437 = vpop.f32.mrb[0].mxu0
        %v3438 = vadd.f32 0.0, %v3437
        %v3439 = vpop.f32.mrb[0].mxu0
        %v3440 = vadd.f32 0.0, %v3439
        %3441 = vmatprep.mubr.bf16.mxu0 0
        %3442 = vmatmul.mubr.bf16.gmra.mrb[0].mxu0 %v3307
        %v3443 = vpop.f32.mrb[0].mxu0
        %v3444 = vadd.f32 0.0, %v3443
        %v3445 = vpop.f32.mrb[0].mxu0
        %v3446 = vadd.f32 0.0, %v3445
        %v3447 = vpop.f32.mrb[0].mxu0
        %v3448 = vadd.f32 0.0, %v3447
        %v3449 = vpop.f32.mrb[0].mxu0
        %v3450 = vadd.f32 0.0, %v3449
        %3451 = vmatprep.mubr.bf16.mxu0 0
        %3452 = vmatmul.mubr.bf16.gmra.mrb[0].mxu0 %v3310
        %v3453 = vpop.f32.mrb[0].mxu0
        %v3454 = vadd.f32 0.0, %v3453
        %v3455 = vpop.f32.mrb[0].mxu0
        %v3456 = vadd.f32 0.0, %v3455
        %v3457 = vpop.f32.mrb[0].mxu0
        %v3458 = vadd.f32 0.0, %v3457
        %v3459 = vpop.f32.mrb[0].mxu0
        %v3460 = vadd.f32 0.0, %v3459
        %3461 = vmatprep.mubr.bf16.mxu0 0
        %3462 = vmatmul.mubr.bf16.gmra.mrb[0].mxu0 %v3313
        %v3463 = vpop.f32.mrb[0].mxu0
        %v3464 = vadd.f32 0.0, %v3463
        %v3465 = vpop.f32.mrb[0].mxu0
        %v3466 = vadd.f32 0.0, %v3465
        %v3467 = vpop.f32.mrb[0].mxu0
        %v3468 = vadd.f32 0.0, %v3467
        %v3469 = vpop.f32.mrb[0].mxu0
        %v3470 = vadd.f32 0.0, %v3469
        %3471 = vmatprep.mubr.bf16.mxu0 0
        %3472 = vmatmul.mubr.bf16.gmra.mrb[0].mxu0 %v3316
        %v3473 = vpop.f32.mrb[0].mxu0
        %v3474 = vadd.f32 0.0, %v3473
        %v3475 = vpop.f32.mrb[0].mxu0
        %v3476 = vadd.f32 0.0, %v3475
        %v3477 = vpop.f32.mrb[0].mxu0
        %v3478 = vadd.f32 0.0, %v3477
        %v3479 = vpop.f32.mrb[0].mxu0
        %v3480 = vadd.f32 0.0, %v3479
        %3481 = vmatprep.mubr.bf16.mxu0 0
        %3482 = vmatmul.mubr.bf16.gmra.mrb[0].mxu0 %v3319
        %v3483 = vpop.f32.mrb[0].mxu0
        %v3484 = vadd.f32 0.0, %v3483
        %v3485 = vpop.f32.mrb[0].mxu0
        %v3486 = vadd.f32 0.0, %v3485
        %v3487 = vpop.f32.mrb[0].mxu0
        %v3488 = vadd.f32 0.0, %v3487
        %v3489 = vpop.f32.mrb[0].mxu0
        %v3490 = vadd.f32 0.0, %v3489
        %3491 = vmatprep.mubr.bf16.mxu0 0
        %3492 = vmatmul.mubr.bf16.gmra.mrb[0].mxu0 %v3322
        %v3493 = vpop.f32.mrb[0].mxu0
        %v3494 = vadd.f32 0.0, %v3493
        %v3495 = vpop.f32.mrb[0].mxu0
        %v3496 = vadd.f32 0.0, %v3495
        %v3497 = vpop.f32.mrb[0].mxu0
        %v3498 = vadd.f32 0.0, %v3497
        %v3499 = vpop.f32.mrb[0].mxu0
        %v3500 = vadd.f32 0.0, %v3499
        %3501 = vmatprep.mubr.bf16.mxu0 0
        %3502 = vmatmul.mubr.bf16.gmra.mrb[0].mxu0 %v3325
        %v3503 = vpop.f32.mrb[0].mxu0
        %v3504 = vadd.f32 0.0, %v3503
        %v3505 = vpop.f32.mrb[0].mxu0
        %v3506 = vadd.f32 0.0, %v3505
        %v3507 = vpop.f32.mrb[0].mxu0
        %v3508 = vadd.f32 0.0, %v3507
        %v3509 = vpop.f32.mrb[0].mxu0
        %v3510 = vadd.f32 0.0, %v3509
        %3511 = vmatprep.mubr.bf16.mxu0 0
        %3512 = vmatmul.mubr.bf16.gmra.mrb[0].mxu0 %v3328
        %v3513 = vpop.f32.mrb[0].mxu0
        %v3514 = vadd.f32 0.0, %v3513
        %v3515 = vpop.f32.mrb[0].mxu0
        %v3516 = vadd.f32 0.0, %v3515
        %v3517 = vpop.f32.mrb[0].mxu0
        %v3518 = vadd.f32 0.0, %v3517
        %v3519 = vpop.f32.mrb[0].mxu0
        %v3520 = vadd.f32 0.0, %v3519
        %3521 = vmatprep.mubr.bf16.mxu0 0
        %3522 = vmatmul.mubr.bf16.gmra.mrb[0].mxu0 %v3331
        %v3523 = vpop.f32.mrb[0].mxu0
        %v3524 = vadd.f32 0.0, %v3523
        %v3525 = vpop.f32.mrb[0].mxu0
        %v3526 = vadd.f32 0.0, %v3525
        %v3527 = vpop.f32.mrb[0].mxu0
        %v3528 = vadd.f32 0.0, %v3527
        %v3529 = vpop.f32.mrb[0].mxu0
        %v3530 = vadd.f32 0.0, %v3529
        %3531 = vdwg.mxu0
        %v3532 = vmax.f32 %v3374, %v3384
        %v3533 = vmax.f32 %v3378, %v3388
        %v3534 = vmax.f32 %v3532, %v3394
        %v3535 = vmax.f32 %v3533, %v3398
        %v3536 = vmax.f32 %v3534, %v3404
        %v3537 = vmax.f32 %v3535, %v3408
        %v3538 = vmax.f32 %v3536, %v3414
        %v3539 = vmax.f32 %v3537, %v3418
        %v3540 = vmax.f32 %v3538, %v3424
        %v3541 = vmax.f32 %v3539, %v3428
        %v3542 = vmax.f32 %v3540, %v3434
        %v3543 = vmax.f32 %v3541, %v3438
        %v3544 = vmax.f32 %v3542, %v3444
        %v3545 = vmax.f32 %v3543, %v3448
        %v3546 = vmax.f32 %v3544, %v3454
        %v3547 = vmax.f32 %v3545, %v3458
        %v3548 = vmax.f32 %v3546, %v3464
        %v3549 = vmax.f32 %v3547, %v3468
        %v3550 = vmax.f32 %v3548, %v3474
        %v3551 = vmax.f32 %v3549, %v3478
        %v3552 = vmax.f32 %v3550, %v3484
        %v3553 = vmax.f32 %v3551, %v3488
        %v3554 = vmax.f32 %v3552, %v3494
        %v3555 = vmax.f32 %v3553, %v3498
        %v3556 = vmax.f32 %v3554, %v3504
        %v3557 = vmax.f32 %v3555, %v3508
        %v3558 = vmax.f32 %v3556, %v3514
        %v3559 = vmax.f32 %v3557, %v3518
        %v3560 = vmax.f32 %v3558, %v3524
        %v3561 = vmax.f32 %v3559, %v3528
        %v3562 = vmax.f32 %v3560, %v3561
        %v3563 = vrot.slane %v3562, 4
        %v3564 = vmax.f32 %v3562, %v3563
        %v3565 = vrot.slane %v3564, 2
        %v3566 = vmax.f32 %v3564, %v3565
        %v3567 = vrot.slane %v3566, 1
        %v3568 = vmax.f32 %v3566, %v3567
        %v3569 = vmax.f32 %v3376, %v3386
        %v3570 = vmax.f32 %v3380, %v3390
        %v3571 = vmax.f32 %v3569, %v3396
        %v3572 = vmax.f32 %v3570, %v3400
        %v3573 = vmax.f32 %v3571, %v3406
        %v3574 = vmax.f32 %v3572, %v3410
        %v3575 = vmax.f32 %v3573, %v3416
        %v3576 = vmax.f32 %v3574, %v3420
        %v3577 = vmax.f32 %v3575, %v3426
        %v3578 = vmax.f32 %v3576, %v3430
        %v3579 = vmax.f32 %v3577, %v3436
        %v3580 = vmax.f32 %v3578, %v3440
        %v3581 = vmax.f32 %v3579, %v3446
        %v3582 = vmax.f32 %v3580, %v3450
        %v3583 = vmax.f32 %v3581, %v3456
        %v3584 = vmax.f32 %v3582, %v3460
        %v3585 = vmax.f32 %v3583, %v3466
        %v3586 = vmax.f32 %v3584, %v3470
        %v3587 = vmax.f32 %v3585, %v3476
        %v3588 = vmax.f32 %v3586, %v3480
        %v3589 = vmax.f32 %v3587, %v3486
        %v3590 = vmax.f32 %v3588, %v3490
        %v3591 = vmax.f32 %v3589, %v3496
        %v3592 = vmax.f32 %v3590, %v3500
        %v3593 = vmax.f32 %v3591, %v3506
        %v3594 = vmax.f32 %v3592, %v3510
        %v3595 = vmax.f32 %v3593, %v3516
        %v3596 = vmax.f32 %v3594, %v3520
        %v3597 = vmax.f32 %v3595, %v3526
        %v3598 = vmax.f32 %v3596, %v3530
        %v3599 = vmax.f32 %v3597, %v3598
        %v3600 = vrot.slane %v3599, 4
        %v3601 = vmax.f32 %v3599, %v3600
        %v3602 = vrot.slane %v3601, 2
        %v3603 = vmax.f32 %v3601, %v3602
        %v3604 = vrot.slane %v3603, 1
        %v3605 = vmax.f32 %v3603, %v3604
        %v3606 = vsub.f32 %v3374, %v3568
        %v3607 = vsub.f32 %v3376, %v3605
        %v3608 = vsub.f32 %v3378, %v3568
        %v3609 = vsub.f32 %v3380, %v3605
        %v3610 = vsub.f32 %v3384, %v3568
        %v3611 = vsub.f32 %v3386, %v3605
        %v3612 = vsub.f32 %v3388, %v3568
        %v3613 = vsub.f32 %v3390, %v3605
        %v3614 = vsub.f32 %v3394, %v3568
        %v3615 = vsub.f32 %v3396, %v3605
        %v3616 = vsub.f32 %v3398, %v3568
        %v3617 = vsub.f32 %v3400, %v3605
        %v3618 = vsub.f32 %v3404, %v3568
        %v3619 = vsub.f32 %v3406, %v3605
        %v3620 = vsub.f32 %v3408, %v3568
        %v3621 = vsub.f32 %v3410, %v3605
        %v3622 = vsub.f32 %v3414, %v3568
        %v3623 = vsub.f32 %v3416, %v3605
        %v3624 = vsub.f32 %v3418, %v3568
        %v3625 = vsub.f32 %v3420, %v3605
        %v3626 = vsub.f32 %v3424, %v3568
        %v3627 = vsub.f32 %v3426, %v3605
        %v3628 = vsub.f32 %v3428, %v3568
        %v3629 = vsub.f32 %v3430, %v3605
        %v3630 = vsub.f32 %v3434, %v3568
        %v3631 = vsub.f32 %v3436, %v3605
        %v3632 = vsub.f32 %v3438, %v3568
        %v3633 = vsub.f32 %v3440, %v3605
        %v3634 = vsub.f32 %v3444, %v3568
        %v3635 = vsub.f32 %v3446, %v3605
        %v3636 = vsub.f32 %v3448, %v3568
        %v3637 = vsub.f32 %v3450, %v3605
        %v3638 = vsub.f32 %v3454, %v3568
        %v3639 = vsub.f32 %v3456, %v3605
        %v3640 = vsub.f32 %v3458, %v3568
        %v3641 = vsub.f32 %v3460, %v3605
        %v3642 = vsub.f32 %v3464, %v3568
        %v3643 = vsub.f32 %v3466, %v3605
        %v3644 = vsub.f32 %v3468, %v3568
        %v3645 = vsub.f32 %v3470, %v3605
        %v3646 = vsub.f32 %v3474, %v3568
        %v3647 = vsub.f32 %v3476, %v3605
        %v3648 = vsub.f32 %v3478, %v3568
        %v3649 = vsub.f32 %v3480, %v3605
        %v3650 = vsub.f32 %v3484, %v3568
        %v3651 = vsub.f32 %v3486, %v3605
        %v3652 = vsub.f32 %v3488, %v3568
        %v3653 = vsub.f32 %v3490, %v3605
        %v3654 = vsub.f32 %v3494, %v3568
        %v3655 = vsub.f32 %v3496, %v3605
        %v3656 = vsub.f32 %v3498, %v3568
        %v3657 = vsub.f32 %v3500, %v3605
        %v3658 = vsub.f32 %v3504, %v3568
        %v3659 = vsub.f32 %v3506, %v3605
        %v3660 = vsub.f32 %v3508, %v3568
        %v3661 = vsub.f32 %v3510, %v3605
        %v3662 = vsub.f32 %v3514, %v3568
        %v3663 = vsub.f32 %v3516, %v3605
        %v3664 = vsub.f32 %v3518, %v3568
        %v3665 = vsub.f32 %v3520, %v3605
        %v3666 = vsub.f32 %v3524, %v3568
        %v3667 = vsub.f32 %v3526, %v3605
        %v3668 = vsub.f32 %v3528, %v3568
        %v3669 = vsub.f32 %v3530, %v3605
        %v3670 = vmul.f32 %v3606, 1.442695
        %v3671 = vpow.pop %v3670
        %v3672 = vmul.f32 %v3607, 1.442695
        %v3673 = vpow.pop %v3672
        %v3674 = vmul.f32 %v3608, 1.442695
        %v3675 = vpow.pop %v3674
        %v3676 = vmul.f32 %v3609, 1.442695
        %v3677 = vpow.pop %v3676
        %v3678 = vmul.f32 %v3610, 1.442695
        %v3679 = vpow.pop %v3678
        %v3680 = vmul.f32 %v3611, 1.442695
        %v3681 = vpow.pop %v3680
        %v3682 = vmul.f32 %v3612, 1.442695
        %v3683 = vpow.pop %v3682
        %v3684 = vmul.f32 %v3613, 1.442695
        %v3685 = vpow.pop %v3684
        %v3686 = vmul.f32 %v3614, 1.442695
        %v3687 = vpow.pop %v3686
        %v3688 = vmul.f32 %v3615, 1.442695
        %v3689 = vpow.pop %v3688
        %v3690 = vmul.f32 %v3616, 1.442695
        %v3691 = vpow.pop %v3690
        %v3692 = vmul.f32 %v3617, 1.442695
        %v3693 = vpow.pop %v3692
        %v3694 = vmul.f32 %v3618, 1.442695
        %v3695 = vpow.pop %v3694
        %v3696 = vmul.f32 %v3619, 1.442695
        %v3697 = vpow.pop %v3696
        %v3698 = vmul.f32 %v3620, 1.442695
        %v3699 = vpow.pop %v3698
        %v3700 = vmul.f32 %v3621, 1.442695
        %v3701 = vpow.pop %v3700
        %v3702 = vmul.f32 %v3622, 1.442695
        %v3703 = vpow.pop %v3702
        %v3704 = vmul.f32 %v3623, 1.442695
        %v3705 = vpow.pop %v3704
        %v3706 = vmul.f32 %v3624, 1.442695
        %v3707 = vpow.pop %v3706
        %v3708 = vmul.f32 %v3625, 1.442695
        %v3709 = vpow.pop %v3708
        %v3710 = vmul.f32 %v3626, 1.442695
        %v3711 = vpow.pop %v3710
        %v3712 = vmul.f32 %v3627, 1.442695
        %v3713 = vpow.pop %v3712
        %v3714 = vmul.f32 %v3628, 1.442695
        %v3715 = vpow.pop %v3714
        %v3716 = vmul.f32 %v3629, 1.442695
        %v3717 = vpow.pop %v3716
        %v3718 = vmul.f32 %v3630, 1.442695
        %v3719 = vpow.pop %v3718
        %v3720 = vmul.f32 %v3631, 1.442695
        %v3721 = vpow.pop %v3720
        %v3722 = vmul.f32 %v3632, 1.442695
        %v3723 = vpow.pop %v3722
        %v3724 = vmul.f32 %v3633, 1.442695
        %v3725 = vpow.pop %v3724
        %v3726 = vmul.f32 %v3634, 1.442695
        %v3727 = vpow.pop %v3726
        %v3728 = vmul.f32 %v3635, 1.442695
        %v3729 = vpow.pop %v3728
        %v3730 = vmul.f32 %v3636, 1.442695
        %v3731 = vpow.pop %v3730
        %v3732 = vmul.f32 %v3637, 1.442695
        %v3733 = vpow.pop %v3732
        %v3734 = vmul.f32 %v3638, 1.442695
        %v3735 = vpow.pop %v3734
        %v3736 = vmul.f32 %v3639, 1.442695
        %v3737 = vpow.pop %v3736
        %v3738 = vmul.f32 %v3640, 1.442695
        %v3739 = vpow.pop %v3738
        %v3740 = vmul.f32 %v3641, 1.442695
        %v3741 = vpow.pop %v3740
        %v3742 = vmul.f32 %v3642, 1.442695
        %v3743 = vpow.pop %v3742
        %v3744 = vmul.f32 %v3643, 1.442695
        %v3745 = vpow.pop %v3744
        %v3746 = vmul.f32 %v3644, 1.442695
        %v3747 = vpow.pop %v3746
        %v3748 = vmul.f32 %v3645, 1.442695
        %v3749 = vpow.pop %v3748
        %v3750 = vmul.f32 %v3646, 1.442695
        %v3751 = vpow.pop %v3750
        %v3752 = vmul.f32 %v3647, 1.442695
        %v3753 = vpow.pop %v3752
        %v3754 = vmul.f32 %v3648, 1.442695
        %v3755 = vpow.pop %v3754
        %v3756 = vmul.f32 %v3649, 1.442695
        %v3757 = vpow.pop %v3756
        %v3758 = vmul.f32 %v3650, 1.442695
        %v3759 = vpow.pop %v3758
        %v3760 = vmul.f32 %v3651, 1.442695
        %v3761 = vpow.pop %v3760
        %v3762 = vmul.f32 %v3652, 1.442695
        %v3763 = vpow.pop %v3762
        %v3764 = vmul.f32 %v3653, 1.442695
        %v3765 = vpow.pop %v3764
        %v3766 = vmul.f32 %v3654, 1.442695
        %v3767 = vpow.pop %v3766
        %v3768 = vmul.f32 %v3655, 1.442695
        %v3769 = vpow.pop %v3768
        %v3770 = vmul.f32 %v3656, 1.442695
        %v3771 = vpow.pop %v3770
        %v3772 = vmul.f32 %v3657, 1.442695
        %v3773 = vpow.pop %v3772
        %v3774 = vmul.f32 %v3658, 1.442695
        %v3775 = vpow.pop %v3774
        %v3776 = vmul.f32 %v3659, 1.442695
        %v3777 = vpow.pop %v3776
        %v3778 = vmul.f32 %v3660, 1.442695
        %v3779 = vpow.pop %v3778
        %v3780 = vmul.f32 %v3661, 1.442695
        %v3781 = vpow.pop %v3780
        %v3782 = vmul.f32 %v3662, 1.442695
        %v3783 = vpow.pop %v3782
        %v3784 = vmul.f32 %v3663, 1.442695
        %v3785 = vpow.pop %v3784
        %v3786 = vmul.f32 %v3664, 1.442695
        %v3787 = vpow.pop %v3786
        %v3788 = vmul.f32 %v3665, 1.442695
        %v3789 = vpow.pop %v3788
        %v3790 = vmul.f32 %v3666, 1.442695
        %v3791 = vpow.pop %v3790
        %v3792 = vmul.f32 %v3667, 1.442695
        %v3793 = vpow.pop %v3792
        %v3794 = vmul.f32 %v3668, 1.442695
        %v3795 = vpow.pop %v3794
        %v3796 = vmul.f32 %v3669, 1.442695
        %v3797 = vpow.pop %v3796
        %v3798 = vadd.f32 %v3671, %v3675
        %v3799 = vadd.f32 %v3798, %v3679
        %v3800 = vadd.f32 %v3799, %v3683
        %v3801 = vadd.f32 %v3800, %v3687
        %v3802 = vadd.f32 %v3801, %v3691
        %v3803 = vadd.f32 %v3802, %v3695
        %v3804 = vadd.f32 %v3803, %v3699
        %v3805 = vadd.f32 %v3804, %v3703
        %v3806 = vadd.f32 %v3805, %v3707
        %v3807 = vadd.f32 %v3806, %v3711
        %v3808 = vadd.f32 %v3807, %v3715
        %v3809 = vadd.f32 %v3808, %v3719
        %v3810 = vadd.f32 %v3809, %v3723
        %v3811 = vadd.f32 %v3810, %v3727
        %v3812 = vadd.f32 %v3811, %v3731
        %v3813 = vadd.f32 %v3812, %v3735
        %v3814 = vadd.f32 %v3813, %v3739
        %v3815 = vadd.f32 %v3814, %v3743
        %v3816 = vadd.f32 %v3815, %v3747
        %v3817 = vadd.f32 %v3816, %v3751
        %v3818 = vadd.f32 %v3817, %v3755
        %v3819 = vadd.f32 %v3818, %v3759
        %v3820 = vadd.f32 %v3819, %v3763
        %v3821 = vadd.f32 %v3820, %v3767
        %v3822 = vadd.f32 %v3821, %v3771
        %v3823 = vadd.f32 %v3822, %v3775
        %v3824 = vadd.f32 %v3823, %v3779
        %v3825 = vadd.f32 %v3824, %v3783
        %v3826 = vadd.f32 %v3825, %v3787
        %v3827 = vadd.f32 %v3826, %v3791
        %v3828 = vadd.f32 %v3827, %v3795
        %v3829 = vrot.slane %v3828, 4
        %v3830 = vadd.f32 %v3828, %v3829
        %v3831 = vrot.slane %v3830, 2
        %v3832 = vadd.f32 %v3830, %v3831
        %v3833 = vrot.slane %v3832, 1
        %v3834 = vadd.f32 %v3832, %v3833
        %v3835 = vadd.f32 %v3673, %v3677
        %v3836 = vadd.f32 %v3835, %v3681
        %v3837 = vadd.f32 %v3836, %v3685
        %v3838 = vadd.f32 %v3837, %v3689
        %v3839 = vadd.f32 %v3838, %v3693
        %v3840 = vadd.f32 %v3839, %v3697
        %v3841 = vadd.f32 %v3840, %v3701
        %v3842 = vadd.f32 %v3841, %v3705
        %v3843 = vadd.f32 %v3842, %v3709
        %v3844 = vadd.f32 %v3843, %v3713
        %v3845 = vadd.f32 %v3844, %v3717
        %v3846 = vadd.f32 %v3845, %v3721
        %v3847 = vadd.f32 %v3846, %v3725
        %v3848 = vadd.f32 %v3847, %v3729
        %v3849 = vadd.f32 %v3848, %v3733
        %v3850 = vadd.f32 %v3849, %v3737
        %v3851 = vadd.f32 %v3850, %v3741
        %v3852 = vadd.f32 %v3851, %v3745
        %v3853 = vadd.f32 %v3852, %v3749
        %v3854 = vadd.f32 %v3853, %v3753
        %v3855 = vadd.f32 %v3854, %v3757
        %v3856 = vadd.f32 %v3855, %v3761
        %v3857 = vadd.f32 %v3856, %v3765
        %v3858 = vadd.f32 %v3857, %v3769
        %v3859 = vadd.f32 %v3858, %v3773
        %v3860 = vadd.f32 %v3859, %v3777
        %v3861 = vadd.f32 %v3860, %v3781
        %v3862 = vadd.f32 %v3861, %v3785
        %v3863 = vadd.f32 %v3862, %v3789
        %v3864 = vadd.f32 %v3863, %v3793
        %v3865 = vadd.f32 %v3864, %v3797
        %v3866 = vrot.slane %v3865, 4
        %v3867 = vadd.f32 %v3865, %v3866
        %v3868 = vrot.slane %v3867, 2
        %v3869 = vadd.f32 %v3867, %v3868
        %v3870 = vrot.slane %v3869, 1
        %v3871 = vadd.f32 %v3869, %v3870
        %v3872 = vpack.c.bf16 %v3675, %v3671
        %v3873 = vpack.c.bf16 %v3677, %v3673
        %v3874 = vpack.c.bf16 %v3683, %v3679
        %v3875 = vpack.c.bf16 %v3685, %v3681
        %v3876 = vpack.c.bf16 %v3691, %v3687
        %v3877 = vpack.c.bf16 %v3693, %v3689
        %v3878 = vpack.c.bf16 %v3699, %v3695
        %v3879 = vpack.c.bf16 %v3701, %v3697
        %v3880 = vpack.c.bf16 %v3707, %v3703
        %v3881 = vpack.c.bf16 %v3709, %v3705
        %v3882 = vpack.c.bf16 %v3715, %v3711
        %v3883 = vpack.c.bf16 %v3717, %v3713
        %v3884 = vpack.c.bf16 %v3723, %v3719
        %v3885 = vpack.c.bf16 %v3725, %v3721
        %v3886 = vpack.c.bf16 %v3731, %v3727
        %v3887 = vpack.c.bf16 %v3733, %v3729
        %v3888 = vpack.c.bf16 %v3739, %v3735
        %v3889 = vpack.c.bf16 %v3741, %v3737
        %v3890 = vpack.c.bf16 %v3747, %v3743
        %v3891 = vpack.c.bf16 %v3749, %v3745
        %v3892 = vpack.c.bf16 %v3755, %v3751
        %v3893 = vpack.c.bf16 %v3757, %v3753
        %v3894 = vpack.c.bf16 %v3763, %v3759
        %v3895 = vpack.c.bf16 %v3765, %v3761
        %v3896 = vpack.c.bf16 %v3771, %v3767
        %v3897 = vpack.c.bf16 %v3773, %v3769
        %v3898 = vpack.c.bf16 %v3779, %v3775
        %v3899 = vpack.c.bf16 %v3781, %v3777
        %v3900 = vpack.c.bf16 %v3787, %v3783
        %v3901 = vpack.c.bf16 %v3789, %v3785
        %v3902 = vpack.c.bf16 %v3795, %v3791
        %v3903 = vpack.c.bf16 %v3797, %v3793
        %3904 = vmatprep.subr.bf16.mxu0 %v3873
        %3905 = vmatpush1.bf16.msra.mxu0 %v3872
        %3906 = vmatprep.subr.bf16.mxu0 %v3875
        %3907 = vmatpush1.bf16.msra.mxu0 %v3874
        %3908 = vmatprep.subr.bf16.mxu0 %v3877
        %3909 = vmatpush1.bf16.msra.mxu0 %v3876
        %3910 = vmatprep.subr.bf16.mxu0 %v3879
        %3911 = vmatpush1.bf16.msra.mxu0 %v3878
        %3912 = vmatprep.subr.bf16.mxu0 %v3881
        %3913 = vmatpush1.bf16.msra.mxu0 %v3880
        %3914 = vmatprep.subr.bf16.mxu0 %v3883
        %3915 = vmatpush1.bf16.msra.mxu0 %v3882
        %3916 = vmatprep.subr.bf16.mxu0 %v3885
        %3917 = vmatpush1.bf16.msra.mxu0 %v3884
        %3918 = vmatprep.subr.bf16.mxu0 %v3887
        %3919 = vmatpush1.bf16.msra.mxu0 %v3886
        %3920 = vmatprep.subr.bf16.mxu0 %v3889
        %3921 = vmatpush1.bf16.msra.mxu0 %v3888
        %3922 = vmatprep.subr.bf16.mxu0 %v3891
        %3923 = vmatpush1.bf16.msra.mxu0 %v3890
        %3924 = vmatprep.subr.bf16.mxu0 %v3893
        %3925 = vmatpush1.bf16.msra.mxu0 %v3892
        %3926 = vmatprep.subr.bf16.mxu0 %v3895
        %3927 = vmatpush1.bf16.msra.mxu0 %v3894
        %3928 = vmatprep.subr.bf16.mxu0 %v3897
        %3929 = vmatpush1.bf16.msra.mxu0 %v3896
        %3930 = vmatprep.subr.bf16.mxu0 %v3899
        %3931 = vmatpush1.bf16.msra.mxu0 %v3898
        %3932 = vmatprep.subr.bf16.mxu0 %v3901
        %3933 = vmatpush1.bf16.msra.mxu0 %v3900
        %3934 = vmatprep.subr.bf16.mxu0 %v3903
        %3935 = vmatpush1.bf16.msra.mxu0 %v3902
        %3936 = vmatprep.mubr.bf16.mxu0 %v3252
        %3937 = vmatmul.mubr.bf16.gmra.mrb[0].mxu0 %v3251
        %v3938 = vpop.f32.mrb[0].mxu0
        %v3939 = vadd.f32 0.0, %v3938
        %v3940 = vpop.f32.mrb[0].mxu0
        %v3941 = vadd.f32 0.0, %v3940
        %v3942 = vpop.f32.mrb[0].mxu0
        %v3943 = vpop.f32.mrb[0].mxu0
        %3944 = vdwg.mxu0
        %v3945 = vrcp.pop %v3834
        %v3946 = vrcp.pop %v3871
        %v3947 = vmul.f32 %v3939, %v3945
        %v3948 = vmul.f32 %v3941, %v3946
        %3949 = vst [vmem:[#allocation2 + $0x20] sm:$0xf] %v3947
        %3950 = vst [vmem:[#allocation2 + $0x28] sm:$0xf] %v3948
        %v3953 = vrot.slane %v3249, 2
        %v3954 = vrot.slane %v3250, 2
        %3957 = vxpose.xlu0.c.b16.start [1/8] %v3953, 128
        %3958 = vxpose.xlu0.c.b16.cont [2/8] 0, 128
        %3959 = vxpose.xlu0.c.b16.cont [3/8] 0, 128
        %3960 = vxpose.xlu0.c.b16.cont [4/8] 0, 128
        %3961 = vxpose.xlu0.c.b16.cont [5/8] 0, 128
        %3962 = vxpose.xlu0.c.b16.cont [6/8] 0, 128
        %3963 = vxpose.xlu0.c.b16.cont [7/8] 0, 128
        %3964 = vxpose.xlu0.c.b16.end [8/8] 0, 128
        %v3965 = vpop.trf.xlu0
        %v3966 = vpop.trf.xlu0
        %v3967 = vpop.trf.xlu0
        %v3968 = vpop.trf.xlu0
        %v3969 = vpop.trf.xlu0
        %v3970 = vpop.trf.xlu0
        %v3971 = vpop.trf.xlu0
        %v3972 = vpop.trf.xlu0
        %3973 = vxpose.xlu0.c.b16.start [1/8] %v3954, 128
        %3974 = vxpose.xlu0.c.b16.cont [2/8] 0, 128
        %3975 = vxpose.xlu0.c.b16.cont [3/8] 0, 128
        %3976 = vxpose.xlu0.c.b16.cont [4/8] 0, 128
        %3977 = vxpose.xlu0.c.b16.cont [5/8] 0, 128
        %3978 = vxpose.xlu0.c.b16.cont [6/8] 0, 128
        %3979 = vxpose.xlu0.c.b16.cont [7/8] 0, 128
        %3980 = vxpose.xlu0.c.b16.end [8/8] 0, 128
        %v3981 = vpop.trf.xlu0
        %v3982 = vpop.trf.xlu0
        %v3983 = vpop.trf.xlu0
        %v3984 = vpop.trf.xlu0
        %v3985 = vpop.trf.xlu0
        %v3986 = vpop.trf.xlu0
        %v3987 = vpop.trf.xlu0
        %v3988 = vpop.trf.xlu0
        %v3991 = vrot.slane %v3247, 2
        %v3992 = vrot.slane %v3248, 2
        %v3994 = vsel %vm431, %v3965, 0
        %v3997 = vsel %vm431, %v3966, 0
        %v4000 = vsel %vm431, %v3967, 0
        %v4003 = vsel %vm431, %v3968, 0
        %v4006 = vsel %vm431, %v3969, 0
        %v4009 = vsel %vm431, %v3970, 0
        %v4012 = vsel %vm431, %v3971, 0
        %v4015 = vsel %vm431, %v3972, 0
        %v4018 = vsel %vm431, %v3981, 0
        %v4021 = vsel %vm431, %v3982, 0
        %v4024 = vsel %vm431, %v3983, 0
        %v4027 = vsel %vm431, %v3984, 0
        %v4030 = vsel %vm431, %v3985, 0
        %v4033 = vsel %vm431, %v3986, 0
        %v4036 = vsel %vm431, %v3987, 0
        %v4039 = vsel %vm431, %v3988, 0
        %v4042 = vsel %vm480, %v3991, 0
        %v4045 = vsel %vm480, %v3992, 0
        %4047 = vmatprep.subr.bf16.mxu0 %v4045
        %4048 = vmatpush1.bf16.msra.mxu0 %v4042
        %4049 = vmatprep.subr.bf16.mxu0 0
        %4050 = vmatpush1.bf16.msra.mxu0 0
        %4051 = vmatprep.subr.bf16.mxu0 0
        %4052 = vmatpush1.bf16.msra.mxu0 0
        %4053 = vmatprep.subr.bf16.mxu0 0
        %4054 = vmatpush1.bf16.msra.mxu0 0
        %4055 = vmatprep.subr.bf16.mxu0 0
        %4056 = vmatpush1.bf16.msra.mxu0 0
        %4057 = vmatprep.subr.bf16.mxu0 0
        %4058 = vmatpush1.bf16.msra.mxu0 0
        %4059 = vmatprep.subr.bf16.mxu0 0
        %4060 = vmatpush1.bf16.msra.mxu0 0
        %4061 = vmatprep.subr.bf16.mxu0 0
        %4062 = vmatpush1.bf16.msra.mxu0 0
        %4063 = vmatprep.subr.bf16.mxu0 0
        %4064 = vmatpush1.bf16.msra.mxu0 0
        %4065 = vmatprep.subr.bf16.mxu0 0
        %4066 = vmatpush1.bf16.msra.mxu0 0
        %4067 = vmatprep.subr.bf16.mxu0 0
        %4068 = vmatpush1.bf16.msra.mxu0 0
        %4069 = vmatprep.subr.bf16.mxu0 0
        %4070 = vmatpush1.bf16.msra.mxu0 0
        %4071 = vmatprep.subr.bf16.mxu0 0
        %4072 = vmatpush1.bf16.msra.mxu0 0
        %4073 = vmatprep.subr.bf16.mxu0 0
        %4074 = vmatpush1.bf16.msra.mxu0 0
        %4075 = vmatprep.subr.bf16.mxu0 0
        %4076 = vmatpush1.bf16.msra.mxu0 0
        %4077 = vmatprep.subr.bf16.mxu0 0
        %4078 = vmatpush1.bf16.msra.mxu0 0
        %4079 = vmatprep.mubr.bf16.mxu0 0
        %4080 = vmatmul.mubr.bf16.gmra.mrb[0].mxu0 %v3994
        %v4081 = vpop.f32.mrb[0].mxu0
        %v4082 = vadd.f32 0.0, %v4081
        %v4083 = vpop.f32.mrb[0].mxu0
        %v4084 = vadd.f32 0.0, %v4083
        %v4085 = vpop.f32.mrb[0].mxu0
        %v4086 = vadd.f32 0.0, %v4085
        %v4087 = vpop.f32.mrb[0].mxu0
        %v4088 = vadd.f32 0.0, %v4087
        %4089 = vmatprep.mubr.bf16.mxu0 0
        %4090 = vmatmul.mubr.bf16.gmra.mrb[0].mxu0 %v3997
        %v4091 = vpop.f32.mrb[0].mxu0
        %v4092 = vadd.f32 0.0, %v4091
        %v4093 = vpop.f32.mrb[0].mxu0
        %v4094 = vadd.f32 0.0, %v4093
        %v4095 = vpop.f32.mrb[0].mxu0
        %v4096 = vadd.f32 0.0, %v4095
        %v4097 = vpop.f32.mrb[0].mxu0
        %v4098 = vadd.f32 0.0, %v4097
        %4099 = vmatprep.mubr.bf16.mxu0 0
        %4100 = vmatmul.mubr.bf16.gmra.mrb[0].mxu0 %v4000
        %v4101 = vpop.f32.mrb[0].mxu0
        %v4102 = vadd.f32 0.0, %v4101
        %v4103 = vpop.f32.mrb[0].mxu0
        %v4104 = vadd.f32 0.0, %v4103
        %v4105 = vpop.f32.mrb[0].mxu0
        %v4106 = vadd.f32 0.0, %v4105
        %v4107 = vpop.f32.mrb[0].mxu0
        %v4108 = vadd.f32 0.0, %v4107
        %4109 = vmatprep.mubr.bf16.mxu0 0
        %4110 = vmatmul.mubr.bf16.gmra.mrb[0].mxu0 %v4003
        %v4111 = vpop.f32.mrb[0].mxu0
        %v4112 = vadd.f32 0.0, %v4111
        %v4113 = vpop.f32.mrb[0].mxu0
        %v4114 = vadd.f32 0.0, %v4113
        %v4115 = vpop.f32.mrb[0].mxu0
        %v4116 = vadd.f32 0.0, %v4115
        %v4117 = vpop.f32.mrb[0].mxu0
        %v4118 = vadd.f32 0.0, %v4117
        %4119 = vmatprep.mubr.bf16.mxu0 0
        %4120 = vmatmul.mubr.bf16.gmra.mrb[0].mxu0 %v4006
        %v4121 = vpop.f32.mrb[0].mxu0
        %v4122 = vadd.f32 0.0, %v4121
        %v4123 = vpop.f32.mrb[0].mxu0
        %v4124 = vadd.f32 0.0, %v4123
        %v4125 = vpop.f32.mrb[0].mxu0
        %v4126 = vadd.f32 0.0, %v4125
        %v4127 = vpop.f32.mrb[0].mxu0
        %v4128 = vadd.f32 0.0, %v4127
        %4129 = vmatprep.mubr.bf16.mxu0 0
        %4130 = vmatmul.mubr.bf16.gmra.mrb[0].mxu0 %v4009
        %v4131 = vpop.f32.mrb[0].mxu0
        %v4132 = vadd.f32 0.0, %v4131
        %v4133 = vpop.f32.mrb[0].mxu0
        %v4134 = vadd.f32 0.0, %v4133
        %v4135 = vpop.f32.mrb[0].mxu0
        %v4136 = vadd.f32 0.0, %v4135
        %v4137 = vpop.f32.mrb[0].mxu0
        %v4138 = vadd.f32 0.0, %v4137
        %4139 = vmatprep.mubr.bf16.mxu0 0
        %4140 = vmatmul.mubr.bf16.gmra.mrb[0].mxu0 %v4012
        %v4141 = vpop.f32.mrb[0].mxu0
        %v4142 = vadd.f32 0.0, %v4141
        %v4143 = vpop.f32.mrb[0].mxu0
        %v4144 = vadd.f32 0.0, %v4143
        %v4145 = vpop.f32.mrb[0].mxu0
        %v4146 = vadd.f32 0.0, %v4145
        %v4147 = vpop.f32.mrb[0].mxu0
        %v4148 = vadd.f32 0.0, %v4147
        %4149 = vmatprep.mubr.bf16.mxu0 0
        %4150 = vmatmul.mubr.bf16.gmra.mrb[0].mxu0 %v4015
        %v4151 = vpop.f32.mrb[0].mxu0
        %v4152 = vadd.f32 0.0, %v4151
        %v4153 = vpop.f32.mrb[0].mxu0
        %v4154 = vadd.f32 0.0, %v4153
        %v4155 = vpop.f32.mrb[0].mxu0
        %v4156 = vadd.f32 0.0, %v4155
        %v4157 = vpop.f32.mrb[0].mxu0
        %v4158 = vadd.f32 0.0, %v4157
        %4159 = vmatprep.mubr.bf16.mxu0 0
        %4160 = vmatmul.mubr.bf16.gmra.mrb[0].mxu0 %v4018
        %v4161 = vpop.f32.mrb[0].mxu0
        %v4162 = vadd.f32 0.0, %v4161
        %v4163 = vpop.f32.mrb[0].mxu0
        %v4164 = vadd.f32 0.0, %v4163
        %v4165 = vpop.f32.mrb[0].mxu0
        %v4166 = vadd.f32 0.0, %v4165
        %v4167 = vpop.f32.mrb[0].mxu0
        %v4168 = vadd.f32 0.0, %v4167
        %4169 = vmatprep.mubr.bf16.mxu0 0
        %4170 = vmatmul.mubr.bf16.gmra.mrb[0].mxu0 %v4021
        %v4171 = vpop.f32.mrb[0].mxu0
        %v4172 = vadd.f32 0.0, %v4171
        %v4173 = vpop.f32.mrb[0].mxu0
        %v4174 = vadd.f32 0.0, %v4173
        %v4175 = vpop.f32.mrb[0].mxu0
        %v4176 = vadd.f32 0.0, %v4175
        %v4177 = vpop.f32.mrb[0].mxu0
        %v4178 = vadd.f32 0.0, %v4177
        %4179 = vmatprep.mubr.bf16.mxu0 0
        %4180 = vmatmul.mubr.bf16.gmra.mrb[0].mxu0 %v4024
        %v4181 = vpop.f32.mrb[0].mxu0
        %v4182 = vadd.f32 0.0, %v4181
        %v4183 = vpop.f32.mrb[0].mxu0
        %v4184 = vadd.f32 0.0, %v4183
        %v4185 = vpop.f32.mrb[0].mxu0
        %v4186 = vadd.f32 0.0, %v4185
        %v4187 = vpop.f32.mrb[0].mxu0
        %v4188 = vadd.f32 0.0, %v4187
        %4189 = vmatprep.mubr.bf16.mxu0 0
        %4190 = vmatmul.mubr.bf16.gmra.mrb[0].mxu0 %v4027
        %v4191 = vpop.f32.mrb[0].mxu0
        %v4192 = vadd.f32 0.0, %v4191
        %v4193 = vpop.f32.mrb[0].mxu0
        %v4194 = vadd.f32 0.0, %v4193
        %v4195 = vpop.f32.mrb[0].mxu0
        %v4196 = vadd.f32 0.0, %v4195
        %v4197 = vpop.f32.mrb[0].mxu0
        %v4198 = vadd.f32 0.0, %v4197
        %4199 = vmatprep.mubr.bf16.mxu0 0
        %4200 = vmatmul.mubr.bf16.gmra.mrb[0].mxu0 %v4030
        %v4201 = vpop.f32.mrb[0].mxu0
        %v4202 = vadd.f32 0.0, %v4201
        %v4203 = vpop.f32.mrb[0].mxu0
        %v4204 = vadd.f32 0.0, %v4203
        %v4205 = vpop.f32.mrb[0].mxu0
        %v4206 = vadd.f32 0.0, %v4205
        %v4207 = vpop.f32.mrb[0].mxu0
        %v4208 = vadd.f32 0.0, %v4207
        %4209 = vmatprep.mubr.bf16.mxu0 0
        %4210 = vmatmul.mubr.bf16.gmra.mrb[0].mxu0 %v4033
        %v4211 = vpop.f32.mrb[0].mxu0
        %v4212 = vadd.f32 0.0, %v4211
        %v4213 = vpop.f32.mrb[0].mxu0
        %v4214 = vadd.f32 0.0, %v4213
        %v4215 = vpop.f32.mrb[0].mxu0
        %v4216 = vadd.f32 0.0, %v4215
        %v4217 = vpop.f32.mrb[0].mxu0
        %v4218 = vadd.f32 0.0, %v4217
        %4219 = vmatprep.mubr.bf16.mxu0 0
        %4220 = vmatmul.mubr.bf16.gmra.mrb[0].mxu0 %v4036
        %v4221 = vpop.f32.mrb[0].mxu0
        %v4222 = vadd.f32 0.0, %v4221
        %v4223 = vpop.f32.mrb[0].mxu0
        %v4224 = vadd.f32 0.0, %v4223
        %v4225 = vpop.f32.mrb[0].mxu0
        %v4226 = vadd.f32 0.0, %v4225
        %v4227 = vpop.f32.mrb[0].mxu0
        %v4228 = vadd.f32 0.0, %v4227
        %4229 = vmatprep.mubr.bf16.mxu0 0
        %4230 = vmatmul.mubr.bf16.gmra.mrb[0].mxu0 %v4039
        %v4231 = vpop.f32.mrb[0].mxu0
        %v4232 = vadd.f32 0.0, %v4231
        %v4233 = vpop.f32.mrb[0].mxu0
        %v4234 = vadd.f32 0.0, %v4233
        %v4235 = vpop.f32.mrb[0].mxu0
        %v4236 = vadd.f32 0.0, %v4235
        %v4237 = vpop.f32.mrb[0].mxu0
        %v4238 = vadd.f32 0.0, %v4237
        %4239 = vdwg.mxu0
        %v4240 = vmax.f32 %v4082, %v4092
        %v4241 = vmax.f32 %v4086, %v4096
        %v4242 = vmax.f32 %v4240, %v4102
        %v4243 = vmax.f32 %v4241, %v4106
        %v4244 = vmax.f32 %v4242, %v4112
        %v4245 = vmax.f32 %v4243, %v4116
        %v4246 = vmax.f32 %v4244, %v4122
        %v4247 = vmax.f32 %v4245, %v4126
        %v4248 = vmax.f32 %v4246, %v4132
        %v4249 = vmax.f32 %v4247, %v4136
        %v4250 = vmax.f32 %v4248, %v4142
        %v4251 = vmax.f32 %v4249, %v4146
        %v4252 = vmax.f32 %v4250, %v4152
        %v4253 = vmax.f32 %v4251, %v4156
        %v4254 = vmax.f32 %v4252, %v4162
        %v4255 = vmax.f32 %v4253, %v4166
        %v4256 = vmax.f32 %v4254, %v4172
        %v4257 = vmax.f32 %v4255, %v4176
        %v4258 = vmax.f32 %v4256, %v4182
        %v4259 = vmax.f32 %v4257, %v4186
        %v4260 = vmax.f32 %v4258, %v4192
        %v4261 = vmax.f32 %v4259, %v4196
        %v4262 = vmax.f32 %v4260, %v4202
        %v4263 = vmax.f32 %v4261, %v4206
        %v4264 = vmax.f32 %v4262, %v4212
        %v4265 = vmax.f32 %v4263, %v4216
        %v4266 = vmax.f32 %v4264, %v4222
        %v4267 = vmax.f32 %v4265, %v4226
        %v4268 = vmax.f32 %v4266, %v4232
        %v4269 = vmax.f32 %v4267, %v4236
        %v4270 = vmax.f32 %v4268, %v4269
        %v4271 = vrot.slane %v4270, 4
        %v4272 = vmax.f32 %v4270, %v4271
        %v4273 = vrot.slane %v4272, 2
        %v4274 = vmax.f32 %v4272, %v4273
        %v4275 = vrot.slane %v4274, 1
        %v4276 = vmax.f32 %v4274, %v4275
        %v4277 = vmax.f32 %v4084, %v4094
        %v4278 = vmax.f32 %v4088, %v4098
        %v4279 = vmax.f32 %v4277, %v4104
        %v4280 = vmax.f32 %v4278, %v4108
        %v4281 = vmax.f32 %v4279, %v4114
        %v4282 = vmax.f32 %v4280, %v4118
        %v4283 = vmax.f32 %v4281, %v4124
        %v4284 = vmax.f32 %v4282, %v4128
        %v4285 = vmax.f32 %v4283, %v4134
        %v4286 = vmax.f32 %v4284, %v4138
        %v4287 = vmax.f32 %v4285, %v4144
        %v4288 = vmax.f32 %v4286, %v4148
        %v4289 = vmax.f32 %v4287, %v4154
        %v4290 = vmax.f32 %v4288, %v4158
        %v4291 = vmax.f32 %v4289, %v4164
        %v4292 = vmax.f32 %v4290, %v4168
        %v4293 = vmax.f32 %v4291, %v4174
        %v4294 = vmax.f32 %v4292, %v4178
        %v4295 = vmax.f32 %v4293, %v4184
        %v4296 = vmax.f32 %v4294, %v4188
        %v4297 = vmax.f32 %v4295, %v4194
        %v4298 = vmax.f32 %v4296, %v4198
        %v4299 = vmax.f32 %v4297, %v4204
        %v4300 = vmax.f32 %v4298, %v4208
        %v4301 = vmax.f32 %v4299, %v4214
        %v4302 = vmax.f32 %v4300, %v4218
        %v4303 = vmax.f32 %v4301, %v4224
        %v4304 = vmax.f32 %v4302, %v4228
        %v4305 = vmax.f32 %v4303, %v4234
        %v4306 = vmax.f32 %v4304, %v4238
        %v4307 = vmax.f32 %v4305, %v4306
        %v4308 = vrot.slane %v4307, 4
        %v4309 = vmax.f32 %v4307, %v4308
        %v4310 = vrot.slane %v4309, 2
        %v4311 = vmax.f32 %v4309, %v4310
        %v4312 = vrot.slane %v4311, 1
        %v4313 = vmax.f32 %v4311, %v4312
        %v4314 = vsub.f32 %v4082, %v4276
        %v4315 = vsub.f32 %v4084, %v4313
        %v4316 = vsub.f32 %v4086, %v4276
        %v4317 = vsub.f32 %v4088, %v4313
        %v4318 = vsub.f32 %v4092, %v4276
        %v4319 = vsub.f32 %v4094, %v4313
        %v4320 = vsub.f32 %v4096, %v4276
        %v4321 = vsub.f32 %v4098, %v4313
        %v4322 = vsub.f32 %v4102, %v4276
        %v4323 = vsub.f32 %v4104, %v4313
        %v4324 = vsub.f32 %v4106, %v4276
        %v4325 = vsub.f32 %v4108, %v4313
        %v4326 = vsub.f32 %v4112, %v4276
        %v4327 = vsub.f32 %v4114, %v4313
        %v4328 = vsub.f32 %v4116, %v4276
        %v4329 = vsub.f32 %v4118, %v4313
        %v4330 = vsub.f32 %v4122, %v4276
        %v4331 = vsub.f32 %v4124, %v4313
        %v4332 = vsub.f32 %v4126, %v4276
        %v4333 = vsub.f32 %v4128, %v4313
        %v4334 = vsub.f32 %v4132, %v4276
        %v4335 = vsub.f32 %v4134, %v4313
        %v4336 = vsub.f32 %v4136, %v4276
        %v4337 = vsub.f32 %v4138, %v4313
        %v4338 = vsub.f32 %v4142, %v4276
        %v4339 = vsub.f32 %v4144, %v4313
        %v4340 = vsub.f32 %v4146, %v4276
        %v4341 = vsub.f32 %v4148, %v4313
        %v4342 = vsub.f32 %v4152, %v4276
        %v4343 = vsub.f32 %v4154, %v4313
        %v4344 = vsub.f32 %v4156, %v4276
        %v4345 = vsub.f32 %v4158, %v4313
        %v4346 = vsub.f32 %v4162, %v4276
        %v4347 = vsub.f32 %v4164, %v4313
        %v4348 = vsub.f32 %v4166, %v4276
        %v4349 = vsub.f32 %v4168, %v4313
        %v4350 = vsub.f32 %v4172, %v4276
        %v4351 = vsub.f32 %v4174, %v4313
        %v4352 = vsub.f32 %v4176, %v4276
        %v4353 = vsub.f32 %v4178, %v4313
        %v4354 = vsub.f32 %v4182, %v4276
        %v4355 = vsub.f32 %v4184, %v4313
        %v4356 = vsub.f32 %v4186, %v4276
        %v4357 = vsub.f32 %v4188, %v4313
        %v4358 = vsub.f32 %v4192, %v4276
        %v4359 = vsub.f32 %v4194, %v4313
        %v4360 = vsub.f32 %v4196, %v4276
        %v4361 = vsub.f32 %v4198, %v4313
        %v4362 = vsub.f32 %v4202, %v4276
        %v4363 = vsub.f32 %v4204, %v4313
        %v4364 = vsub.f32 %v4206, %v4276
        %v4365 = vsub.f32 %v4208, %v4313
        %v4366 = vsub.f32 %v4212, %v4276
        %v4367 = vsub.f32 %v4214, %v4313
        %v4368 = vsub.f32 %v4216, %v4276
        %v4369 = vsub.f32 %v4218, %v4313
        %v4370 = vsub.f32 %v4222, %v4276
        %v4371 = vsub.f32 %v4224, %v4313
        %v4372 = vsub.f32 %v4226, %v4276
        %v4373 = vsub.f32 %v4228, %v4313
        %v4374 = vsub.f32 %v4232, %v4276
        %v4375 = vsub.f32 %v4234, %v4313
        %v4376 = vsub.f32 %v4236, %v4276
        %v4377 = vsub.f32 %v4238, %v4313
        %v4378 = vmul.f32 %v4314, 1.442695
        %v4379 = vpow.pop %v4378
        %v4380 = vmul.f32 %v4315, 1.442695
        %v4381 = vpow.pop %v4380
        %v4382 = vmul.f32 %v4316, 1.442695
        %v4383 = vpow.pop %v4382
        %v4384 = vmul.f32 %v4317, 1.442695
        %v4385 = vpow.pop %v4384
        %v4386 = vmul.f32 %v4318, 1.442695
        %v4387 = vpow.pop %v4386
        %v4388 = vmul.f32 %v4319, 1.442695
        %v4389 = vpow.pop %v4388
        %v4390 = vmul.f32 %v4320, 1.442695
        %v4391 = vpow.pop %v4390
        %v4392 = vmul.f32 %v4321, 1.442695
        %v4393 = vpow.pop %v4392
        %v4394 = vmul.f32 %v4322, 1.442695
        %v4395 = vpow.pop %v4394
        %v4396 = vmul.f32 %v4323, 1.442695
        %v4397 = vpow.pop %v4396
        %v4398 = vmul.f32 %v4324, 1.442695
        %v4399 = vpow.pop %v4398
        %v4400 = vmul.f32 %v4325, 1.442695
        %v4401 = vpow.pop %v4400
        %v4402 = vmul.f32 %v4326, 1.442695
        %v4403 = vpow.pop %v4402
        %v4404 = vmul.f32 %v4327, 1.442695
        %v4405 = vpow.pop %v4404
        %v4406 = vmul.f32 %v4328, 1.442695
        %v4407 = vpow.pop %v4406
        %v4408 = vmul.f32 %v4329, 1.442695
        %v4409 = vpow.pop %v4408
        %v4410 = vmul.f32 %v4330, 1.442695
        %v4411 = vpow.pop %v4410
        %v4412 = vmul.f32 %v4331, 1.442695
        %v4413 = vpow.pop %v4412
        %v4414 = vmul.f32 %v4332, 1.442695
        %v4415 = vpow.pop %v4414
        %v4416 = vmul.f32 %v4333, 1.442695
        %v4417 = vpow.pop %v4416
        %v4418 = vmul.f32 %v4334, 1.442695
        %v4419 = vpow.pop %v4418
        %v4420 = vmul.f32 %v4335, 1.442695
        %v4421 = vpow.pop %v4420
        %v4422 = vmul.f32 %v4336, 1.442695
        %v4423 = vpow.pop %v4422
        %v4424 = vmul.f32 %v4337, 1.442695
        %v4425 = vpow.pop %v4424
        %v4426 = vmul.f32 %v4338, 1.442695
        %v4427 = vpow.pop %v4426
        %v4428 = vmul.f32 %v4339, 1.442695
        %v4429 = vpow.pop %v4428
        %v4430 = vmul.f32 %v4340, 1.442695
        %v4431 = vpow.pop %v4430
        %v4432 = vmul.f32 %v4341, 1.442695
        %v4433 = vpow.pop %v4432
        %v4434 = vmul.f32 %v4342, 1.442695
        %v4435 = vpow.pop %v4434
        %v4436 = vmul.f32 %v4343, 1.442695
        %v4437 = vpow.pop %v4436
        %v4438 = vmul.f32 %v4344, 1.442695
        %v4439 = vpow.pop %v4438
        %v4440 = vmul.f32 %v4345, 1.442695
        %v4441 = vpow.pop %v4440
        %v4442 = vmul.f32 %v4346, 1.442695
        %v4443 = vpow.pop %v4442
        %v4444 = vmul.f32 %v4347, 1.442695
        %v4445 = vpow.pop %v4444
        %v4446 = vmul.f32 %v4348, 1.442695
        %v4447 = vpow.pop %v4446
        %v4448 = vmul.f32 %v4349, 1.442695
        %v4449 = vpow.pop %v4448
        %v4450 = vmul.f32 %v4350, 1.442695
        %v4451 = vpow.pop %v4450
        %v4452 = vmul.f32 %v4351, 1.442695
        %v4453 = vpow.pop %v4452
        %v4454 = vmul.f32 %v4352, 1.442695
        %v4455 = vpow.pop %v4454
        %v4456 = vmul.f32 %v4353, 1.442695
        %v4457 = vpow.pop %v4456
        %v4458 = vmul.f32 %v4354, 1.442695
        %v4459 = vpow.pop %v4458
        %v4460 = vmul.f32 %v4355, 1.442695
        %v4461 = vpow.pop %v4460
        %v4462 = vmul.f32 %v4356, 1.442695
        %v4463 = vpow.pop %v4462
        %v4464 = vmul.f32 %v4357, 1.442695
        %v4465 = vpow.pop %v4464
        %v4466 = vmul.f32 %v4358, 1.442695
        %v4467 = vpow.pop %v4466
        %v4468 = vmul.f32 %v4359, 1.442695
        %v4469 = vpow.pop %v4468
        %v4470 = vmul.f32 %v4360, 1.442695
        %v4471 = vpow.pop %v4470
        %v4472 = vmul.f32 %v4361, 1.442695
        %v4473 = vpow.pop %v4472
        %v4474 = vmul.f32 %v4362, 1.442695
        %v4475 = vpow.pop %v4474
        %v4476 = vmul.f32 %v4363, 1.442695
        %v4477 = vpow.pop %v4476
        %v4478 = vmul.f32 %v4364, 1.442695
        %v4479 = vpow.pop %v4478
        %v4480 = vmul.f32 %v4365, 1.442695
        %v4481 = vpow.pop %v4480
        %v4482 = vmul.f32 %v4366, 1.442695
        %v4483 = vpow.pop %v4482
        %v4484 = vmul.f32 %v4367, 1.442695
        %v4485 = vpow.pop %v4484
        %v4486 = vmul.f32 %v4368, 1.442695
        %v4487 = vpow.pop %v4486
        %v4488 = vmul.f32 %v4369, 1.442695
        %v4489 = vpow.pop %v4488
        %v4490 = vmul.f32 %v4370, 1.442695
        %v4491 = vpow.pop %v4490
        %v4492 = vmul.f32 %v4371, 1.442695
        %v4493 = vpow.pop %v4492
        %v4494 = vmul.f32 %v4372, 1.442695
        %v4495 = vpow.pop %v4494
        %v4496 = vmul.f32 %v4373, 1.442695
        %v4497 = vpow.pop %v4496
        %v4498 = vmul.f32 %v4374, 1.442695
        %v4499 = vpow.pop %v4498
        %v4500 = vmul.f32 %v4375, 1.442695
        %v4501 = vpow.pop %v4500
        %v4502 = vmul.f32 %v4376, 1.442695
        %v4503 = vpow.pop %v4502
        %v4504 = vmul.f32 %v4377, 1.442695
        %v4505 = vpow.pop %v4504
        %v4506 = vadd.f32 %v4379, %v4383
        %v4507 = vadd.f32 %v4506, %v4387
        %v4508 = vadd.f32 %v4507, %v4391
        %v4509 = vadd.f32 %v4508, %v4395
        %v4510 = vadd.f32 %v4509, %v4399
        %v4511 = vadd.f32 %v4510, %v4403
        %v4512 = vadd.f32 %v4511, %v4407
        %v4513 = vadd.f32 %v4512, %v4411
        %v4514 = vadd.f32 %v4513, %v4415
        %v4515 = vadd.f32 %v4514, %v4419
        %v4516 = vadd.f32 %v4515, %v4423
        %v4517 = vadd.f32 %v4516, %v4427
        %v4518 = vadd.f32 %v4517, %v4431
        %v4519 = vadd.f32 %v4518, %v4435
        %v4520 = vadd.f32 %v4519, %v4439
        %v4521 = vadd.f32 %v4520, %v4443
        %v4522 = vadd.f32 %v4521, %v4447
        %v4523 = vadd.f32 %v4522, %v4451
        %v4524 = vadd.f32 %v4523, %v4455
        %v4525 = vadd.f32 %v4524, %v4459
        %v4526 = vadd.f32 %v4525, %v4463
        %v4527 = vadd.f32 %v4526, %v4467
        %v4528 = vadd.f32 %v4527, %v4471
        %v4529 = vadd.f32 %v4528, %v4475
        %v4530 = vadd.f32 %v4529, %v4479
        %v4531 = vadd.f32 %v4530, %v4483
        %v4532 = vadd.f32 %v4531, %v4487
        %v4533 = vadd.f32 %v4532, %v4491
        %v4534 = vadd.f32 %v4533, %v4495
        %v4535 = vadd.f32 %v4534, %v4499
        %v4536 = vadd.f32 %v4535, %v4503
        %v4537 = vrot.slane %v4536, 4
        %v4538 = vadd.f32 %v4536, %v4537
        %v4539 = vrot.slane %v4538, 2
        %v4540 = vadd.f32 %v4538, %v4539
        %v4541 = vrot.slane %v4540, 1
        %v4542 = vadd.f32 %v4540, %v4541
        %v4543 = vadd.f32 %v4381, %v4385
        %v4544 = vadd.f32 %v4543, %v4389
        %v4545 = vadd.f32 %v4544, %v4393
        %v4546 = vadd.f32 %v4545, %v4397
        %v4547 = vadd.f32 %v4546, %v4401
        %v4548 = vadd.f32 %v4547, %v4405
        %v4549 = vadd.f32 %v4548, %v4409
        %v4550 = vadd.f32 %v4549, %v4413
        %v4551 = vadd.f32 %v4550, %v4417
        %v4552 = vadd.f32 %v4551, %v4421
        %v4553 = vadd.f32 %v4552, %v4425
        %v4554 = vadd.f32 %v4553, %v4429
        %v4555 = vadd.f32 %v4554, %v4433
        %v4556 = vadd.f32 %v4555, %v4437
        %v4557 = vadd.f32 %v4556, %v4441
        %v4558 = vadd.f32 %v4557, %v4445
        %v4559 = vadd.f32 %v4558, %v4449
        %v4560 = vadd.f32 %v4559, %v4453
        %v4561 = vadd.f32 %v4560, %v4457
        %v4562 = vadd.f32 %v4561, %v4461
        %v4563 = vadd.f32 %v4562, %v4465
        %v4564 = vadd.f32 %v4563, %v4469
        %v4565 = vadd.f32 %v4564, %v4473
        %v4566 = vadd.f32 %v4565, %v4477
        %v4567 = vadd.f32 %v4566, %v4481
        %v4568 = vadd.f32 %v4567, %v4485
        %v4569 = vadd.f32 %v4568, %v4489
        %v4570 = vadd.f32 %v4569, %v4493
        %v4571 = vadd.f32 %v4570, %v4497
        %v4572 = vadd.f32 %v4571, %v4501
        %v4573 = vadd.f32 %v4572, %v4505
        %v4574 = vrot.slane %v4573, 4
        %v4575 = vadd.f32 %v4573, %v4574
        %v4576 = vrot.slane %v4575, 2
        %v4577 = vadd.f32 %v4575, %v4576
        %v4578 = vrot.slane %v4577, 1
        %v4579 = vadd.f32 %v4577, %v4578
        %v4580 = vpack.c.bf16 %v4383, %v4379
        %v4581 = vpack.c.bf16 %v4385, %v4381
        %v4582 = vpack.c.bf16 %v4391, %v4387
        %v4583 = vpack.c.bf16 %v4393, %v4389
        %v4584 = vpack.c.bf16 %v4399, %v4395
        %v4585 = vpack.c.bf16 %v4401, %v4397
        %v4586 = vpack.c.bf16 %v4407, %v4403
        %v4587 = vpack.c.bf16 %v4409, %v4405
        %v4588 = vpack.c.bf16 %v4415, %v4411
        %v4589 = vpack.c.bf16 %v4417, %v4413
        %v4590 = vpack.c.bf16 %v4423, %v4419
        %v4591 = vpack.c.bf16 %v4425, %v4421
        %v4592 = vpack.c.bf16 %v4431, %v4427
        %v4593 = vpack.c.bf16 %v4433, %v4429
        %v4594 = vpack.c.bf16 %v4439, %v4435
        %v4595 = vpack.c.bf16 %v4441, %v4437
        %v4596 = vpack.c.bf16 %v4447, %v4443
        %v4597 = vpack.c.bf16 %v4449, %v4445
        %v4598 = vpack.c.bf16 %v4455, %v4451
        %v4599 = vpack.c.bf16 %v4457, %v4453
        %v4600 = vpack.c.bf16 %v4463, %v4459
        %v4601 = vpack.c.bf16 %v4465, %v4461
        %v4602 = vpack.c.bf16 %v4471, %v4467
        %v4603 = vpack.c.bf16 %v4473, %v4469
        %v4604 = vpack.c.bf16 %v4479, %v4475
        %v4605 = vpack.c.bf16 %v4481, %v4477
        %v4606 = vpack.c.bf16 %v4487, %v4483
        %v4607 = vpack.c.bf16 %v4489, %v4485
        %v4608 = vpack.c.bf16 %v4495, %v4491
        %v4609 = vpack.c.bf16 %v4497, %v4493
        %v4610 = vpack.c.bf16 %v4503, %v4499
        %v4611 = vpack.c.bf16 %v4505, %v4501
        %v4614 = vrot.slane %v3251, 2
        %v4615 = vrot.slane %v3252, 2
        %4618 = vmatprep.subr.bf16.mxu0 %v4581
        %4619 = vmatpush1.bf16.msra.mxu0 %v4580
        %4620 = vmatprep.subr.bf16.mxu0 %v4583
        %4621 = vmatpush1.bf16.msra.mxu0 %v4582
        %4622 = vmatprep.subr.bf16.mxu0 %v4585
        %4623 = vmatpush1.bf16.msra.mxu0 %v4584
        %4624 = vmatprep.subr.bf16.mxu0 %v4587
        %4625 = vmatpush1.bf16.msra.mxu0 %v4586
        %4626 = vmatprep.subr.bf16.mxu0 %v4589
        %4627 = vmatpush1.bf16.msra.mxu0 %v4588
        %4628 = vmatprep.subr.bf16.mxu0 %v4591
        %4629 = vmatpush1.bf16.msra.mxu0 %v4590
        %4630 = vmatprep.subr.bf16.mxu0 %v4593
        %4631 = vmatpush1.bf16.msra.mxu0 %v4592
        %4632 = vmatprep.subr.bf16.mxu0 %v4595
        %4633 = vmatpush1.bf16.msra.mxu0 %v4594
        %4634 = vmatprep.subr.bf16.mxu0 %v4597
        %4635 = vmatpush1.bf16.msra.mxu0 %v4596
        %4636 = vmatprep.subr.bf16.mxu0 %v4599
        %4637 = vmatpush1.bf16.msra.mxu0 %v4598
        %4638 = vmatprep.subr.bf16.mxu0 %v4601
        %4639 = vmatpush1.bf16.msra.mxu0 %v4600
        %4640 = vmatprep.subr.bf16.mxu0 %v4603
        %4641 = vmatpush1.bf16.msra.mxu0 %v4602
        %4642 = vmatprep.subr.bf16.mxu0 %v4605
        %4643 = vmatpush1.bf16.msra.mxu0 %v4604
        %4644 = vmatprep.subr.bf16.mxu0 %v4607
        %4645 = vmatpush1.bf16.msra.mxu0 %v4606
        %4646 = vmatprep.subr.bf16.mxu0 %v4609
        %4647 = vmatpush1.bf16.msra.mxu0 %v4608
        %4648 = vmatprep.subr.bf16.mxu0 %v4611
        %4649 = vmatpush1.bf16.msra.mxu0 %v4610
        %4650 = vmatprep.mubr.bf16.mxu0 %v4615
        %4651 = vmatmul.mubr.bf16.gmra.mrb[0].mxu0 %v4614
        %v4652 = vpop.f32.mrb[0].mxu0
        %v4653 = vadd.f32 0.0, %v4652
        %v4654 = vpop.f32.mrb[0].mxu0
        %v4655 = vadd.f32 0.0, %v4654
        %v4656 = vpop.f32.mrb[0].mxu0
        %v4657 = vpop.f32.mrb[0].mxu0
        %4658 = vdwg.mxu0
        %v4659 = vrcp.pop %v4542
        %v4660 = vrcp.pop %v4579
        %v4661 = vmul.f32 %v4653, %v4659
        %v4662 = vmul.f32 %v4655, %v4660
        %v4665 = vrot.slane %v4661, 4
        %v4666 = vrot.slane %v4662, 4
        %4669 = vst [vmem:[#allocation2 + $0x20] sm:$0xf0] %v4665
        %4670 = vst [vmem:[#allocation2 + $0x28] sm:$0xf0] %v4666
        %v4671 = vmul.f32 %v347, 0.5
        %v4672 = vmul.f32 %v349, 0.5
        %v4673 = vpack.c.bf16 %v4671, %v4671
        %v4674 = vpack.c.bf16 %v4672, %v4672
        %v4675 = vpack.c.bf16 %v367, %v367
        %v4676 = vpack.c.bf16 %v369, %v369
        %v4677 = vpack.c.bf16 %v387, %v387
        %v4678 = vpack.c.bf16 %v389, %v389
        %4679 = vxpose.xlu0.c.b16.start [1/8] %v4675, 128
        %4680 = vxpose.xlu0.c.b16.cont [2/8] 0, 128
        %4681 = vxpose.xlu0.c.b16.cont [3/8] 0, 128
        %4682 = vxpose.xlu0.c.b16.cont [4/8] 0, 128
        %4683 = vxpose.xlu0.c.b16.cont [5/8] 0, 128
        %4684 = vxpose.xlu0.c.b16.cont [6/8] 0, 128
        %4685 = vxpose.xlu0.c.b16.cont [7/8] 0, 128
        %4686 = vxpose.xlu0.c.b16.end [8/8] 0, 128
        %v4687 = vpop.trf.xlu0
        %v4688 = vpop.trf.xlu0
        %v4689 = vpop.trf.xlu0
        %v4690 = vpop.trf.xlu0
        %v4691 = vpop.trf.xlu0
        %v4692 = vpop.trf.xlu0
        %v4693 = vpop.trf.xlu0
        %v4694 = vpop.trf.xlu0
        %4695 = vxpose.xlu0.c.b16.start [1/8] %v4676, 128
        %4696 = vxpose.xlu0.c.b16.cont [2/8] 0, 128
        %4697 = vxpose.xlu0.c.b16.cont [3/8] 0, 128
        %4698 = vxpose.xlu0.c.b16.cont [4/8] 0, 128
        %4699 = vxpose.xlu0.c.b16.cont [5/8] 0, 128
        %4700 = vxpose.xlu0.c.b16.cont [6/8] 0, 128
        %4701 = vxpose.xlu0.c.b16.cont [7/8] 0, 128
        %4702 = vxpose.xlu0.c.b16.end [8/8] 0, 128
        %v4703 = vpop.trf.xlu0
        %v4704 = vpop.trf.xlu0
        %v4705 = vpop.trf.xlu0
        %v4706 = vpop.trf.xlu0
        %v4707 = vpop.trf.xlu0
        %v4708 = vpop.trf.xlu0
        %v4709 = vpop.trf.xlu0
        %v4710 = vpop.trf.xlu0
        %v4712 = vsel %vm431, %v4687, 0
        %v4715 = vsel %vm431, %v4688, 0
        %v4718 = vsel %vm431, %v4689, 0
        %v4721 = vsel %vm431, %v4690, 0
        %v4724 = vsel %vm431, %v4691, 0
        %v4727 = vsel %vm431, %v4692, 0
        %v4730 = vsel %vm431, %v4693, 0
        %v4733 = vsel %vm431, %v4694, 0
        %v4736 = vsel %vm431, %v4703, 0
        %v4739 = vsel %vm431, %v4704, 0
        %v4742 = vsel %vm431, %v4705, 0
        %v4745 = vsel %vm431, %v4706, 0
        %v4748 = vsel %vm431, %v4707, 0
        %v4751 = vsel %vm431, %v4708, 0
        %v4754 = vsel %vm431, %v4709, 0
        %v4757 = vsel %vm431, %v4710, 0
        %v4760 = vsel %vm480, %v4673, 0
        %v4763 = vsel %vm480, %v4674, 0
        %4765 = vmatprep.subr.bf16.mxu0 %v4763
        %4766 = vmatpush1.bf16.msra.mxu0 %v4760
        %4767 = vmatprep.subr.bf16.mxu0 0
        %4768 = vmatpush1.bf16.msra.mxu0 0
        %4769 = vmatprep.subr.bf16.mxu0 0
        %4770 = vmatpush1.bf16.msra.mxu0 0
        %4771 = vmatprep.subr.bf16.mxu0 0
        %4772 = vmatpush1.bf16.msra.mxu0 0
        %4773 = vmatprep.subr.bf16.mxu0 0
        %4774 = vmatpush1.bf16.msra.mxu0 0
        %4775 = vmatprep.subr.bf16.mxu0 0
        %4776 = vmatpush1.bf16.msra.mxu0 0
        %4777 = vmatprep.subr.bf16.mxu0 0
        %4778 = vmatpush1.bf16.msra.mxu0 0
        %4779 = vmatprep.subr.bf16.mxu0 0
        %4780 = vmatpush1.bf16.msra.mxu0 0
        %4781 = vmatprep.subr.bf16.mxu0 0
        %4782 = vmatpush1.bf16.msra.mxu0 0
        %4783 = vmatprep.subr.bf16.mxu0 0
        %4784 = vmatpush1.bf16.msra.mxu0 0
        %4785 = vmatprep.subr.bf16.mxu0 0
        %4786 = vmatpush1.bf16.msra.mxu0 0
        %4787 = vmatprep.subr.bf16.mxu0 0
        %4788 = vmatpush1.bf16.msra.mxu0 0
        %4789 = vmatprep.subr.bf16.mxu0 0
        %4790 = vmatpush1.bf16.msra.mxu0 0
        %4791 = vmatprep.subr.bf16.mxu0 0
        %4792 = vmatpush1.bf16.msra.mxu0 0
        %4793 = vmatprep.subr.bf16.mxu0 0
        %4794 = vmatpush1.bf16.msra.mxu0 0
        %4795 = vmatprep.subr.bf16.mxu0 0
        %4796 = vmatpush1.bf16.msra.mxu0 0
        %4797 = vmatprep.mubr.bf16.mxu0 0
        %4798 = vmatmul.mubr.bf16.gmra.mrb[0].mxu0 %v4712
        %v4799 = vpop.f32.mrb[0].mxu0
        %v4800 = vadd.f32 0.0, %v4799
        %v4801 = vpop.f32.mrb[0].mxu0
        %v4802 = vadd.f32 0.0, %v4801
        %v4803 = vpop.f32.mrb[0].mxu0
        %v4804 = vadd.f32 0.0, %v4803
        %v4805 = vpop.f32.mrb[0].mxu0
        %v4806 = vadd.f32 0.0, %v4805
        %4807 = vmatprep.mubr.bf16.mxu0 0
        %4808 = vmatmul.mubr.bf16.gmra.mrb[0].mxu0 %v4715
        %v4809 = vpop.f32.mrb[0].mxu0
        %v4810 = vadd.f32 0.0, %v4809
        %v4811 = vpop.f32.mrb[0].mxu0
        %v4812 = vadd.f32 0.0, %v4811
        %v4813 = vpop.f32.mrb[0].mxu0
        %v4814 = vadd.f32 0.0, %v4813
        %v4815 = vpop.f32.mrb[0].mxu0
        %v4816 = vadd.f32 0.0, %v4815
        %4817 = vmatprep.mubr.bf16.mxu0 0
        %4818 = vmatmul.mubr.bf16.gmra.mrb[0].mxu0 %v4718
        %v4819 = vpop.f32.mrb[0].mxu0
        %v4820 = vadd.f32 0.0, %v4819
        %v4821 = vpop.f32.mrb[0].mxu0
        %v4822 = vadd.f32 0.0, %v4821
        %v4823 = vpop.f32.mrb[0].mxu0
        %v4824 = vadd.f32 0.0, %v4823
        %v4825 = vpop.f32.mrb[0].mxu0
        %v4826 = vadd.f32 0.0, %v4825
        %4827 = vmatprep.mubr.bf16.mxu0 0
        %4828 = vmatmul.mubr.bf16.gmra.mrb[0].mxu0 %v4721
        %v4829 = vpop.f32.mrb[0].mxu0
        %v4830 = vadd.f32 0.0, %v4829
        %v4831 = vpop.f32.mrb[0].mxu0
        %v4832 = vadd.f32 0.0, %v4831
        %v4833 = vpop.f32.mrb[0].mxu0
        %v4834 = vadd.f32 0.0, %v4833
        %v4835 = vpop.f32.mrb[0].mxu0
        %v4836 = vadd.f32 0.0, %v4835
        %4837 = vmatprep.mubr.bf16.mxu0 0
        %4838 = vmatmul.mubr.bf16.gmra.mrb[0].mxu0 %v4724
        %v4839 = vpop.f32.mrb[0].mxu0
        %v4840 = vadd.f32 0.0, %v4839
        %v4841 = vpop.f32.mrb[0].mxu0
        %v4842 = vadd.f32 0.0, %v4841
        %v4843 = vpop.f32.mrb[0].mxu0
        %v4844 = vadd.f32 0.0, %v4843
        %v4845 = vpop.f32.mrb[0].mxu0
        %v4846 = vadd.f32 0.0, %v4845
        %4847 = vmatprep.mubr.bf16.mxu0 0
        %4848 = vmatmul.mubr.bf16.gmra.mrb[0].mxu0 %v4727
        %v4849 = vpop.f32.mrb[0].mxu0
        %v4850 = vadd.f32 0.0, %v4849
        %v4851 = vpop.f32.mrb[0].mxu0
        %v4852 = vadd.f32 0.0, %v4851
        %v4853 = vpop.f32.mrb[0].mxu0
        %v4854 = vadd.f32 0.0, %v4853
        %v4855 = vpop.f32.mrb[0].mxu0
        %v4856 = vadd.f32 0.0, %v4855
        %4857 = vmatprep.mubr.bf16.mxu0 0
        %4858 = vmatmul.mubr.bf16.gmra.mrb[0].mxu0 %v4730
        %v4859 = vpop.f32.mrb[0].mxu0
        %v4860 = vadd.f32 0.0, %v4859
        %v4861 = vpop.f32.mrb[0].mxu0
        %v4862 = vadd.f32 0.0, %v4861
        %v4863 = vpop.f32.mrb[0].mxu0
        %v4864 = vadd.f32 0.0, %v4863
        %v4865 = vpop.f32.mrb[0].mxu0
        %v4866 = vadd.f32 0.0, %v4865
        %4867 = vmatprep.mubr.bf16.mxu0 0
        %4868 = vmatmul.mubr.bf16.gmra.mrb[0].mxu0 %v4733
        %v4869 = vpop.f32.mrb[0].mxu0
        %v4870 = vadd.f32 0.0, %v4869
        %v4871 = vpop.f32.mrb[0].mxu0
        %v4872 = vadd.f32 0.0, %v4871
        %v4873 = vpop.f32.mrb[0].mxu0
        %v4874 = vadd.f32 0.0, %v4873
        %v4875 = vpop.f32.mrb[0].mxu0
        %v4876 = vadd.f32 0.0, %v4875
        %4877 = vmatprep.mubr.bf16.mxu0 0
        %4878 = vmatmul.mubr.bf16.gmra.mrb[0].mxu0 %v4736
        %v4879 = vpop.f32.mrb[0].mxu0
        %v4880 = vadd.f32 0.0, %v4879
        %v4881 = vpop.f32.mrb[0].mxu0
        %v4882 = vadd.f32 0.0, %v4881
        %v4883 = vpop.f32.mrb[0].mxu0
        %v4884 = vadd.f32 0.0, %v4883
        %v4885 = vpop.f32.mrb[0].mxu0
        %v4886 = vadd.f32 0.0, %v4885
        %4887 = vmatprep.mubr.bf16.mxu0 0
        %4888 = vmatmul.mubr.bf16.gmra.mrb[0].mxu0 %v4739
        %v4889 = vpop.f32.mrb[0].mxu0
        %v4890 = vadd.f32 0.0, %v4889
        %v4891 = vpop.f32.mrb[0].mxu0
        %v4892 = vadd.f32 0.0, %v4891
        %v4893 = vpop.f32.mrb[0].mxu0
        %v4894 = vadd.f32 0.0, %v4893
        %v4895 = vpop.f32.mrb[0].mxu0
        %v4896 = vadd.f32 0.0, %v4895
        %4897 = vmatprep.mubr.bf16.mxu0 0
        %4898 = vmatmul.mubr.bf16.gmra.mrb[0].mxu0 %v4742
        %v4899 = vpop.f32.mrb[0].mxu0
        %v4900 = vadd.f32 0.0, %v4899
        %v4901 = vpop.f32.mrb[0].mxu0
        %v4902 = vadd.f32 0.0, %v4901
        %v4903 = vpop.f32.mrb[0].mxu0
        %v4904 = vadd.f32 0.0, %v4903
        %v4905 = vpop.f32.mrb[0].mxu0
        %v4906 = vadd.f32 0.0, %v4905
        %4907 = vmatprep.mubr.bf16.mxu0 0
        %4908 = vmatmul.mubr.bf16.gmra.mrb[0].mxu0 %v4745
        %v4909 = vpop.f32.mrb[0].mxu0
        %v4910 = vadd.f32 0.0, %v4909
        %v4911 = vpop.f32.mrb[0].mxu0
        %v4912 = vadd.f32 0.0, %v4911
        %v4913 = vpop.f32.mrb[0].mxu0
        %v4914 = vadd.f32 0.0, %v4913
        %v4915 = vpop.f32.mrb[0].mxu0
        %v4916 = vadd.f32 0.0, %v4915
        %4917 = vmatprep.mubr.bf16.mxu0 0
        %4918 = vmatmul.mubr.bf16.gmra.mrb[0].mxu0 %v4748
        %v4919 = vpop.f32.mrb[0].mxu0
        %v4920 = vadd.f32 0.0, %v4919
        %v4921 = vpop.f32.mrb[0].mxu0
        %v4922 = vadd.f32 0.0, %v4921
        %v4923 = vpop.f32.mrb[0].mxu0
        %v4924 = vadd.f32 0.0, %v4923
        %v4925 = vpop.f32.mrb[0].mxu0
        %v4926 = vadd.f32 0.0, %v4925
        %4927 = vmatprep.mubr.bf16.mxu0 0
        %4928 = vmatmul.mubr.bf16.gmra.mrb[0].mxu0 %v4751
        %v4929 = vpop.f32.mrb[0].mxu0
        %v4930 = vadd.f32 0.0, %v4929
        %v4931 = vpop.f32.mrb[0].mxu0
        %v4932 = vadd.f32 0.0, %v4931
        %v4933 = vpop.f32.mrb[0].mxu0
        %v4934 = vadd.f32 0.0, %v4933
        %v4935 = vpop.f32.mrb[0].mxu0
        %v4936 = vadd.f32 0.0, %v4935
        %4937 = vmatprep.mubr.bf16.mxu0 0
        %4938 = vmatmul.mubr.bf16.gmra.mrb[0].mxu0 %v4754
        %v4939 = vpop.f32.mrb[0].mxu0
        %v4940 = vadd.f32 0.0, %v4939
        %v4941 = vpop.f32.mrb[0].mxu0
        %v4942 = vadd.f32 0.0, %v4941
        %v4943 = vpop.f32.mrb[0].mxu0
        %v4944 = vadd.f32 0.0, %v4943
        %v4945 = vpop.f32.mrb[0].mxu0
        %v4946 = vadd.f32 0.0, %v4945
        %4947 = vmatprep.mubr.bf16.mxu0 0
        %4948 = vmatmul.mubr.bf16.gmra.mrb[0].mxu0 %v4757
        %v4949 = vpop.f32.mrb[0].mxu0
        %v4950 = vadd.f32 0.0, %v4949
        %v4951 = vpop.f32.mrb[0].mxu0
        %v4952 = vadd.f32 0.0, %v4951
        %v4953 = vpop.f32.mrb[0].mxu0
        %v4954 = vadd.f32 0.0, %v4953
        %v4955 = vpop.f32.mrb[0].mxu0
        %v4956 = vadd.f32 0.0, %v4955
        %4957 = vdwg.mxu0
        %v4958 = vmax.f32 %v4800, %v4810
        %v4959 = vmax.f32 %v4804, %v4814
        %v4960 = vmax.f32 %v4958, %v4820
        %v4961 = vmax.f32 %v4959, %v4824
        %v4962 = vmax.f32 %v4960, %v4830
        %v4963 = vmax.f32 %v4961, %v4834
        %v4964 = vmax.f32 %v4962, %v4840
        %v4965 = vmax.f32 %v4963, %v4844
        %v4966 = vmax.f32 %v4964, %v4850
        %v4967 = vmax.f32 %v4965, %v4854
        %v4968 = vmax.f32 %v4966, %v4860
        %v4969 = vmax.f32 %v4967, %v4864
        %v4970 = vmax.f32 %v4968, %v4870
        %v4971 = vmax.f32 %v4969, %v4874
        %v4972 = vmax.f32 %v4970, %v4880
        %v4973 = vmax.f32 %v4971, %v4884
        %v4974 = vmax.f32 %v4972, %v4890
        %v4975 = vmax.f32 %v4973, %v4894
        %v4976 = vmax.f32 %v4974, %v4900
        %v4977 = vmax.f32 %v4975, %v4904
        %v4978 = vmax.f32 %v4976, %v4910
        %v4979 = vmax.f32 %v4977, %v4914
        %v4980 = vmax.f32 %v4978, %v4920
        %v4981 = vmax.f32 %v4979, %v4924
        %v4982 = vmax.f32 %v4980, %v4930
        %v4983 = vmax.f32 %v4981, %v4934
        %v4984 = vmax.f32 %v4982, %v4940
        %v4985 = vmax.f32 %v4983, %v4944
        %v4986 = vmax.f32 %v4984, %v4950
        %v4987 = vmax.f32 %v4985, %v4954
        %v4988 = vmax.f32 %v4986, %v4987
        %v4989 = vrot.slane %v4988, 4
        %v4990 = vmax.f32 %v4988, %v4989
        %v4991 = vrot.slane %v4990, 2
        %v4992 = vmax.f32 %v4990, %v4991
        %v4993 = vrot.slane %v4992, 1
        %v4994 = vmax.f32 %v4992, %v4993
        %v4995 = vmax.f32 %v4802, %v4812
        %v4996 = vmax.f32 %v4806, %v4816
        %v4997 = vmax.f32 %v4995, %v4822
        %v4998 = vmax.f32 %v4996, %v4826
        %v4999 = vmax.f32 %v4997, %v4832
        %v5000 = vmax.f32 %v4998, %v4836
        %v5001 = vmax.f32 %v4999, %v4842
        %v5002 = vmax.f32 %v5000, %v4846
        %v5003 = vmax.f32 %v5001, %v4852
        %v5004 = vmax.f32 %v5002, %v4856
        %v5005 = vmax.f32 %v5003, %v4862
        %v5006 = vmax.f32 %v5004, %v4866
        %v5007 = vmax.f32 %v5005, %v4872
        %v5008 = vmax.f32 %v5006, %v4876
        %v5009 = vmax.f32 %v5007, %v4882
        %v5010 = vmax.f32 %v5008, %v4886
        %v5011 = vmax.f32 %v5009, %v4892
        %v5012 = vmax.f32 %v5010, %v4896
        %v5013 = vmax.f32 %v5011, %v4902
        %v5014 = vmax.f32 %v5012, %v4906
        %v5015 = vmax.f32 %v5013, %v4912
        %v5016 = vmax.f32 %v5014, %v4916
        %v5017 = vmax.f32 %v5015, %v4922
        %v5018 = vmax.f32 %v5016, %v4926
        %v5019 = vmax.f32 %v5017, %v4932
        %v5020 = vmax.f32 %v5018, %v4936
        %v5021 = vmax.f32 %v5019, %v4942
        %v5022 = vmax.f32 %v5020, %v4946
        %v5023 = vmax.f32 %v5021, %v4952
        %v5024 = vmax.f32 %v5022, %v4956
        %v5025 = vmax.f32 %v5023, %v5024
        %v5026 = vrot.slane %v5025, 4
        %v5027 = vmax.f32 %v5025, %v5026
        %v5028 = vrot.slane %v5027, 2
        %v5029 = vmax.f32 %v5027, %v5028
        %v5030 = vrot.slane %v5029, 1
        %v5031 = vmax.f32 %v5029, %v5030
        %v5032 = vsub.f32 %v4800, %v4994
        %v5033 = vsub.f32 %v4802, %v5031
        %v5034 = vsub.f32 %v4804, %v4994
        %v5035 = vsub.f32 %v4806, %v5031
        %v5036 = vsub.f32 %v4810, %v4994
        %v5037 = vsub.f32 %v4812, %v5031
        %v5038 = vsub.f32 %v4814, %v4994
        %v5039 = vsub.f32 %v4816, %v5031
        %v5040 = vsub.f32 %v4820, %v4994
        %v5041 = vsub.f32 %v4822, %v5031
        %v5042 = vsub.f32 %v4824, %v4994
        %v5043 = vsub.f32 %v4826, %v5031
        %v5044 = vsub.f32 %v4830, %v4994
        %v5045 = vsub.f32 %v4832, %v5031
        %v5046 = vsub.f32 %v4834, %v4994
        %v5047 = vsub.f32 %v4836, %v5031
        %v5048 = vsub.f32 %v4840, %v4994
        %v5049 = vsub.f32 %v4842, %v5031
        %v5050 = vsub.f32 %v4844, %v4994
        %v5051 = vsub.f32 %v4846, %v5031
        %v5052 = vsub.f32 %v4850, %v4994
        %v5053 = vsub.f32 %v4852, %v5031
        %v5054 = vsub.f32 %v4854, %v4994
        %v5055 = vsub.f32 %v4856, %v5031
        %v5056 = vsub.f32 %v4860, %v4994
        %v5057 = vsub.f32 %v4862, %v5031
        %v5058 = vsub.f32 %v4864, %v4994
        %v5059 = vsub.f32 %v4866, %v5031
        %v5060 = vsub.f32 %v4870, %v4994
        %v5061 = vsub.f32 %v4872, %v5031
        %v5062 = vsub.f32 %v4874, %v4994
        %v5063 = vsub.f32 %v4876, %v5031
        %v5064 = vsub.f32 %v4880, %v4994
        %v5065 = vsub.f32 %v4882, %v5031
        %v5066 = vsub.f32 %v4884, %v4994
        %v5067 = vsub.f32 %v4886, %v5031
        %v5068 = vsub.f32 %v4890, %v4994
        %v5069 = vsub.f32 %v4892, %v5031
        %v5070 = vsub.f32 %v4894, %v4994
        %v5071 = vsub.f32 %v4896, %v5031
        %v5072 = vsub.f32 %v4900, %v4994
        %v5073 = vsub.f32 %v4902, %v5031
        %v5074 = vsub.f32 %v4904, %v4994
        %v5075 = vsub.f32 %v4906, %v5031
        %v5076 = vsub.f32 %v4910, %v4994
        %v5077 = vsub.f32 %v4912, %v5031
        %v5078 = vsub.f32 %v4914, %v4994
        %v5079 = vsub.f32 %v4916, %v5031
        %v5080 = vsub.f32 %v4920, %v4994
        %v5081 = vsub.f32 %v4922, %v5031
        %v5082 = vsub.f32 %v4924, %v4994
        %v5083 = vsub.f32 %v4926, %v5031
        %v5084 = vsub.f32 %v4930, %v4994
        %v5085 = vsub.f32 %v4932, %v5031
        %v5086 = vsub.f32 %v4934, %v4994
        %v5087 = vsub.f32 %v4936, %v5031
        %v5088 = vsub.f32 %v4940, %v4994
        %v5089 = vsub.f32 %v4942, %v5031
        %v5090 = vsub.f32 %v4944, %v4994
        %v5091 = vsub.f32 %v4946, %v5031
        %v5092 = vsub.f32 %v4950, %v4994
        %v5093 = vsub.f32 %v4952, %v5031
        %v5094 = vsub.f32 %v4954, %v4994
        %v5095 = vsub.f32 %v4956, %v5031
        %v5096 = vmul.f32 %v5032, 1.442695
        %v5097 = vpow.pop %v5096
        %v5098 = vmul.f32 %v5033, 1.442695
        %v5099 = vpow.pop %v5098
        %v5100 = vmul.f32 %v5034, 1.442695
        %v5101 = vpow.pop %v5100
        %v5102 = vmul.f32 %v5035, 1.442695
        %v5103 = vpow.pop %v5102
        %v5104 = vmul.f32 %v5036, 1.442695
        %v5105 = vpow.pop %v5104
        %v5106 = vmul.f32 %v5037, 1.442695
        %v5107 = vpow.pop %v5106
        %v5108 = vmul.f32 %v5038, 1.442695
        %v5109 = vpow.pop %v5108
        %v5110 = vmul.f32 %v5039, 1.442695
        %v5111 = vpow.pop %v5110
        %v5112 = vmul.f32 %v5040, 1.442695
        %v5113 = vpow.pop %v5112
        %v5114 = vmul.f32 %v5041, 1.442695
        %v5115 = vpow.pop %v5114
        %v5116 = vmul.f32 %v5042, 1.442695
        %v5117 = vpow.pop %v5116
        %v5118 = vmul.f32 %v5043, 1.442695
        %v5119 = vpow.pop %v5118
        %v5120 = vmul.f32 %v5044, 1.442695
        %v5121 = vpow.pop %v5120
        %v5122 = vmul.f32 %v5045, 1.442695
        %v5123 = vpow.pop %v5122
        %v5124 = vmul.f32 %v5046, 1.442695
        %v5125 = vpow.pop %v5124
        %v5126 = vmul.f32 %v5047, 1.442695
        %v5127 = vpow.pop %v5126
        %v5128 = vmul.f32 %v5048, 1.442695
        %v5129 = vpow.pop %v5128
        %v5130 = vmul.f32 %v5049, 1.442695
        %v5131 = vpow.pop %v5130
        %v5132 = vmul.f32 %v5050, 1.442695
        %v5133 = vpow.pop %v5132
        %v5134 = vmul.f32 %v5051, 1.442695
        %v5135 = vpow.pop %v5134
        %v5136 = vmul.f32 %v5052, 1.442695
        %v5137 = vpow.pop %v5136
        %v5138 = vmul.f32 %v5053, 1.442695
        %v5139 = vpow.pop %v5138
        %v5140 = vmul.f32 %v5054, 1.442695
        %v5141 = vpow.pop %v5140
        %v5142 = vmul.f32 %v5055, 1.442695
        %v5143 = vpow.pop %v5142
        %v5144 = vmul.f32 %v5056, 1.442695
        %v5145 = vpow.pop %v5144
        %v5146 = vmul.f32 %v5057, 1.442695
        %v5147 = vpow.pop %v5146
        %v5148 = vmul.f32 %v5058, 1.442695
        %v5149 = vpow.pop %v5148
        %v5150 = vmul.f32 %v5059, 1.442695
        %v5151 = vpow.pop %v5150
        %v5152 = vmul.f32 %v5060, 1.442695
        %v5153 = vpow.pop %v5152
        %v5154 = vmul.f32 %v5061, 1.442695
        %v5155 = vpow.pop %v5154
        %v5156 = vmul.f32 %v5062, 1.442695
        %v5157 = vpow.pop %v5156
        %v5158 = vmul.f32 %v5063, 1.442695
        %v5159 = vpow.pop %v5158
        %v5160 = vmul.f32 %v5064, 1.442695
        %v5161 = vpow.pop %v5160
        %v5162 = vmul.f32 %v5065, 1.442695
        %v5163 = vpow.pop %v5162
        %v5164 = vmul.f32 %v5066, 1.442695
        %v5165 = vpow.pop %v5164
        %v5166 = vmul.f32 %v5067, 1.442695
        %v5167 = vpow.pop %v5166
        %v5168 = vmul.f32 %v5068, 1.442695
        %v5169 = vpow.pop %v5168
        %v5170 = vmul.f32 %v5069, 1.442695
        %v5171 = vpow.pop %v5170
        %v5172 = vmul.f32 %v5070, 1.442695
        %v5173 = vpow.pop %v5172
        %v5174 = vmul.f32 %v5071, 1.442695
        %v5175 = vpow.pop %v5174
        %v5176 = vmul.f32 %v5072, 1.442695
        %v5177 = vpow.pop %v5176
        %v5178 = vmul.f32 %v5073, 1.442695
        %v5179 = vpow.pop %v5178
        %v5180 = vmul.f32 %v5074, 1.442695
        %v5181 = vpow.pop %v5180
        %v5182 = vmul.f32 %v5075, 1.442695
        %v5183 = vpow.pop %v5182
        %v5184 = vmul.f32 %v5076, 1.442695
        %v5185 = vpow.pop %v5184
        %v5186 = vmul.f32 %v5077, 1.442695
        %v5187 = vpow.pop %v5186
        %v5188 = vmul.f32 %v5078, 1.442695
        %v5189 = vpow.pop %v5188
        %v5190 = vmul.f32 %v5079, 1.442695
        %v5191 = vpow.pop %v5190
        %v5192 = vmul.f32 %v5080, 1.442695
        %v5193 = vpow.pop %v5192
        %v5194 = vmul.f32 %v5081, 1.442695
        %v5195 = vpow.pop %v5194
        %v5196 = vmul.f32 %v5082, 1.442695
        %v5197 = vpow.pop %v5196
        %v5198 = vmul.f32 %v5083, 1.442695
        %v5199 = vpow.pop %v5198
        %v5200 = vmul.f32 %v5084, 1.442695
        %v5201 = vpow.pop %v5200
        %v5202 = vmul.f32 %v5085, 1.442695
        %v5203 = vpow.pop %v5202
        %v5204 = vmul.f32 %v5086, 1.442695
        %v5205 = vpow.pop %v5204
        %v5206 = vmul.f32 %v5087, 1.442695
        %v5207 = vpow.pop %v5206
        %v5208 = vmul.f32 %v5088, 1.442695
        %v5209 = vpow.pop %v5208
        %v5210 = vmul.f32 %v5089, 1.442695
        %v5211 = vpow.pop %v5210
        %v5212 = vmul.f32 %v5090, 1.442695
        %v5213 = vpow.pop %v5212
        %v5214 = vmul.f32 %v5091, 1.442695
        %v5215 = vpow.pop %v5214
        %v5216 = vmul.f32 %v5092, 1.442695
        %v5217 = vpow.pop %v5216
        %v5218 = vmul.f32 %v5093, 1.442695
        %v5219 = vpow.pop %v5218
        %v5220 = vmul.f32 %v5094, 1.442695
        %v5221 = vpow.pop %v5220
        %v5222 = vmul.f32 %v5095, 1.442695
        %v5223 = vpow.pop %v5222
        %v5224 = vadd.f32 %v5097, %v5101
        %v5225 = vadd.f32 %v5224, %v5105
        %v5226 = vadd.f32 %v5225, %v5109
        %v5227 = vadd.f32 %v5226, %v5113
        %v5228 = vadd.f32 %v5227, %v5117
        %v5229 = vadd.f32 %v5228, %v5121
        %v5230 = vadd.f32 %v5229, %v5125
        %v5231 = vadd.f32 %v5230, %v5129
        %v5232 = vadd.f32 %v5231, %v5133
        %v5233 = vadd.f32 %v5232, %v5137
        %v5234 = vadd.f32 %v5233, %v5141
        %v5235 = vadd.f32 %v5234, %v5145
        %v5236 = vadd.f32 %v5235, %v5149
        %v5237 = vadd.f32 %v5236, %v5153
        %v5238 = vadd.f32 %v5237, %v5157
        %v5239 = vadd.f32 %v5238, %v5161
        %v5240 = vadd.f32 %v5239, %v5165
        %v5241 = vadd.f32 %v5240, %v5169
        %v5242 = vadd.f32 %v5241, %v5173
        %v5243 = vadd.f32 %v5242, %v5177
        %v5244 = vadd.f32 %v5243, %v5181
        %v5245 = vadd.f32 %v5244, %v5185
        %v5246 = vadd.f32 %v5245, %v5189
        %v5247 = vadd.f32 %v5246, %v5193
        %v5248 = vadd.f32 %v5247, %v5197
        %v5249 = vadd.f32 %v5248, %v5201
        %v5250 = vadd.f32 %v5249, %v5205
        %v5251 = vadd.f32 %v5250, %v5209
        %v5252 = vadd.f32 %v5251, %v5213
        %v5253 = vadd.f32 %v5252, %v5217
        %v5254 = vadd.f32 %v5253, %v5221
        %v5255 = vrot.slane %v5254, 4
        %v5256 = vadd.f32 %v5254, %v5255
        %v5257 = vrot.slane %v5256, 2
        %v5258 = vadd.f32 %v5256, %v5257
        %v5259 = vrot.slane %v5258, 1
        %v5260 = vadd.f32 %v5258, %v5259
        %v5261 = vadd.f32 %v5099, %v5103
        %v5262 = vadd.f32 %v5261, %v5107
        %v5263 = vadd.f32 %v5262, %v5111
        %v5264 = vadd.f32 %v5263, %v5115
        %v5265 = vadd.f32 %v5264, %v5119
        %v5266 = vadd.f32 %v5265, %v5123
        %v5267 = vadd.f32 %v5266, %v5127
        %v5268 = vadd.f32 %v5267, %v5131
        %v5269 = vadd.f32 %v5268, %v5135
        %v5270 = vadd.f32 %v5269, %v5139
        %v5271 = vadd.f32 %v5270, %v5143
        %v5272 = vadd.f32 %v5271, %v5147
        %v5273 = vadd.f32 %v5272, %v5151
        %v5274 = vadd.f32 %v5273, %v5155
        %v5275 = vadd.f32 %v5274, %v5159
        %v5276 = vadd.f32 %v5275, %v5163
        %v5277 = vadd.f32 %v5276, %v5167
        %v5278 = vadd.f32 %v5277, %v5171
        %v5279 = vadd.f32 %v5278, %v5175
        %v5280 = vadd.f32 %v5279, %v5179
        %v5281 = vadd.f32 %v5280, %v5183
        %v5282 = vadd.f32 %v5281, %v5187
        %v5283 = vadd.f32 %v5282, %v5191
        %v5284 = vadd.f32 %v5283, %v5195
        %v5285 = vadd.f32 %v5284, %v5199
        %v5286 = vadd.f32 %v5285, %v5203
        %v5287 = vadd.f32 %v5286, %v5207
        %v5288 = vadd.f32 %v5287, %v5211
        %v5289 = vadd.f32 %v5288, %v5215
        %v5290 = vadd.f32 %v5289, %v5219
        %v5291 = vadd.f32 %v5290, %v5223
        %v5292 = vrot.slane %v5291, 4
        %v5293 = vadd.f32 %v5291, %v5292
        %v5294 = vrot.slane %v5293, 2
        %v5295 = vadd.f32 %v5293, %v5294
        %v5296 = vrot.slane %v5295, 1
        %v5297 = vadd.f32 %v5295, %v5296
        %v5298 = vpack.c.bf16 %v5101, %v5097
        %v5299 = vpack.c.bf16 %v5103, %v5099
        %v5300 = vpack.c.bf16 %v5109, %v5105
        %v5301 = vpack.c.bf16 %v5111, %v5107
        %v5302 = vpack.c.bf16 %v5117, %v5113
        %v5303 = vpack.c.bf16 %v5119, %v5115
        %v5304 = vpack.c.bf16 %v5125, %v5121
        %v5305 = vpack.c.bf16 %v5127, %v5123
        %v5306 = vpack.c.bf16 %v5133, %v5129
        %v5307 = vpack.c.bf16 %v5135, %v5131
        %v5308 = vpack.c.bf16 %v5141, %v5137
        %v5309 = vpack.c.bf16 %v5143, %v5139
        %v5310 = vpack.c.bf16 %v5149, %v5145
        %v5311 = vpack.c.bf16 %v5151, %v5147
        %v5312 = vpack.c.bf16 %v5157, %v5153
        %v5313 = vpack.c.bf16 %v5159, %v5155
        %v5314 = vpack.c.bf16 %v5165, %v5161
        %v5315 = vpack.c.bf16 %v5167, %v5163
        %v5316 = vpack.c.bf16 %v5173, %v5169
        %v5317 = vpack.c.bf16 %v5175, %v5171
        %v5318 = vpack.c.bf16 %v5181, %v5177
        %v5319 = vpack.c.bf16 %v5183, %v5179
        %v5320 = vpack.c.bf16 %v5189, %v5185
        %v5321 = vpack.c.bf16 %v5191, %v5187
        %v5322 = vpack.c.bf16 %v5197, %v5193
        %v5323 = vpack.c.bf16 %v5199, %v5195
        %v5324 = vpack.c.bf16 %v5205, %v5201
        %v5325 = vpack.c.bf16 %v5207, %v5203
        %v5326 = vpack.c.bf16 %v5213, %v5209
        %v5327 = vpack.c.bf16 %v5215, %v5211
        %v5328 = vpack.c.bf16 %v5221, %v5217
        %v5329 = vpack.c.bf16 %v5223, %v5219
        %5330 = vmatprep.subr.bf16.mxu0 %v5299
        %5331 = vmatpush1.bf16.msra.mxu0 %v5298
        %5332 = vmatprep.subr.bf16.mxu0 %v5301
        %5333 = vmatpush1.bf16.msra.mxu0 %v5300
        %5334 = vmatprep.subr.bf16.mxu0 %v5303
        %5335 = vmatpush1.bf16.msra.mxu0 %v5302
        %5336 = vmatprep.subr.bf16.mxu0 %v5305
        %5337 = vmatpush1.bf16.msra.mxu0 %v5304
        %5338 = vmatprep.subr.bf16.mxu0 %v5307
        %5339 = vmatpush1.bf16.msra.mxu0 %v5306
        %5340 = vmatprep.subr.bf16.mxu0 %v5309
        %5341 = vmatpush1.bf16.msra.mxu0 %v5308
        %5342 = vmatprep.subr.bf16.mxu0 %v5311
        %5343 = vmatpush1.bf16.msra.mxu0 %v5310
        %5344 = vmatprep.subr.bf16.mxu0 %v5313
        %5345 = vmatpush1.bf16.msra.mxu0 %v5312
        %5346 = vmatprep.subr.bf16.mxu0 %v5315
        %5347 = vmatpush1.bf16.msra.mxu0 %v5314
        %5348 = vmatprep.subr.bf16.mxu0 %v5317
        %5349 = vmatpush1.bf16.msra.mxu0 %v5316
        %5350 = vmatprep.subr.bf16.mxu0 %v5319
        %5351 = vmatpush1.bf16.msra.mxu0 %v5318
        %5352 = vmatprep.subr.bf16.mxu0 %v5321
        %5353 = vmatpush1.bf16.msra.mxu0 %v5320
        %5354 = vmatprep.subr.bf16.mxu0 %v5323
        %5355 = vmatpush1.bf16.msra.mxu0 %v5322
        %5356 = vmatprep.subr.bf16.mxu0 %v5325
        %5357 = vmatpush1.bf16.msra.mxu0 %v5324
        %5358 = vmatprep.subr.bf16.mxu0 %v5327
        %5359 = vmatpush1.bf16.msra.mxu0 %v5326
        %5360 = vmatprep.subr.bf16.mxu0 %v5329
        %5361 = vmatpush1.bf16.msra.mxu0 %v5328
        %5362 = vmatprep.mubr.bf16.mxu0 %v4678
        %5363 = vmatmul.mubr.bf16.gmra.mrb[0].mxu0 %v4677
        %v5364 = vpop.f32.mrb[0].mxu0
        %v5365 = vadd.f32 0.0, %v5364
        %v5366 = vpop.f32.mrb[0].mxu0
        %v5367 = vadd.f32 0.0, %v5366
        %v5368 = vpop.f32.mrb[0].mxu0
        %v5369 = vpop.f32.mrb[0].mxu0
        %5370 = vdwg.mxu0
        %v5371 = vrcp.pop %v5260
        %v5372 = vrcp.pop %v5297
        %v5373 = vmul.f32 %v5365, %v5371
        %v5374 = vmul.f32 %v5367, %v5372
        %5375 = vst [vmem:[#allocation2 + $0x30] sm:$0xf] %v5373
        %5376 = vst [vmem:[#allocation2 + $0x38] sm:$0xf] %v5374
        %v5379 = vrot.slane %v4675, 2
        %v5380 = vrot.slane %v4676, 2
        %5383 = vxpose.xlu0.c.b16.start [1/8] %v5379, 128
        %5384 = vxpose.xlu0.c.b16.cont [2/8] 0, 128
        %5385 = vxpose.xlu0.c.b16.cont [3/8] 0, 128
        %5386 = vxpose.xlu0.c.b16.cont [4/8] 0, 128
        %5387 = vxpose.xlu0.c.b16.cont [5/8] 0, 128
        %5388 = vxpose.xlu0.c.b16.cont [6/8] 0, 128
        %5389 = vxpose.xlu0.c.b16.cont [7/8] 0, 128
        %5390 = vxpose.xlu0.c.b16.end [8/8] 0, 128
        %v5391 = vpop.trf.xlu0
        %v5392 = vpop.trf.xlu0
        %v5393 = vpop.trf.xlu0
        %v5394 = vpop.trf.xlu0
        %v5395 = vpop.trf.xlu0
        %v5396 = vpop.trf.xlu0
        %v5397 = vpop.trf.xlu0
        %v5398 = vpop.trf.xlu0
        %5399 = vxpose.xlu0.c.b16.start [1/8] %v5380, 128
        %5400 = vxpose.xlu0.c.b16.cont [2/8] 0, 128
        %5401 = vxpose.xlu0.c.b16.cont [3/8] 0, 128
        %5402 = vxpose.xlu0.c.b16.cont [4/8] 0, 128
        %5403 = vxpose.xlu0.c.b16.cont [5/8] 0, 128
        %5404 = vxpose.xlu0.c.b16.cont [6/8] 0, 128
        %5405 = vxpose.xlu0.c.b16.cont [7/8] 0, 128
        %5406 = vxpose.xlu0.c.b16.end [8/8] 0, 128
        %v5407 = vpop.trf.xlu0
        %v5408 = vpop.trf.xlu0
        %v5409 = vpop.trf.xlu0
        %v5410 = vpop.trf.xlu0
        %v5411 = vpop.trf.xlu0
        %v5412 = vpop.trf.xlu0
        %v5413 = vpop.trf.xlu0
        %v5414 = vpop.trf.xlu0
        %v5417 = vrot.slane %v4673, 2
        %v5418 = vrot.slane %v4674, 2
        %v5420 = vsel %vm431, %v5391, 0
        %v5423 = vsel %vm431, %v5392, 0
        %v5426 = vsel %vm431, %v5393, 0
        %v5429 = vsel %vm431, %v5394, 0
        %v5432 = vsel %vm431, %v5395, 0
        %v5435 = vsel %vm431, %v5396, 0
        %v5438 = vsel %vm431, %v5397, 0
        %v5441 = vsel %vm431, %v5398, 0
        %v5444 = vsel %vm431, %v5407, 0
        %v5447 = vsel %vm431, %v5408, 0
        %v5450 = vsel %vm431, %v5409, 0
        %v5453 = vsel %vm431, %v5410, 0
        %v5456 = vsel %vm431, %v5411, 0
        %v5459 = vsel %vm431, %v5412, 0
        %v5462 = vsel %vm431, %v5413, 0
        %v5465 = vsel %vm431, %v5414, 0
        %v5468 = vsel %vm480, %v5417, 0
        %v5471 = vsel %vm480, %v5418, 0
        %5473 = vmatprep.subr.bf16.mxu0 %v5471
        %5474 = vmatpush1.bf16.msra.mxu0 %v5468
        %5475 = vmatprep.subr.bf16.mxu0 0
        %5476 = vmatpush1.bf16.msra.mxu0 0
        %5477 = vmatprep.subr.bf16.mxu0 0
        %5478 = vmatpush1.bf16.msra.mxu0 0
        %5479 = vmatprep.subr.bf16.mxu0 0
        %5480 = vmatpush1.bf16.msra.mxu0 0
        %5481 = vmatprep.subr.bf16.mxu0 0
        %5482 = vmatpush1.bf16.msra.mxu0 0
        %5483 = vmatprep.subr.bf16.mxu0 0
        %5484 = vmatpush1.bf16.msra.mxu0 0
        %5485 = vmatprep.subr.bf16.mxu0 0
        %5486 = vmatpush1.bf16.msra.mxu0 0
        %5487 = vmatprep.subr.bf16.mxu0 0
        %5488 = vmatpush1.bf16.msra.mxu0 0
        %5489 = vmatprep.subr.bf16.mxu0 0
        %5490 = vmatpush1.bf16.msra.mxu0 0
        %5491 = vmatprep.subr.bf16.mxu0 0
        %5492 = vmatpush1.bf16.msra.mxu0 0
        %5493 = vmatprep.subr.bf16.mxu0 0
        %5494 = vmatpush1.bf16.msra.mxu0 0
        %5495 = vmatprep.subr.bf16.mxu0 0
        %5496 = vmatpush1.bf16.msra.mxu0 0
        %5497 = vmatprep.subr.bf16.mxu0 0
        %5498 = vmatpush1.bf16.msra.mxu0 0
        %5499 = vmatprep.subr.bf16.mxu0 0
        %5500 = vmatpush1.bf16.msra.mxu0 0
        %5501 = vmatprep.subr.bf16.mxu0 0
        %5502 = vmatpush1.bf16.msra.mxu0 0
        %5503 = vmatprep.subr.bf16.mxu0 0
        %5504 = vmatpush1.bf16.msra.mxu0 0
        %5505 = vmatprep.mubr.bf16.mxu0 0
        %5506 = vmatmul.mubr.bf16.gmra.mrb[0].mxu0 %v5420
        %v5507 = vpop.f32.mrb[0].mxu0
        %v5508 = vadd.f32 0.0, %v5507
        %v5509 = vpop.f32.mrb[0].mxu0
        %v5510 = vadd.f32 0.0, %v5509
        %v5511 = vpop.f32.mrb[0].mxu0
        %v5512 = vadd.f32 0.0, %v5511
        %v5513 = vpop.f32.mrb[0].mxu0
        %v5514 = vadd.f32 0.0, %v5513
        %5515 = vmatprep.mubr.bf16.mxu0 0
        %5516 = vmatmul.mubr.bf16.gmra.mrb[0].mxu0 %v5423
        %v5517 = vpop.f32.mrb[0].mxu0
        %v5518 = vadd.f32 0.0, %v5517
        %v5519 = vpop.f32.mrb[0].mxu0
        %v5520 = vadd.f32 0.0, %v5519
        %v5521 = vpop.f32.mrb[0].mxu0
        %v5522 = vadd.f32 0.0, %v5521
        %v5523 = vpop.f32.mrb[0].mxu0
        %v5524 = vadd.f32 0.0, %v5523
        %5525 = vmatprep.mubr.bf16.mxu0 0
        %5526 = vmatmul.mubr.bf16.gmra.mrb[0].mxu0 %v5426
        %v5527 = vpop.f32.mrb[0].mxu0
        %v5528 = vadd.f32 0.0, %v5527
        %v5529 = vpop.f32.mrb[0].mxu0
        %v5530 = vadd.f32 0.0, %v5529
        %v5531 = vpop.f32.mrb[0].mxu0
        %v5532 = vadd.f32 0.0, %v5531
        %v5533 = vpop.f32.mrb[0].mxu0
        %v5534 = vadd.f32 0.0, %v5533
        %5535 = vmatprep.mubr.bf16.mxu0 0
        %5536 = vmatmul.mubr.bf16.gmra.mrb[0].mxu0 %v5429
        %v5537 = vpop.f32.mrb[0].mxu0
        %v5538 = vadd.f32 0.0, %v5537
        %v5539 = vpop.f32.mrb[0].mxu0
        %v5540 = vadd.f32 0.0, %v5539
        %v5541 = vpop.f32.mrb[0].mxu0
        %v5542 = vadd.f32 0.0, %v5541
        %v5543 = vpop.f32.mrb[0].mxu0
        %v5544 = vadd.f32 0.0, %v5543
        %5545 = vmatprep.mubr.bf16.mxu0 0
        %5546 = vmatmul.mubr.bf16.gmra.mrb[0].mxu0 %v5432
        %v5547 = vpop.f32.mrb[0].mxu0
        %v5548 = vadd.f32 0.0, %v5547
        %v5549 = vpop.f32.mrb[0].mxu0
        %v5550 = vadd.f32 0.0, %v5549
        %v5551 = vpop.f32.mrb[0].mxu0
        %v5552 = vadd.f32 0.0, %v5551
        %v5553 = vpop.f32.mrb[0].mxu0
        %v5554 = vadd.f32 0.0, %v5553
        %5555 = vmatprep.mubr.bf16.mxu0 0
        %5556 = vmatmul.mubr.bf16.gmra.mrb[0].mxu0 %v5435
        %v5557 = vpop.f32.mrb[0].mxu0
        %v5558 = vadd.f32 0.0, %v5557
        %v5559 = vpop.f32.mrb[0].mxu0
        %v5560 = vadd.f32 0.0, %v5559
        %v5561 = vpop.f32.mrb[0].mxu0
        %v5562 = vadd.f32 0.0, %v5561
        %v5563 = vpop.f32.mrb[0].mxu0
        %v5564 = vadd.f32 0.0, %v5563
        %5565 = vmatprep.mubr.bf16.mxu0 0
        %5566 = vmatmul.mubr.bf16.gmra.mrb[0].mxu0 %v5438
        %v5567 = vpop.f32.mrb[0].mxu0
        %v5568 = vadd.f32 0.0, %v5567
        %v5569 = vpop.f32.mrb[0].mxu0
        %v5570 = vadd.f32 0.0, %v5569
        %v5571 = vpop.f32.mrb[0].mxu0
        %v5572 = vadd.f32 0.0, %v5571
        %v5573 = vpop.f32.mrb[0].mxu0
        %v5574 = vadd.f32 0.0, %v5573
        %5575 = vmatprep.mubr.bf16.mxu0 0
        %5576 = vmatmul.mubr.bf16.gmra.mrb[0].mxu0 %v5441
        %v5577 = vpop.f32.mrb[0].mxu0
        %v5578 = vadd.f32 0.0, %v5577
        %v5579 = vpop.f32.mrb[0].mxu0
        %v5580 = vadd.f32 0.0, %v5579
        %v5581 = vpop.f32.mrb[0].mxu0
        %v5582 = vadd.f32 0.0, %v5581
        %v5583 = vpop.f32.mrb[0].mxu0
        %v5584 = vadd.f32 0.0, %v5583
        %5585 = vmatprep.mubr.bf16.mxu0 0
        %5586 = vmatmul.mubr.bf16.gmra.mrb[0].mxu0 %v5444
        %v5587 = vpop.f32.mrb[0].mxu0
        %v5588 = vadd.f32 0.0, %v5587
        %v5589 = vpop.f32.mrb[0].mxu0
        %v5590 = vadd.f32 0.0, %v5589
        %v5591 = vpop.f32.mrb[0].mxu0
        %v5592 = vadd.f32 0.0, %v5591
        %v5593 = vpop.f32.mrb[0].mxu0
        %v5594 = vadd.f32 0.0, %v5593
        %5595 = vmatprep.mubr.bf16.mxu0 0
        %5596 = vmatmul.mubr.bf16.gmra.mrb[0].mxu0 %v5447
        %v5597 = vpop.f32.mrb[0].mxu0
        %v5598 = vadd.f32 0.0, %v5597
        %v5599 = vpop.f32.mrb[0].mxu0
        %v5600 = vadd.f32 0.0, %v5599
        %v5601 = vpop.f32.mrb[0].mxu0
        %v5602 = vadd.f32 0.0, %v5601
        %v5603 = vpop.f32.mrb[0].mxu0
        %v5604 = vadd.f32 0.0, %v5603
        %5605 = vmatprep.mubr.bf16.mxu0 0
        %5606 = vmatmul.mubr.bf16.gmra.mrb[0].mxu0 %v5450
        %v5607 = vpop.f32.mrb[0].mxu0
        %v5608 = vadd.f32 0.0, %v5607
        %v5609 = vpop.f32.mrb[0].mxu0
        %v5610 = vadd.f32 0.0, %v5609
        %v5611 = vpop.f32.mrb[0].mxu0
        %v5612 = vadd.f32 0.0, %v5611
        %v5613 = vpop.f32.mrb[0].mxu0
        %v5614 = vadd.f32 0.0, %v5613
        %5615 = vmatprep.mubr.bf16.mxu0 0
        %5616 = vmatmul.mubr.bf16.gmra.mrb[0].mxu0 %v5453
        %v5617 = vpop.f32.mrb[0].mxu0
        %v5618 = vadd.f32 0.0, %v5617
        %v5619 = vpop.f32.mrb[0].mxu0
        %v5620 = vadd.f32 0.0, %v5619
        %v5621 = vpop.f32.mrb[0].mxu0
        %v5622 = vadd.f32 0.0, %v5621
        %v5623 = vpop.f32.mrb[0].mxu0
        %v5624 = vadd.f32 0.0, %v5623
        %5625 = vmatprep.mubr.bf16.mxu0 0
        %5626 = vmatmul.mubr.bf16.gmra.mrb[0].mxu0 %v5456
        %v5627 = vpop.f32.mrb[0].mxu0
        %v5628 = vadd.f32 0.0, %v5627
        %v5629 = vpop.f32.mrb[0].mxu0
        %v5630 = vadd.f32 0.0, %v5629
        %v5631 = vpop.f32.mrb[0].mxu0
        %v5632 = vadd.f32 0.0, %v5631
        %v5633 = vpop.f32.mrb[0].mxu0
        %v5634 = vadd.f32 0.0, %v5633
        %5635 = vmatprep.mubr.bf16.mxu0 0
        %5636 = vmatmul.mubr.bf16.gmra.mrb[0].mxu0 %v5459
        %v5637 = vpop.f32.mrb[0].mxu0
        %v5638 = vadd.f32 0.0, %v5637
        %v5639 = vpop.f32.mrb[0].mxu0
        %v5640 = vadd.f32 0.0, %v5639
        %v5641 = vpop.f32.mrb[0].mxu0
        %v5642 = vadd.f32 0.0, %v5641
        %v5643 = vpop.f32.mrb[0].mxu0
        %v5644 = vadd.f32 0.0, %v5643
        %5645 = vmatprep.mubr.bf16.mxu0 0
        %5646 = vmatmul.mubr.bf16.gmra.mrb[0].mxu0 %v5462
        %v5647 = vpop.f32.mrb[0].mxu0
        %v5648 = vadd.f32 0.0, %v5647
        %v5649 = vpop.f32.mrb[0].mxu0
        %v5650 = vadd.f32 0.0, %v5649
        %v5651 = vpop.f32.mrb[0].mxu0
        %v5652 = vadd.f32 0.0, %v5651
        %v5653 = vpop.f32.mrb[0].mxu0
        %v5654 = vadd.f32 0.0, %v5653
        %5655 = vmatprep.mubr.bf16.mxu0 0
        %5656 = vmatmul.mubr.bf16.gmra.mrb[0].mxu0 %v5465
        %v5657 = vpop.f32.mrb[0].mxu0
        %v5658 = vadd.f32 0.0, %v5657
        %v5659 = vpop.f32.mrb[0].mxu0
        %v5660 = vadd.f32 0.0, %v5659
        %v5661 = vpop.f32.mrb[0].mxu0
        %v5662 = vadd.f32 0.0, %v5661
        %v5663 = vpop.f32.mrb[0].mxu0
        %v5664 = vadd.f32 0.0, %v5663
        %5665 = vdwg.mxu0
        %v5666 = vmax.f32 %v5508, %v5518
        %v5667 = vmax.f32 %v5512, %v5522
        %v5668 = vmax.f32 %v5666, %v5528
        %v5669 = vmax.f32 %v5667, %v5532
        %v5670 = vmax.f32 %v5668, %v5538
        %v5671 = vmax.f32 %v5669, %v5542
        %v5672 = vmax.f32 %v5670, %v5548
        %v5673 = vmax.f32 %v5671, %v5552
        %v5674 = vmax.f32 %v5672, %v5558
        %v5675 = vmax.f32 %v5673, %v5562
        %v5676 = vmax.f32 %v5674, %v5568
        %v5677 = vmax.f32 %v5675, %v5572
        %v5678 = vmax.f32 %v5676, %v5578
        %v5679 = vmax.f32 %v5677, %v5582
        %v5680 = vmax.f32 %v5678, %v5588
        %v5681 = vmax.f32 %v5679, %v5592
        %v5682 = vmax.f32 %v5680, %v5598
        %v5683 = vmax.f32 %v5681, %v5602
        %v5684 = vmax.f32 %v5682, %v5608
        %v5685 = vmax.f32 %v5683, %v5612
        %v5686 = vmax.f32 %v5684, %v5618
        %v5687 = vmax.f32 %v5685, %v5622
        %v5688 = vmax.f32 %v5686, %v5628
        %v5689 = vmax.f32 %v5687, %v5632
        %v5690 = vmax.f32 %v5688, %v5638
        %v5691 = vmax.f32 %v5689, %v5642
        %v5692 = vmax.f32 %v5690, %v5648
        %v5693 = vmax.f32 %v5691, %v5652
        %v5694 = vmax.f32 %v5692, %v5658
        %v5695 = vmax.f32 %v5693, %v5662
        %v5696 = vmax.f32 %v5694, %v5695
        %v5697 = vrot.slane %v5696, 4
        %v5698 = vmax.f32 %v5696, %v5697
        %v5699 = vrot.slane %v5698, 2
        %v5700 = vmax.f32 %v5698, %v5699
        %v5701 = vrot.slane %v5700, 1
        %v5702 = vmax.f32 %v5700, %v5701
        %v5703 = vmax.f32 %v5510, %v5520
        %v5704 = vmax.f32 %v5514, %v5524
        %v5705 = vmax.f32 %v5703, %v5530
        %v5706 = vmax.f32 %v5704, %v5534
        %v5707 = vmax.f32 %v5705, %v5540
        %v5708 = vmax.f32 %v5706, %v5544
        %v5709 = vmax.f32 %v5707, %v5550
        %v5710 = vmax.f32 %v5708, %v5554
        %v5711 = vmax.f32 %v5709, %v5560
        %v5712 = vmax.f32 %v5710, %v5564
        %v5713 = vmax.f32 %v5711, %v5570
        %v5714 = vmax.f32 %v5712, %v5574
        %v5715 = vmax.f32 %v5713, %v5580
        %v5716 = vmax.f32 %v5714, %v5584
        %v5717 = vmax.f32 %v5715, %v5590
        %v5718 = vmax.f32 %v5716, %v5594
        %v5719 = vmax.f32 %v5717, %v5600
        %v5720 = vmax.f32 %v5718, %v5604
        %v5721 = vmax.f32 %v5719, %v5610
        %v5722 = vmax.f32 %v5720, %v5614
        %v5723 = vmax.f32 %v5721, %v5620
        %v5724 = vmax.f32 %v5722, %v5624
        %v5725 = vmax.f32 %v5723, %v5630
        %v5726 = vmax.f32 %v5724, %v5634
        %v5727 = vmax.f32 %v5725, %v5640
        %v5728 = vmax.f32 %v5726, %v5644
        %v5729 = vmax.f32 %v5727, %v5650
        %v5730 = vmax.f32 %v5728, %v5654
        %v5731 = vmax.f32 %v5729, %v5660
        %v5732 = vmax.f32 %v5730, %v5664
        %v5733 = vmax.f32 %v5731, %v5732
        %v5734 = vrot.slane %v5733, 4
        %v5735 = vmax.f32 %v5733, %v5734
        %v5736 = vrot.slane %v5735, 2
        %v5737 = vmax.f32 %v5735, %v5736
        %v5738 = vrot.slane %v5737, 1
        %v5739 = vmax.f32 %v5737, %v5738
        %v5740 = vsub.f32 %v5508, %v5702
        %v5741 = vsub.f32 %v5510, %v5739
        %v5742 = vsub.f32 %v5512, %v5702
        %v5743 = vsub.f32 %v5514, %v5739
        %v5744 = vsub.f32 %v5518, %v5702
        %v5745 = vsub.f32 %v5520, %v5739
        %v5746 = vsub.f32 %v5522, %v5702
        %v5747 = vsub.f32 %v5524, %v5739
        %v5748 = vsub.f32 %v5528, %v5702
        %v5749 = vsub.f32 %v5530, %v5739
        %v5750 = vsub.f32 %v5532, %v5702
        %v5751 = vsub.f32 %v5534, %v5739
        %v5752 = vsub.f32 %v5538, %v5702
        %v5753 = vsub.f32 %v5540, %v5739
        %v5754 = vsub.f32 %v5542, %v5702
        %v5755 = vsub.f32 %v5544, %v5739
        %v5756 = vsub.f32 %v5548, %v5702
        %v5757 = vsub.f32 %v5550, %v5739
        %v5758 = vsub.f32 %v5552, %v5702
        %v5759 = vsub.f32 %v5554, %v5739
        %v5760 = vsub.f32 %v5558, %v5702
        %v5761 = vsub.f32 %v5560, %v5739
        %v5762 = vsub.f32 %v5562, %v5702
        %v5763 = vsub.f32 %v5564, %v5739
        %v5764 = vsub.f32 %v5568, %v5702
        %v5765 = vsub.f32 %v5570, %v5739
        %v5766 = vsub.f32 %v5572, %v5702
        %v5767 = vsub.f32 %v5574, %v5739
        %v5768 = vsub.f32 %v5578, %v5702
        %v5769 = vsub.f32 %v5580, %v5739
        %v5770 = vsub.f32 %v5582, %v5702
        %v5771 = vsub.f32 %v5584, %v5739
        %v5772 = vsub.f32 %v5588, %v5702
        %v5773 = vsub.f32 %v5590, %v5739
        %v5774 = vsub.f32 %v5592, %v5702
        %v5775 = vsub.f32 %v5594, %v5739
        %v5776 = vsub.f32 %v5598, %v5702
        %v5777 = vsub.f32 %v5600, %v5739
        %v5778 = vsub.f32 %v5602, %v5702
        %v5779 = vsub.f32 %v5604, %v5739
        %v5780 = vsub.f32 %v5608, %v5702
        %v5781 = vsub.f32 %v5610, %v5739
        %v5782 = vsub.f32 %v5612, %v5702
        %v5783 = vsub.f32 %v5614, %v5739
        %v5784 = vsub.f32 %v5618, %v5702
        %v5785 = vsub.f32 %v5620, %v5739
        %v5786 = vsub.f32 %v5622, %v5702
        %v5787 = vsub.f32 %v5624, %v5739
        %v5788 = vsub.f32 %v5628, %v5702
        %v5789 = vsub.f32 %v5630, %v5739
        %v5790 = vsub.f32 %v5632, %v5702
        %v5791 = vsub.f32 %v5634, %v5739
        %v5792 = vsub.f32 %v5638, %v5702
        %v5793 = vsub.f32 %v5640, %v5739
        %v5794 = vsub.f32 %v5642, %v5702
        %v5795 = vsub.f32 %v5644, %v5739
        %v5796 = vsub.f32 %v5648, %v5702
        %v5797 = vsub.f32 %v5650, %v5739
        %v5798 = vsub.f32 %v5652, %v5702
        %v5799 = vsub.f32 %v5654, %v5739
        %v5800 = vsub.f32 %v5658, %v5702
        %v5801 = vsub.f32 %v5660, %v5739
        %v5802 = vsub.f32 %v5662, %v5702
        %v5803 = vsub.f32 %v5664, %v5739
        %v5804 = vmul.f32 %v5740, 1.442695
        %v5805 = vpow.pop %v5804
        %v5806 = vmul.f32 %v5741, 1.442695
        %v5807 = vpow.pop %v5806
        %v5808 = vmul.f32 %v5742, 1.442695
        %v5809 = vpow.pop %v5808
        %v5810 = vmul.f32 %v5743, 1.442695
        %v5811 = vpow.pop %v5810
        %v5812 = vmul.f32 %v5744, 1.442695
        %v5813 = vpow.pop %v5812
        %v5814 = vmul.f32 %v5745, 1.442695
        %v5815 = vpow.pop %v5814
        %v5816 = vmul.f32 %v5746, 1.442695
        %v5817 = vpow.pop %v5816
        %v5818 = vmul.f32 %v5747, 1.442695
        %v5819 = vpow.pop %v5818
        %v5820 = vmul.f32 %v5748, 1.442695
        %v5821 = vpow.pop %v5820
        %v5822 = vmul.f32 %v5749, 1.442695
        %v5823 = vpow.pop %v5822
        %v5824 = vmul.f32 %v5750, 1.442695
        %v5825 = vpow.pop %v5824
        %v5826 = vmul.f32 %v5751, 1.442695
        %v5827 = vpow.pop %v5826
        %v5828 = vmul.f32 %v5752, 1.442695
        %v5829 = vpow.pop %v5828
        %v5830 = vmul.f32 %v5753, 1.442695
        %v5831 = vpow.pop %v5830
        %v5832 = vmul.f32 %v5754, 1.442695
        %v5833 = vpow.pop %v5832
        %v5834 = vmul.f32 %v5755, 1.442695
        %v5835 = vpow.pop %v5834
        %v5836 = vmul.f32 %v5756, 1.442695
        %v5837 = vpow.pop %v5836
        %v5838 = vmul.f32 %v5757, 1.442695
        %v5839 = vpow.pop %v5838
        %v5840 = vmul.f32 %v5758, 1.442695
        %v5841 = vpow.pop %v5840
        %v5842 = vmul.f32 %v5759, 1.442695
        %v5843 = vpow.pop %v5842
        %v5844 = vmul.f32 %v5760, 1.442695
        %v5845 = vpow.pop %v5844
        %v5846 = vmul.f32 %v5761, 1.442695
        %v5847 = vpow.pop %v5846
        %v5848 = vmul.f32 %v5762, 1.442695
        %v5849 = vpow.pop %v5848
        %v5850 = vmul.f32 %v5763, 1.442695
        %v5851 = vpow.pop %v5850
        %v5852 = vmul.f32 %v5764, 1.442695
        %v5853 = vpow.pop %v5852
        %v5854 = vmul.f32 %v5765, 1.442695
        %v5855 = vpow.pop %v5854
        %v5856 = vmul.f32 %v5766, 1.442695
        %v5857 = vpow.pop %v5856
        %v5858 = vmul.f32 %v5767, 1.442695
        %v5859 = vpow.pop %v5858
        %v5860 = vmul.f32 %v5768, 1.442695
        %v5861 = vpow.pop %v5860
        %v5862 = vmul.f32 %v5769, 1.442695
        %v5863 = vpow.pop %v5862
        %v5864 = vmul.f32 %v5770, 1.442695
        %v5865 = vpow.pop %v5864
        %v5866 = vmul.f32 %v5771, 1.442695
        %v5867 = vpow.pop %v5866
        %v5868 = vmul.f32 %v5772, 1.442695
        %v5869 = vpow.pop %v5868
        %v5870 = vmul.f32 %v5773, 1.442695
        %v5871 = vpow.pop %v5870
        %v5872 = vmul.f32 %v5774, 1.442695
        %v5873 = vpow.pop %v5872
        %v5874 = vmul.f32 %v5775, 1.442695
        %v5875 = vpow.pop %v5874
        %v5876 = vmul.f32 %v5776, 1.442695
        %v5877 = vpow.pop %v5876
        %v5878 = vmul.f32 %v5777, 1.442695
        %v5879 = vpow.pop %v5878
        %v5880 = vmul.f32 %v5778, 1.442695
        %v5881 = vpow.pop %v5880
        %v5882 = vmul.f32 %v5779, 1.442695
        %v5883 = vpow.pop %v5882
        %v5884 = vmul.f32 %v5780, 1.442695
        %v5885 = vpow.pop %v5884
        %v5886 = vmul.f32 %v5781, 1.442695
        %v5887 = vpow.pop %v5886
        %v5888 = vmul.f32 %v5782, 1.442695
        %v5889 = vpow.pop %v5888
        %v5890 = vmul.f32 %v5783, 1.442695
        %v5891 = vpow.pop %v5890
        %v5892 = vmul.f32 %v5784, 1.442695
        %v5893 = vpow.pop %v5892
        %v5894 = vmul.f32 %v5785, 1.442695
        %v5895 = vpow.pop %v5894
        %v5896 = vmul.f32 %v5786, 1.442695
        %v5897 = vpow.pop %v5896
        %v5898 = vmul.f32 %v5787, 1.442695
        %v5899 = vpow.pop %v5898
        %v5900 = vmul.f32 %v5788, 1.442695
        %v5901 = vpow.pop %v5900
        %v5902 = vmul.f32 %v5789, 1.442695
        %v5903 = vpow.pop %v5902
        %v5904 = vmul.f32 %v5790, 1.442695
        %v5905 = vpow.pop %v5904
        %v5906 = vmul.f32 %v5791, 1.442695
        %v5907 = vpow.pop %v5906
        %v5908 = vmul.f32 %v5792, 1.442695
        %v5909 = vpow.pop %v5908
        %v5910 = vmul.f32 %v5793, 1.442695
        %v5911 = vpow.pop %v5910
        %v5912 = vmul.f32 %v5794, 1.442695
        %v5913 = vpow.pop %v5912
        %v5914 = vmul.f32 %v5795, 1.442695
        %v5915 = vpow.pop %v5914
        %v5916 = vmul.f32 %v5796, 1.442695
        %v5917 = vpow.pop %v5916
        %v5918 = vmul.f32 %v5797, 1.442695
        %v5919 = vpow.pop %v5918
        %v5920 = vmul.f32 %v5798, 1.442695
        %v5921 = vpow.pop %v5920
        %v5922 = vmul.f32 %v5799, 1.442695
        %v5923 = vpow.pop %v5922
        %v5924 = vmul.f32 %v5800, 1.442695
        %v5925 = vpow.pop %v5924
        %v5926 = vmul.f32 %v5801, 1.442695
        %v5927 = vpow.pop %v5926
        %v5928 = vmul.f32 %v5802, 1.442695
        %v5929 = vpow.pop %v5928
        %v5930 = vmul.f32 %v5803, 1.442695
        %v5931 = vpow.pop %v5930
        %v5932 = vadd.f32 %v5805, %v5809
        %v5933 = vadd.f32 %v5932, %v5813
        %v5934 = vadd.f32 %v5933, %v5817
        %v5935 = vadd.f32 %v5934, %v5821
        %v5936 = vadd.f32 %v5935, %v5825
        %v5937 = vadd.f32 %v5936, %v5829
        %v5938 = vadd.f32 %v5937, %v5833
        %v5939 = vadd.f32 %v5938, %v5837
        %v5940 = vadd.f32 %v5939, %v5841
        %v5941 = vadd.f32 %v5940, %v5845
        %v5942 = vadd.f32 %v5941, %v5849
        %v5943 = vadd.f32 %v5942, %v5853
        %v5944 = vadd.f32 %v5943, %v5857
        %v5945 = vadd.f32 %v5944, %v5861
        %v5946 = vadd.f32 %v5945, %v5865
        %v5947 = vadd.f32 %v5946, %v5869
        %v5948 = vadd.f32 %v5947, %v5873
        %v5949 = vadd.f32 %v5948, %v5877
        %v5950 = vadd.f32 %v5949, %v5881
        %v5951 = vadd.f32 %v5950, %v5885
        %v5952 = vadd.f32 %v5951, %v5889
        %v5953 = vadd.f32 %v5952, %v5893
        %v5954 = vadd.f32 %v5953, %v5897
        %v5955 = vadd.f32 %v5954, %v5901
        %v5956 = vadd.f32 %v5955, %v5905
        %v5957 = vadd.f32 %v5956, %v5909
        %v5958 = vadd.f32 %v5957, %v5913
        %v5959 = vadd.f32 %v5958, %v5917
        %v5960 = vadd.f32 %v5959, %v5921
        %v5961 = vadd.f32 %v5960, %v5925
        %v5962 = vadd.f32 %v5961, %v5929
        %v5963 = vrot.slane %v5962, 4
        %v5964 = vadd.f32 %v5962, %v5963
        %v5965 = vrot.slane %v5964, 2
        %v5966 = vadd.f32 %v5964, %v5965
        %v5967 = vrot.slane %v5966, 1
        %v5968 = vadd.f32 %v5966, %v5967
        %v5969 = vadd.f32 %v5807, %v5811
        %v5970 = vadd.f32 %v5969, %v5815
        %v5971 = vadd.f32 %v5970, %v5819
        %v5972 = vadd.f32 %v5971, %v5823
        %v5973 = vadd.f32 %v5972, %v5827
        %v5974 = vadd.f32 %v5973, %v5831
        %v5975 = vadd.f32 %v5974, %v5835
        %v5976 = vadd.f32 %v5975, %v5839
        %v5977 = vadd.f32 %v5976, %v5843
        %v5978 = vadd.f32 %v5977, %v5847
        %v5979 = vadd.f32 %v5978, %v5851
        %v5980 = vadd.f32 %v5979, %v5855
        %v5981 = vadd.f32 %v5980, %v5859
        %v5982 = vadd.f32 %v5981, %v5863
        %v5983 = vadd.f32 %v5982, %v5867
        %v5984 = vadd.f32 %v5983, %v5871
        %v5985 = vadd.f32 %v5984, %v5875
        %v5986 = vadd.f32 %v5985, %v5879
        %v5987 = vadd.f32 %v5986, %v5883
        %v5988 = vadd.f32 %v5987, %v5887
        %v5989 = vadd.f32 %v5988, %v5891
        %v5990 = vadd.f32 %v5989, %v5895
        %v5991 = vadd.f32 %v5990, %v5899
        %v5992 = vadd.f32 %v5991, %v5903
        %v5993 = vadd.f32 %v5992, %v5907
        %v5994 = vadd.f32 %v5993, %v5911
        %v5995 = vadd.f32 %v5994, %v5915
        %v5996 = vadd.f32 %v5995, %v5919
        %v5997 = vadd.f32 %v5996, %v5923
        %v5998 = vadd.f32 %v5997, %v5927
        %v5999 = vadd.f32 %v5998, %v5931
        %v6000 = vrot.slane %v5999, 4
        %v6001 = vadd.f32 %v5999, %v6000
        %v6002 = vrot.slane %v6001, 2
        %v6003 = vadd.f32 %v6001, %v6002
        %v6004 = vrot.slane %v6003, 1
        %v6005 = vadd.f32 %v6003, %v6004
        %v6006 = vpack.c.bf16 %v5809, %v5805
        %v6007 = vpack.c.bf16 %v5811, %v5807
        %v6008 = vpack.c.bf16 %v5817, %v5813
        %v6009 = vpack.c.bf16 %v5819, %v5815
        %v6010 = vpack.c.bf16 %v5825, %v5821
        %v6011 = vpack.c.bf16 %v5827, %v5823
        %v6012 = vpack.c.bf16 %v5833, %v5829
        %v6013 = vpack.c.bf16 %v5835, %v5831
        %v6014 = vpack.c.bf16 %v5841, %v5837
        %v6015 = vpack.c.bf16 %v5843, %v5839
        %v6016 = vpack.c.bf16 %v5849, %v5845
        %v6017 = vpack.c.bf16 %v5851, %v5847
        %v6018 = vpack.c.bf16 %v5857, %v5853
        %v6019 = vpack.c.bf16 %v5859, %v5855
        %v6020 = vpack.c.bf16 %v5865, %v5861
        %v6021 = vpack.c.bf16 %v5867, %v5863
        %v6022 = vpack.c.bf16 %v5873, %v5869
        %v6023 = vpack.c.bf16 %v5875, %v5871
        %v6024 = vpack.c.bf16 %v5881, %v5877
        %v6025 = vpack.c.bf16 %v5883, %v5879
        %v6026 = vpack.c.bf16 %v5889, %v5885
        %v6027 = vpack.c.bf16 %v5891, %v5887
        %v6028 = vpack.c.bf16 %v5897, %v5893
        %v6029 = vpack.c.bf16 %v5899, %v5895
        %v6030 = vpack.c.bf16 %v5905, %v5901
        %v6031 = vpack.c.bf16 %v5907, %v5903
        %v6032 = vpack.c.bf16 %v5913, %v5909
        %v6033 = vpack.c.bf16 %v5915, %v5911
        %v6034 = vpack.c.bf16 %v5921, %v5917
        %v6035 = vpack.c.bf16 %v5923, %v5919
        %v6036 = vpack.c.bf16 %v5929, %v5925
        %v6037 = vpack.c.bf16 %v5931, %v5927
        %v6040 = vrot.slane %v4677, 2
        %v6041 = vrot.slane %v4678, 2
        %6044 = vmatprep.subr.bf16.mxu0 %v6007
        %6045 = vmatpush1.bf16.msra.mxu0 %v6006
        %6046 = vmatprep.subr.bf16.mxu0 %v6009
        %6047 = vmatpush1.bf16.msra.mxu0 %v6008
        %6048 = vmatprep.subr.bf16.mxu0 %v6011
        %6049 = vmatpush1.bf16.msra.mxu0 %v6010
        %6050 = vmatprep.subr.bf16.mxu0 %v6013
        %6051 = vmatpush1.bf16.msra.mxu0 %v6012
        %6052 = vmatprep.subr.bf16.mxu0 %v6015
        %6053 = vmatpush1.bf16.msra.mxu0 %v6014
        %6054 = vmatprep.subr.bf16.mxu0 %v6017
        %6055 = vmatpush1.bf16.msra.mxu0 %v6016
        %6056 = vmatprep.subr.bf16.mxu0 %v6019
        %6057 = vmatpush1.bf16.msra.mxu0 %v6018
        %6058 = vmatprep.subr.bf16.mxu0 %v6021
        %6059 = vmatpush1.bf16.msra.mxu0 %v6020
        %6060 = vmatprep.subr.bf16.mxu0 %v6023
        %6061 = vmatpush1.bf16.msra.mxu0 %v6022
        %6062 = vmatprep.subr.bf16.mxu0 %v6025
        %6063 = vmatpush1.bf16.msra.mxu0 %v6024
        %6064 = vmatprep.subr.bf16.mxu0 %v6027
        %6065 = vmatpush1.bf16.msra.mxu0 %v6026
        %6066 = vmatprep.subr.bf16.mxu0 %v6029
        %6067 = vmatpush1.bf16.msra.mxu0 %v6028
        %6068 = vmatprep.subr.bf16.mxu0 %v6031
        %6069 = vmatpush1.bf16.msra.mxu0 %v6030
        %6070 = vmatprep.subr.bf16.mxu0 %v6033
        %6071 = vmatpush1.bf16.msra.mxu0 %v6032
        %6072 = vmatprep.subr.bf16.mxu0 %v6035
        %6073 = vmatpush1.bf16.msra.mxu0 %v6034
        %6074 = vmatprep.subr.bf16.mxu0 %v6037
        %6075 = vmatpush1.bf16.msra.mxu0 %v6036
        %6076 = vmatprep.mubr.bf16.mxu0 %v6041
        %6077 = vmatmul.mubr.bf16.gmra.mrb[0].mxu0 %v6040
        %v6078 = vpop.f32.mrb[0].mxu0
        %v6079 = vadd.f32 0.0, %v6078
        %v6080 = vpop.f32.mrb[0].mxu0
        %v6081 = vadd.f32 0.0, %v6080
        %v6082 = vpop.f32.mrb[0].mxu0
        %v6083 = vpop.f32.mrb[0].mxu0
        %6084 = vdwg.mxu0
        %v6085 = vrcp.pop %v5968
        %v6086 = vrcp.pop %v6005
        %v6087 = vmul.f32 %v6079, %v6085
        %v6088 = vmul.f32 %v6081, %v6086
        %v6091 = vrot.slane %v6087, 4
        %v6092 = vrot.slane %v6088, 4
        %6095 = vst [vmem:[#allocation2 + $0x30] sm:$0xf0] %v6091
        %6096 = vst [vmem:[#allocation2 + $0x38] sm:$0xf0] %v6092
        %v6097 = vld [vmem:[#allocation2] sm:$0xff]
        %v6098 = vld [vmem:[#allocation2 + $0x8] sm:$0xff]
        %v6099 = vld [vmem:[#allocation2 + $0x10] sm:$0xff]
        %v6100 = vld [vmem:[#allocation2 + $0x18] sm:$0xff]
        %v6101 = vld [vmem:[#allocation2 + $0x20] sm:$0xff]
        %v6102 = vld [vmem:[#allocation2 + $0x28] sm:$0xff]
        %v6103 = vld [vmem:[#allocation2 + $0x30] sm:$0xff]
        %v6104 = vld [vmem:[#allocation2 + $0x38] sm:$0xff]
        %v6105 = vpack.c.bf16 %v6099, %v6097
        %v6106 = vpack.c.bf16 %v6100, %v6098
        %v6107 = vpack.c.bf16 %v6103, %v6101
        %v6108 = vpack.c.bf16 %v6104, %v6102
        %6110 = vset.pattern.permute.xlu0 0
        %6111 = vperm.xlu0 %6110, %v233
        %v6112 = vpop.permute.xlu0 %6111
        %6115 = vset.pattern.permute.xlu0 0
        %6116 = vperm.xlu0 %6115, %v234
        %v6117 = vpop.permute.xlu0 %6116
        %6120 = vset.pattern.permute.xlu0 0
        %6121 = vperm.xlu0 %6120, %v235
        %v6122 = vpop.permute.xlu0 %6121
        %6125 = vset.pattern.permute.xlu0 0
        %6126 = vperm.xlu0 %6125, %v236
        %v6127 = vpop.permute.xlu0 %6126
        %v6133 = vunpack.c.l.b16 %v229
        %v6134 = vunpack.c.l.b16 %v230
        %v6135 = vunpack.c.l.b16 %v231
        %v6136 = vunpack.c.l.b16 %v232
        %v6137 = vpack.c.b16 %v6134, %v6133
        %v6138 = vpack.c.b16 %v6136, %v6135
        %v6140 = vsel %vm279, %v6137, 0
        %v6143 = vsel %vm279, %v6138, 0
        %6145 = vmatprep.subr.bf16.mxu0 %v6106
        %6146 = vmatpush1.bf16.msra.mxu0 %v6105
        %6147 = vmatprep.subr.bf16.mxu0 %v6108
        %6148 = vmatpush1.bf16.msra.mxu0 %v6107
        %6149 = vmatprep.subr.bf16.mxu0 0
        %6150 = vmatpush1.bf16.msra.mxu0 0
        %6151 = vmatprep.subr.bf16.mxu0 0
        %6152 = vmatpush1.bf16.msra.mxu0 0
        %6153 = vmatprep.subr.bf16.mxu0 0
        %6154 = vmatpush1.bf16.msra.mxu0 0
        %6155 = vmatprep.subr.bf16.mxu0 0
        %6156 = vmatpush1.bf16.msra.mxu0 0
        %6157 = vmatprep.subr.bf16.mxu0 0
        %6158 = vmatpush1.bf16.msra.mxu0 0
        %6159 = vmatprep.subr.bf16.mxu0 0
        %6160 = vmatpush1.bf16.msra.mxu0 0
        %6161 = vmatprep.subr.bf16.mxu0 0
        %6162 = vmatpush1.bf16.msra.mxu0 0
        %6163 = vmatprep.subr.bf16.mxu0 0
        %6164 = vmatpush1.bf16.msra.mxu0 0
        %6165 = vmatprep.subr.bf16.mxu0 0
        %6166 = vmatpush1.bf16.msra.mxu0 0
        %6167 = vmatprep.subr.bf16.mxu0 0
        %6168 = vmatpush1.bf16.msra.mxu0 0
        %6169 = vmatprep.subr.bf16.mxu0 0
        %6170 = vmatpush1.bf16.msra.mxu0 0
        %6171 = vmatprep.subr.bf16.mxu0 0
        %6172 = vmatpush1.bf16.msra.mxu0 0
        %6173 = vmatprep.subr.bf16.mxu0 0
        %6174 = vmatpush1.bf16.msra.mxu0 0
        %6175 = vmatprep.subr.bf16.mxu0 0
        %6176 = vmatpush1.bf16.msra.mxu0 0
        %6177 = vmatprep.mubr.bf16.mxu0 0
        %6178 = vmatmul.mubr.bf16.gmra.mrb[0].mxu0 %v6140
        %v6179 = vpop.f32.mrb[0].mxu0
        %v6180 = vadd.f32 %v6112, %v6179
        %v6181 = vpop.f32.mrb[0].mxu0
        %v6182 = vadd.f32 %v6112, %v6181
        %v6183 = vpop.f32.mrb[0].mxu0
        %v6184 = vadd.f32 %v6117, %v6183
        %v6185 = vpop.f32.mrb[0].mxu0
        %v6186 = vadd.f32 %v6117, %v6185
        %6187 = vmatprep.mubr.bf16.mxu0 0
        %6188 = vmatmul.mubr.bf16.gmra.mrb[0].mxu0 %v6143
        %v6189 = vpop.f32.mrb[0].mxu0
        %v6190 = vadd.f32 %v6122, %v6189
        %v6191 = vpop.f32.mrb[0].mxu0
        %v6192 = vadd.f32 %v6122, %v6191
        %v6193 = vpop.f32.mrb[0].mxu0
        %v6194 = vadd.f32 %v6127, %v6193
        %v6195 = vpop.f32.mrb[0].mxu0
        %v6196 = vadd.f32 %v6127, %v6195
        %6197 = vdwg.mxu0
        %6198 = vst [vmem:[%s215] sm:$0xff] %v6180
        %6199 = vst [vmem:[%s215 + $0x8] sm:$0xff] %v6182
        %6200 = vst [vmem:[%s215 + $0x10] sm:$0xff] %v6184
        %6201 = vst [vmem:[%s215 + $0x18] sm:$0xff] %v6186
        %6202 = vst [vmem:[%s215 + $0x20] sm:$0xff] %v6190
        %6203 = vst [vmem:[%s215 + $0x28] sm:$0xff] %v6192
        %6204 = vst [vmem:[%s215 + $0x30] sm:$0xff] %v6194
        %6205 = vst [vmem:[%s215 + $0x38] sm:$0xff] %v6196
        %s6206 = sand.u32 %s118, 1
        %s6207 = scalar_lea.sflag [#allocation5], %s6206
        %s6208 = sand.u32 %s118, 1
        %s6209 = smul.addr %s6208, 64
        %s6210 = scalar_lea.vmem [#allocation6], %s6209
        // Predicated region
        $region41: #{tpu_custom_call.1} parent=35 // pred_check
          %p6211 = pneg %p128
        $region42: #{tpu_custom_call.1} parent=35 // pred_check_branch
          %6213 = sbr.rel (%p6211) target = $region44
        $region43: #{tpu_custom_call.1} parent=35 // pred_region
          %s6215 = ssub.s32 1024, 1024
          %6216 = vsyncadd %s6207, %s6215
          %s6217 = smul.addr %s21, 8
          %s6218 = smul.addr %s6217, 128
          %s6219 = scalar_lea.hbm %s4, %s6218
          %s6220 = sshll.u32 %s6210, 4
          %s6221 = int_to_ptr.vmem [resolvable:$true] %s6220
          %6226 = dma.vmem_to_hbm [thread:$0]  %s6221, 1024, %s6219, %s6207, 256, 256, 16
        $region44: #{tpu_custom_call.1} parent=35 // pred_fallthru
          _
      $region36: #{tpu_custom_call.1} parent=5 // pred_fallthru
        _
      %p6227 = scmp.le.s32.totalorder 2, %s16
      // Predicated region
      $region45: #{tpu_custom_call.1} parent=5 // pred_check
        %p6228 = pneg %p6227
      $region46: #{tpu_custom_call.1} parent=5 // pred_check_branch
        %6230 = sbr.rel (%p6228) target = $region48
      $region47: #{tpu_custom_call.1} parent=5 // pred_region
        %s6231 = ssub.s32 %s16, 2
        // Predicated region
        $region49: #{tpu_custom_call.1} parent=47 // pred_check
          %p6232 = pneg %p134
        $region50: #{tpu_custom_call.1} parent=47 // pred_check_branch
          %6234 = sbr.rel (%p6232) target = $region52
        $region51: #{tpu_custom_call.1} parent=47 // pred_region
          %s6235 = sand.u32 %s119, 1
          %s6236 = scalar_lea.sflag [#allocation5], %s6235
          %s6237 = sand.u32 %s119, 1
          %s6238 = smul.addr %s6237, 64
          %s6239 = scalar_lea.vmem [#allocation6], %s6238
          %6240 = dma.done %s6236, 1024
        $region52: #{tpu_custom_call.1} parent=47 // pred_fallthru
          _
      $region48: #{tpu_custom_call.1} parent=5 // pred_fallthru
        _
    $region6: #{tpu_custom_call.1} parent=1 // loop_footer
      %s20 = sadd.s32 1, %s16
    $region7: #{tpu_custom_call.1} parent=1 // loop_footer_branch
      %15 = sbr.rel target = $region3
    $region8: #{tpu_custom_call.1} parent=1 // loop_exit
      _
    %6241 = vsyncpa [#allocation4], 1
    %s6242 = scalar_lea.sflag [#allocation4], 1
    %6243 = vsyncpa %s6242, 1
    %6244 = vsyncpa [#allocation5], 1
    %s6245 = scalar_lea.sflag [#allocation5], 1
    %6246 = vsyncpa %s6245, 1

</llo_original>
